<compile_context>
chip_gen: v7x
topology: tpu7x:2x2x1
jax: 0.10.0
libtpu: 0.0.40
codegen_flags: <defaults>
</compile_context>

<pallas_src>
import functools

import jax
import jax.numpy as jnp
from jax import lax
from jax.experimental import pallas as pl
from jax.experimental.pallas import tpu as pltpu

EPS = 1e-5  # PyTorch BatchNorm2d default eps


def _round_up(x, m):
    return (x + m - 1) // m * m


# ----------------------------------------------------------------------------
# Kernel body
# ----------------------------------------------------------------------------
def _attn_block_kernel(*refs, H, W, base, has_skip):
    HW = H * W

    if has_skip:
        (x_ref, s00_ref, s01_ref, s10_ref, s11_ref,
         sce_ref, she_ref, we_ref, be_ref,
         scd_ref, shd_ref, wd_ref, bd_ref, mk_ref,
         sca_ref, sha_ref, wa_ref, ba_ref,
         o_ref, p00_ref, p01_ref, p10_ref, p11_ref, px_ref) = refs
        skip_planes = ((s00_ref, p00_ref), (s01_ref, p01_ref),
                       (s10_ref, p10_ref), (s11_ref, p11_ref))
        pad_refs = (p00_ref, p01_ref, p10_ref, p11_ref, px_ref)
    else:
        (x_ref, scd_ref, shd_ref, wd_ref, bd_ref, mk_ref,
         sca_ref, sha_ref, wa_ref, ba_ref, o_ref, px_ref) = refs
        pad_refs = (px_ref,)

    # Zero the top/bottom borders of every pad scratch.  The interior is fully
    # overwritten each step; borders are re-zeroed (cheaply) every step because
    # a program_id==0 gate would leave the 2nd core's scratch uninitialized on
    # megacore parts when the batch axis is "parallel".
    for pref in pad_refs:
        zb = jnp.zeros((pref.shape[0], W + 1), pref.dtype)
        pref[:, base - (W + 1):base] = zb
        pref[:, base + HW:base + HW + W + 1] = zb

    def conv3x3_acc(w_ref, taps):
        """3x3 conv as 9 accumulated MXU matmuls (bf16 operands, f32 acc).

        taps[k] = (pad_ref, lane_offset, mask_row_or_None) for tap k = dy*3+dx.
        """
        cout = w_ref.shape[1]
        acc = None
        for k, (src, off, mrow) in enumerate(taps):
            win = src[:, off:off + HW]                       # (Cx, HW) f32
            if mrow is not None and src.shape[0] <= cout:
                win = win * mk_ref[mrow:mrow + 1, :]         # mask cheaper side
            c = jnp.dot(w_ref[k], win.astype(jnp.bfloat16),
                        preferred_element_type=jnp.float32)  # (Cout, HW)
            if mrow is not None and src.shape[0] > cout:
                c = c * mk_ref[mrow:mrow + 1, :]
            acc = c if acc is None else acc + c
        return acc

    x = x_ref[0]                                             # (Cin, HW) f32

    # --- decoder: BN -> ReLU -> Conv3x3(pad=1), accumulated taps -------------
    px_ref[:, base:base + HW] = jnp.maximum(x * scd_ref[...] + shd_ref[...], 0.0)
    taps = []
    for dy in range(3):
        for dx in range(3):
            taps.append((px_ref, base + (dy - 1) * W + (dx - 1),
                         None if dx == 1 else dx))           # 0=left, 2=right
    out = conv3x3_acc(wd_ref, taps) + bd_ref[...]            # (Cout, HW)

    # --- encoder: BN -> ReLU -> Conv3x3(pad=1) -> MaxPool2x2 (polyphase) -----
    if has_skip:
        for s_ref, p_ref in skip_planes:
            p_ref[:, base:base + HW] = jnp.maximum(
                s_ref[0] * sce_ref[...] + she_ref[...], 0.0)
        ppad = ((p00_ref, p01_ref), (p10_ref, p11_ref))      # [row phase][col phase]
        pooled = None
        for u in (0, 1):                                     # output row parity
            for v in (0, 1):                                 # output col parity
                ptaps = []
                for dy in range(3):
                    r = u + dy - 1
                    qr, pr = r // 2, r % 2                   # half-res row shift/phase
                    for dx in range(3):
                        s = v + dx - 1
                        qc, pc = s // 2, s % 2               # half-res col shift/phase
                        ptaps.append((ppad[pr][pc], base + qr * W + qc,
                                      None if qc == 0 else (0 if qc < 0 else 2)))
                conv_uv = conv3x3_acc(we_ref, ptaps)
                pooled = conv_uv if pooled is None else jnp.maximum(pooled, conv_uv)
        out = out + pooled + be_ref[...]                     # bias commutes with max

    # --- attention: BN -> ReLU -> global mean -> Conv1x1 -> rescale x --------
    aa = jnp.maximum(out * sca_ref[...] + sha_ref[...], 0.0)  # (Cout, HW)
    mean = jnp.sum(aa, axis=-1, keepdims=True) * (1.0 / HW)   # XLU reduction
    attn = jnp.dot(wa_ref[...], mean,
                   preferred_element_type=jnp.float32) + ba_ref[...]  # (Cin, 1)
    o_ref[0] = x * attn


# ----------------------------------------------------------------------------
# Host-side helpers
# ----------------------------------------------------------------------------
def _bn_scale_shift(p):
    scale = p["gamma"] / jnp.sqrt(p["var"] + EPS)
    shift = p["beta"] - p["mean"] * scale
    return scale, shift


def _col_masks(H, W):
    """(3, H*W) f32 masks: row 0 kills x==0 (left wrap), row 2 kills x==W-1."""
    x = jnp.arange(H * W, dtype=jnp.int32) % W
    left = (x != 0).astype(jnp.float32)
    right = (x != W - 1).astype(jnp.float32)
    return jnp.stack([left, jnp.ones_like(left), right], axis=0)


# ----------------------------------------------------------------------------
# pallas_call wrapper (module-level forward, NCHW in / NCHW out)
# ----------------------------------------------------------------------------
def attention_block(params, x, skip=None):
    B, Cin, H, W = x.shape
    HW = H * W
    Cout = params["dec"]["w"].shape[1]
    has_skip = skip is not None

    base = _round_up(W + 1, 128)          # pad-scratch interior offset
    P = base + HW + W + 1                 # pad-scratch lane extent

    scd, shd = _bn_scale_shift(params["dec"])
    sca, sha = _bn_scale_shift(params["attn"])

    def img_spec(c):
        return pl.BlockSpec((1, c, HW), lambda b: (b, 0, 0))

    def const_spec(shape):
        if len(shape) == 2:
            return pl.BlockSpec(shape, lambda b: (0, 0))
        return pl.BlockSpec(shape, lambda b: (0, 0, 0))

    args = [x.reshape(B, Cin, HW)]
    specs = [img_spec(Cin)]
    scratch = []

    if has_skip:
        Cs = skip.shape[1]
        assert skip.shape == (B, Cs, 2 * H, 2 * W), \
            "skip must be exactly 2x the spatial size of x"
        # Polyphase split of skip (cheap XLA strided slices, one pass over the
        # input): MaxPool2x2(conv3x3) becomes an elementwise max of 4
        # half-resolution convs -> no in-kernel gather / selection matmul.
        for u in (0, 1):
            for v in (0, 1):
                args.append(skip[:, :, u::2, v::2].reshape(B, Cs, HW))
                specs.append(img_spec(Cs))
        sce, she = _bn_scale_shift(params["enc"])
        args += [sce[:, None], she[:, None],
                 params["enc"]["w"].astype(jnp.bfloat16),     # (9, Cout, Cs)
                 params["enc"]["b"][:, None]]
        specs += [const_spec((Cs, 1)), const_spec((Cs, 1)),
                  const_spec((9, Cout, Cs)), const_spec((Cout, 1))]
        scratch += [pltpu.VMEM((Cs, P), jnp.float32) for _ in range(4)]

    args += [scd[:, None], shd[:, None],
             params["dec"]["w"].astype(jnp.bfloat16),         # (9, Cout, Cin)
             params["dec"]["b"][:, None],
             _col_masks(H, W),
             sca[:, None], sha[:, None],
             params["attn"]["w"],                             # (Cin, Cout) f32
             params["attn"]["b"][:, None]]
    specs += [const_spec((Cin, 1)), const_spec((Cin, 1)),
              const_spec((9, Cout, Cin)), const_spec((Cout, 1)),
              const_spec((3, HW)),
              const_spec((Cout, 1)), const_spec((Cout, 1)),
              const_spec((Cin, Cout)), const_spec((Cin, 1))]
    scratch += [pltpu.VMEM((Cin, P), jnp.float32)]

    kernel = functools.partial(_attn_block_kernel, H=H, W=W, base=base,
                               has_skip=has_skip)
    y = pl.pallas_call(
        kernel,
        out_shape=jax.ShapeDtypeStruct((B, Cin, HW), jnp.float32),
        grid_spec=pltpu.PrefetchScalarGridSpec(
            num_scalar_prefetch=0,
            grid=(B,),
            in_specs=specs,
            out_specs=pl.BlockSpec((1, Cin, HW), lambda b: (b, 0, 0)),
            scratch_shapes=scratch,
        ),
        compiler_params=pltpu.CompilerParams(
            dimension_semantics=("parallel",),
            vmem_limit_bytes=56 * 1024 * 1024,   # safe on v5e/v6e/v7x
        ),
    )(*args)
    return y.reshape(B, Cin, H, W)


# ----------------------------------------------------------------------------
# Deterministic parameter init (kernel-friendly weight layouts, no transposes)
# ----------------------------------------------------------------------------
def init_params(key, skip_channels, in_channels, out_channels):
    def bn(k, c):
        k1, k2, k3, k4 = jax.random.split(k, 4)
        return dict(
            gamma=jax.random.uniform(k1, (c,), jnp.float32, 0.5, 1.5),
            beta=0.1 * jax.random.normal(k2, (c,), jnp.float32),
            mean=0.1 * jax.random.normal(k3, (c,), jnp.float32),
            var=jax.random.uniform(k4, (c,), jnp.float32, 0.5, 1.5),
        )

    ks = jax.random.split(key, 9)
    # Conv weights stored tap-major, output-major: (9, Cout, Cin) -- a pure
    # permutation of PyTorch's (Cout, Cin, 3, 3).  Attn 1x1 weight is the
    # natural (Cin, Cout) squeeze of PyTorch's (Cin, Cout, 1, 1).
    params = {
        "dec": dict(
            **bn(ks[0], in_channels),
            w=0.1 * jax.random.normal(ks[1], (9, out_channels, in_channels),
                                      jnp.float32),
            b=0.1 * jax.random.normal(ks[2], (out_channels,), jnp.float32),
        ),
        "attn": dict(
            **bn(ks[6], out_channels),
            w=0.1 * jax.random.normal(ks[7], (in_channels, out_channels),
                                      jnp.float32),
            b=0.1 * jax.random.normal(ks[8], (in_channels,), jnp.float32),
        ),
    }
    if skip_channels != 0:
        params["enc"] = dict(
            **bn(ks[3], skip_channels),
            w=0.1 * jax.random.normal(ks[4], (9, out_channels, skip_channels),
                                      jnp.float32),
            b=0.1 * jax.random.normal(ks[5], (out_channels,), jnp.float32),
        )
    return params


# ----------------------------------------------------------------------------
# Pure-JAX (f32) reference for verification
# ----------------------------------------------------------------------------
def reference(params, x, skip=None):
    def bn_relu(v, p):                       # v is NHWC
        s, t = _bn_scale_shift(p)
        return jnp.maximum(v * s + t, 0.0)

    def conv3x3(v, w9, b):                   # w9: (9, Cout, Cx)
        w_hwio = jnp.transpose(w9.reshape(3, 3, w9.shape[1], w9.shape[2]),
                               (0, 1, 3, 2))
        return lax.conv_general_dilated(
            v, w_hwio, window_strides=(1, 1), padding="SAME",
            dimension_numbers=("NHWC", "HWIO", "NHWC")) + b

    x_nhwc = jnp.transpose(x, (0, 2, 3, 1))
    out = conv3x3(bn_relu(x_nhwc, params["dec"]), params["dec"]["w"],
                  params["dec"]["b"])
    if skip is not None:
        s_nhwc = jnp.transpose(skip, (0, 2, 3, 1))
        enc = conv3x3(bn_relu(s_nhwc, params["enc"]), params["enc"]["w"],
                      params["enc"]["b"])
        enc = lax.reduce_window(enc, -jnp.inf, lax.max,
                                (1, 2, 2, 1), (1, 2, 2, 1), "VALID")
        out = enc + out
    a = bn_relu(out, params["attn"])
    attn = jnp.einsum("bc,dc->bd", a.mean(axis=(1, 2)),
                      params["attn"]["w"]) + params["attn"]["b"]
    y = x_nhwc * attn[:, None, None, :]
    return jnp.transpose(y, (0, 3, 1, 2))


if __name__ == "__main__":
    key = jax.random.PRNGKey(0)
    skip_channels, in_channels, out_channels = 8, 8, 16
    B, H, W = 2, 16, 16

    kp, kx, ks = jax.random.split(key, 3)
    params = init_params(kp, skip_channels, in_channels, out_channels)
    x = jax.random.normal(kx, (B, in_channels, H, W), jnp.float32)
    skip = jax.random.normal(ks, (B, skip_channels, 2 * H, 2 * W), jnp.float32)

    # MXU operands are bf16 (f32 accumulation), so compare against the f32
    # reference with a correspondingly loosened tolerance.
    y = jax.block_until_ready(attention_block(params, x, skip))
    y_ref = reference(params, x, skip)
    assert y.shape == (B, in_channels, H, W)
    assert jnp.allclose(y, y_ref, rtol=5e-2, atol=5e-2), "mismatch (with skip)"

    y2 = jax.block_until_ready(attention_block(params, x, None))
    y2_ref = reference(params, x, None)
    assert jnp.allclose(y2, y2_ref, rtol=5e-2, atol=5e-2), "mismatch (no skip)"

    print("KERNEL_OK")
</pallas_src>

<mosaic_0001>
module attributes {stable_mosaic.version = 11 : i64} {
  func.func @_attn_block_kernel(%arg0: i32, %arg1: memref<1x8x256xf32, #tpu.memory_space<vmem>>, %arg2: memref<1x8x256xf32, #tpu.memory_space<vmem>>, %arg3: memref<1x8x256xf32, #tpu.memory_space<vmem>>, %arg4: memref<1x8x256xf32, #tpu.memory_space<vmem>>, %arg5: memref<1x8x256xf32, #tpu.memory_space<vmem>>, %arg6: memref<8x1xf32, #tpu.memory_space<vmem>>, %arg7: memref<8x1xf32, #tpu.memory_space<vmem>>, %arg8: memref<9x16x8xbf16, #tpu.memory_space<vmem>>, %arg9: memref<16x1xf32, #tpu.memory_space<vmem>>, %arg10: memref<8x1xf32, #tpu.memory_space<vmem>>, %arg11: memref<8x1xf32, #tpu.memory_space<vmem>>, %arg12: memref<9x16x8xbf16, #tpu.memory_space<vmem>>, %arg13: memref<16x1xf32, #tpu.memory_space<vmem>>, %arg14: memref<3x256xf32, #tpu.memory_space<vmem>>, %arg15: memref<16x1xf32, #tpu.memory_space<vmem>>, %arg16: memref<16x1xf32, #tpu.memory_space<vmem>>, %arg17: memref<8x16xf32, #tpu.memory_space<vmem>>, %arg18: memref<8x1xf32, #tpu.memory_space<vmem>>, %arg19: memref<1x8x256xf32, #tpu.memory_space<vmem>>, %arg20: memref<8x401xf32, #tpu.memory_space<vmem>>, %arg21: memref<8x401xf32, #tpu.memory_space<vmem>>, %arg22: memref<8x401xf32, #tpu.memory_space<vmem>>, %arg23: memref<8x401xf32, #tpu.memory_space<vmem>>, %arg24: memref<8x401xf32, #tpu.memory_space<vmem>>) attributes {dimension_semantics = [#tpu.dimension_semantics<parallel>], iteration_bounds = array<i64: 2>, scalar_prefetch = 0 : i64, scratch_operands = 5 : i64, tpu.core_type = #tpu.core_type<tc>, window_params = [{transform_indices = @transform_0, window_bounds = array<i64: 1, 8, 256>}, {transform_indices = @transform_1, window_bounds = array<i64: 1, 8, 256>}, {transform_indices = @transform_2, window_bounds = array<i64: 1, 8, 256>}, {transform_indices = @transform_3, window_bounds = array<i64: 1, 8, 256>}, {transform_indices = @transform_4, window_bounds = array<i64: 1, 8, 256>}, {pipeline_mode = #tpu.pipeline_mode<synchronous>, transform_indices = @transform_5, window_bounds = array<i64: 8, 1>}, {pipeline_mode = #tpu.pipeline_mode<synchronous>, transform_indices = @transform_6, window_bounds = array<i64: 8, 1>}, {pipeline_mode = #tpu.pipeline_mode<synchronous>, transform_indices = @transform_7, window_bounds = array<i64: 9, 16, 8>}, {pipeline_mode = #tpu.pipeline_mode<synchronous>, transform_indices = @transform_8, window_bounds = array<i64: 16, 1>}, {pipeline_mode = #tpu.pipeline_mode<synchronous>, transform_indices = @transform_9, window_bounds = array<i64: 8, 1>}, {pipeline_mode = #tpu.pipeline_mode<synchronous>, transform_indices = @transform_10, window_bounds = array<i64: 8, 1>}, {pipeline_mode = #tpu.pipeline_mode<synchronous>, transform_indices = @transform_11, window_bounds = array<i64: 9, 16, 8>}, {pipeline_mode = #tpu.pipeline_mode<synchronous>, transform_indices = @transform_12, window_bounds = array<i64: 16, 1>}, {pipeline_mode = #tpu.pipeline_mode<synchronous>, transform_indices = @transform_13, window_bounds = array<i64: 3, 256>}, {pipeline_mode = #tpu.pipeline_mode<synchronous>, transform_indices = @transform_14, window_bounds = array<i64: 16, 1>}, {pipeline_mode = #tpu.pipeline_mode<synchronous>, transform_indices = @transform_15, window_bounds = array<i64: 16, 1>}, {pipeline_mode = #tpu.pipeline_mode<synchronous>, transform_indices = @transform_16, window_bounds = array<i64: 8, 16>}, {pipeline_mode = #tpu.pipeline_mode<synchronous>, transform_indices = @transform_17, window_bounds = array<i64: 8, 1>}, {transform_indices = @transform_18, window_bounds = array<i64: 1, 8, 256>}]} {
    %cst = arith.constant 0.000000e+00 : f32
    %0 = vector.broadcast %cst : f32 to vector<8x17xf32>
    %c0 = arith.constant 0 : index
    %c111 = arith.constant 111 : index
    %1 = vector.load %arg20[%c0, %c111] : memref<8x401xf32, #tpu.memory_space<vmem>>, vector<8x17xf32>
    tpu.vector_store %arg20[%c0, %c111], %0 {strides = array<i32>} : memref<8x401xf32, #tpu.memory_space<vmem>>, vector<8x17xf32>,
    %c0_0 = arith.constant 0 : index
    %c384 = arith.constant 384 : index
    %2 = vector.load %arg20[%c0_0, %c384] : memref<8x401xf32, #tpu.memory_space<vmem>>, vector<8x17xf32>
    tpu.vector_store %arg20[%c0_0, %c384], %0 {strides = array<i32>} : memref<8x401xf32, #tpu.memory_space<vmem>>, vector<8x17xf32>,
    %cst_1 = arith.constant 0.000000e+00 : f32
    %3 = vector.broadcast %cst_1 : f32 to vector<8x17xf32>
    %c0_2 = arith.constant 0 : index
    %c111_3 = arith.constant 111 : index
    %4 = vector.load %arg21[%c0_2, %c111_3] : memref<8x401xf32, #tpu.memory_space<vmem>>, vector<8x17xf32>
    tpu.vector_store %arg21[%c0_2, %c111_3], %3 {strides = array<i32>} : memref<8x401xf32, #tpu.memory_space<vmem>>, vector<8x17xf32>,
    %c0_4 = arith.constant 0 : index
    %c384_5 = arith.constant 384 : index
    %5 = vector.load %arg21[%c0_4, %c384_5] : memref<8x401xf32, #tpu.memory_space<vmem>>, vector<8x17xf32>
    tpu.vector_store %arg21[%c0_4, %c384_5], %3 {strides = array<i32>} : memref<8x401xf32, #tpu.memory_space<vmem>>, vector<8x17xf32>,
    %cst_6 = arith.constant 0.000000e+00 : f32
    %6 = vector.broadcast %cst_6 : f32 to vector<8x17xf32>
    %c0_7 = arith.constant 0 : index
    %c111_8 = arith.constant 111 : index
    %7 = vector.load %arg22[%c0_7, %c111_8] : memref<8x401xf32, #tpu.memory_space<vmem>>, vector<8x17xf32>
    tpu.vector_store %arg22[%c0_7, %c111_8], %6 {strides = array<i32>} : memref<8x401xf32, #tpu.memory_space<vmem>>, vector<8x17xf32>,
    %c0_9 = arith.constant 0 : index
    %c384_10 = arith.constant 384 : index
    %8 = vector.load %arg22[%c0_9, %c384_10] : memref<8x401xf32, #tpu.memory_space<vmem>>, vector<8x17xf32>
    tpu.vector_store %arg22[%c0_9, %c384_10], %6 {strides = array<i32>} : memref<8x401xf32, #tpu.memory_space<vmem>>, vector<8x17xf32>,
    %cst_11 = arith.constant 0.000000e+00 : f32
    %9 = vector.broadcast %cst_11 : f32 to vector<8x17xf32>
    %c0_12 = arith.constant 0 : index
    %c111_13 = arith.constant 111 : index
    %10 = vector.load %arg23[%c0_12, %c111_13] : memref<8x401xf32, #tpu.memory_space<vmem>>, vector<8x17xf32>
    tpu.vector_store %arg23[%c0_12, %c111_13], %9 {strides = array<i32>} : memref<8x401xf32, #tpu.memory_space<vmem>>, vector<8x17xf32>,
    %c0_14 = arith.constant 0 : index
    %c384_15 = arith.constant 384 : index
    %11 = vector.load %arg23[%c0_14, %c384_15] : memref<8x401xf32, #tpu.memory_space<vmem>>, vector<8x17xf32>
    tpu.vector_store %arg23[%c0_14, %c384_15], %9 {strides = array<i32>} : memref<8x401xf32, #tpu.memory_space<vmem>>, vector<8x17xf32>,
    %cst_16 = arith.constant 0.000000e+00 : f32
    %12 = vector.broadcast %cst_16 : f32 to vector<8x17xf32>
    %c0_17 = arith.constant 0 : index
    %c111_18 = arith.constant 111 : index
    %13 = vector.load %arg24[%c0_17, %c111_18] : memref<8x401xf32, #tpu.memory_space<vmem>>, vector<8x17xf32>
    tpu.vector_store %arg24[%c0_17, %c111_18], %12 {strides = array<i32>} : memref<8x401xf32, #tpu.memory_space<vmem>>, vector<8x17xf32>,
    %c0_19 = arith.constant 0 : index
    %c384_20 = arith.constant 384 : index
    %14 = vector.load %arg24[%c0_19, %c384_20] : memref<8x401xf32, #tpu.memory_space<vmem>>, vector<8x17xf32>
    tpu.vector_store %arg24[%c0_19, %c384_20], %12 {strides = array<i32>} : memref<8x401xf32, #tpu.memory_space<vmem>>, vector<8x17xf32>,
    %c0_21 = arith.constant 0 : index
    %c0_22 = arith.constant 0 : index
    %c0_23 = arith.constant 0 : index
    %15 = vector.load %arg1[%c0_21, %c0_22, %c0_23] : memref<1x8x256xf32, #tpu.memory_space<vmem>>, vector<1x8x256xf32>
    %16 = vector.shape_cast %15 : vector<1x8x256xf32> to vector<8x256xf32>
    %c0_24 = arith.constant 0 : index
    %c0_25 = arith.constant 0 : index
    %17 = vector.load %arg10[%c0_24, %c0_25] : memref<8x1xf32, #tpu.memory_space<vmem>>, vector<8x1xf32>
    %18 = vector.broadcast %17 : vector<8x1xf32> to vector<8x256xf32>
    %19 = arith.mulf %16, %18 : vector<8x256xf32>
    %c0_26 = arith.constant 0 : index
    %c0_27 = arith.constant 0 : index
    %20 = vector.load %arg11[%c0_26, %c0_27] : memref<8x1xf32, #tpu.memory_space<vmem>>, vector<8x1xf32>
    %21 = vector.broadcast %20 : vector<8x1xf32> to vector<8x256xf32>
    %22 = arith.addf %19, %21 : vector<8x256xf32>
    %cst_28 = arith.constant 0.000000e+00 : f32
    %23 = vector.broadcast %cst_28 : f32 to vector<8x256xf32>
    %24 = arith.maximumf %22, %23 : vector<8x256xf32>
    %c0_29 = arith.constant 0 : index
    %c128 = arith.constant 128 : index
    %25 = vector.load %arg24[%c0_29, %c128] : memref<8x401xf32, #tpu.memory_space<vmem>>, vector<8x256xf32>
    tpu.vector_store %arg24[%c0_29, %c128], %24 {strides = array<i32>} : memref<8x401xf32, #tpu.memory_space<vmem>>, vector<8x256xf32>,
    %c0_30 = arith.constant 0 : index
    %c111_31 = arith.constant 111 : index
    %26 = vector.load %arg24[%c0_30, %c111_31] : memref<8x401xf32, #tpu.memory_space<vmem>>, vector<8x256xf32>
    %c0_32 = arith.constant 0 : index
    %c0_33 = arith.constant 0 : index
    %27 = vector.load %arg14[%c0_32, %c0_33] : memref<3x256xf32, #tpu.memory_space<vmem>>, vector<1x256xf32>
    %28 = vector.broadcast %27 : vector<1x256xf32> to vector<8x256xf32>
    %29 = arith.mulf %26, %28 : vector<8x256xf32>
    %c0_34 = arith.constant 0 : index
    %c0_35 = arith.constant 0 : index
    %c0_36 = arith.constant 0 : index
    %30 = vector.load %arg12[%c0_34, %c0_35, %c0_36] : memref<9x16x8xbf16, #tpu.memory_space<vmem>>, vector<1x16x8xbf16>
    %31 = vector.shape_cast %30 : vector<1x16x8xbf16> to vector<16x8xbf16>
    %32 = arith.truncf %29 : vector<8x256xf32> to vector<8x256xbf16>
    %cst_37 = arith.constant dense<0.000000e+00> : vector<16x256xf32>
    %33 = tpu.matmul %31, %32, %cst_37 {dimension_numbers = #tpu.dot_dimension_numbers<[1], [0], [0], [1], [0, 0, 1, 1], [], []>} : vector<16x8xbf16>, vector<8x256xbf16>, vector<16x256xf32> -> vector<16x256xf32>
    %c0_38 = arith.constant 0 : index
    %c112 = arith.constant 112 : index
    %34 = vector.load %arg24[%c0_38, %c112] : memref<8x401xf32, #tpu.memory_space<vmem>>, vector<8x256xf32>
    %c1 = arith.constant 1 : index
    %c0_39 = arith.constant 0 : index
    %c0_40 = arith.constant 0 : index
    %35 = vector.load %arg12[%c1, %c0_39, %c0_40] : memref<9x16x8xbf16, #tpu.memory_space<vmem>>, vector<1x16x8xbf16>
    %36 = vector.shape_cast %35 : vector<1x16x8xbf16> to vector<16x8xbf16>
    %37 = arith.truncf %34 : vector<8x256xf32> to vector<8x256xbf16>
    %cst_41 = arith.constant dense<0.000000e+00> : vector<16x256xf32>
    %38 = tpu.matmul %36, %37, %cst_41 {dimension_numbers = #tpu.dot_dimension_numbers<[1], [0], [0], [1], [0, 0, 1, 1], [], []>} : vector<16x8xbf16>, vector<8x256xbf16>, vector<16x256xf32> -> vector<16x256xf32>
    %39 = arith.addf %33, %38 : vector<16x256xf32>
    %c0_42 = arith.constant 0 : index
    %c113 = arith.constant 113 : index
    %40 = vector.load %arg24[%c0_42, %c113] : memref<8x401xf32, #tpu.memory_space<vmem>>, vector<8x256xf32>
    %c2 = arith.constant 2 : index
    %c0_43 = arith.constant 0 : index
    %41 = vector.load %arg14[%c2, %c0_43] : memref<3x256xf32, #tpu.memory_space<vmem>>, vector<1x256xf32>
    %42 = vector.broadcast %41 : vector<1x256xf32> to vector<8x256xf32>
    %43 = arith.mulf %40, %42 : vector<8x256xf32>
    %c2_44 = arith.constant 2 : index
    %c0_45 = arith.constant 0 : index
    %c0_46 = arith.constant 0 : index
    %44 = vector.load %arg12[%c2_44, %c0_45, %c0_46] : memref<9x16x8xbf16, #tpu.memory_space<vmem>>, vector<1x16x8xbf16>
    %45 = vector.shape_cast %44 : vector<1x16x8xbf16> to vector<16x8xbf16>
    %46 = arith.truncf %43 : vector<8x256xf32> to vector<8x256xbf16>
    %cst_47 = arith.constant dense<0.000000e+00> : vector<16x256xf32>
    %47 = tpu.matmul %45, %46, %cst_47 {dimension_numbers = #tpu.dot_dimension_numbers<[1], [0], [0], [1], [0, 0, 1, 1], [], []>} : vector<16x8xbf16>, vector<8x256xbf16>, vector<16x256xf32> -> vector<16x256xf32>
    %48 = arith.addf %39, %47 : vector<16x256xf32>
    %c0_48 = arith.constant 0 : index
    %c127 = arith.constant 127 : index
    %49 = vector.load %arg24[%c0_48, %c127] : memref<8x401xf32, #tpu.memory_space<vmem>>, vector<8x256xf32>
    %c0_49 = arith.constant 0 : index
    %c0_50 = arith.constant 0 : index
    %50 = vector.load %arg14[%c0_49, %c0_50] : memref<3x256xf32, #tpu.memory_space<vmem>>, vector<1x256xf32>
    %51 = vector.broadcast %50 : vector<1x256xf32> to vector<8x256xf32>
    %52 = arith.mulf %49, %51 : vector<8x256xf32>
    %c3 = arith.constant 3 : index
    %c0_51 = arith.constant 0 : index
    %c0_52 = arith.constant 0 : index
    %53 = vector.load %arg12[%c3, %c0_51, %c0_52] : memref<9x16x8xbf16, #tpu.memory_space<vmem>>, vector<1x16x8xbf16>
    %54 = vector.shape_cast %53 : vector<1x16x8xbf16> to vector<16x8xbf16>
    %55 = arith.truncf %52 : vector<8x256xf32> to vector<8x256xbf16>
    %cst_53 = arith.constant dense<0.000000e+00> : vector<16x256xf32>
    %56 = tpu.matmul %54, %55, %cst_53 {dimension_numbers = #tpu.dot_dimension_numbers<[1], [0], [0], [1], [0, 0, 1, 1], [], []>} : vector<16x8xbf16>, vector<8x256xbf16>, vector<16x256xf32> -> vector<16x256xf32>
    %57 = arith.addf %48, %56 : vector<16x256xf32>
    %c0_54 = arith.constant 0 : index
    %c128_55 = arith.constant 128 : index
    %58 = vector.load %arg24[%c0_54, %c128_55] : memref<8x401xf32, #tpu.memory_space<vmem>>, vector<8x256xf32>
    %c4 = arith.constant 4 : index
    %c0_56 = arith.constant 0 : index
    %c0_57 = arith.constant 0 : index
    %59 = vector.load %arg12[%c4, %c0_56, %c0_57] : memref<9x16x8xbf16, #tpu.memory_space<vmem>>, vector<1x16x8xbf16>
    %60 = vector.shape_cast %59 : vector<1x16x8xbf16> to vector<16x8xbf16>
    %61 = arith.truncf %58 : vector<8x256xf32> to vector<8x256xbf16>
    %cst_58 = arith.constant dense<0.000000e+00> : vector<16x256xf32>
    %62 = tpu.matmul %60, %61, %cst_58 {dimension_numbers = #tpu.dot_dimension_numbers<[1], [0], [0], [1], [0, 0, 1, 1], [], []>} : vector<16x8xbf16>, vector<8x256xbf16>, vector<16x256xf32> -> vector<16x256xf32>
    %63 = arith.addf %57, %62 : vector<16x256xf32>
    %c0_59 = arith.constant 0 : index
    %c129 = arith.constant 129 : index
    %64 = vector.load %arg24[%c0_59, %c129] : memref<8x401xf32, #tpu.memory_space<vmem>>, vector<8x256xf32>
    %c2_60 = arith.constant 2 : index
    %c0_61 = arith.constant 0 : index
    %65 = vector.load %arg14[%c2_60, %c0_61] : memref<3x256xf32, #tpu.memory_space<vmem>>, vector<1x256xf32>
    %66 = vector.broadcast %65 : vector<1x256xf32> to vector<8x256xf32>
    %67 = arith.mulf %64, %66 : vector<8x256xf32>
    %c5 = arith.constant 5 : index
    %c0_62 = arith.constant 0 : index
    %c0_63 = arith.constant 0 : index
    %68 = vector.load %arg12[%c5, %c0_62, %c0_63] : memref<9x16x8xbf16, #tpu.memory_space<vmem>>, vector<1x16x8xbf16>
    %69 = vector.shape_cast %68 : vector<1x16x8xbf16> to vector<16x8xbf16>
    %70 = arith.truncf %67 : vector<8x256xf32> to vector<8x256xbf16>
    %cst_64 = arith.constant dense<0.000000e+00> : vector<16x256xf32>
    %71 = tpu.matmul %69, %70, %cst_64 {dimension_numbers = #tpu.dot_dimension_numbers<[1], [0], [0], [1], [0, 0, 1, 1], [], []>} : vector<16x8xbf16>, vector<8x256xbf16>, vector<16x256xf32> -> vector<16x256xf32>
    %72 = arith.addf %63, %71 : vector<16x256xf32>
    %c0_65 = arith.constant 0 : index
    %c143 = arith.constant 143 : index
    %73 = vector.load %arg24[%c0_65, %c143] : memref<8x401xf32, #tpu.memory_space<vmem>>, vector<8x256xf32>
    %c0_66 = arith.constant 0 : index
    %c0_67 = arith.constant 0 : index
    %74 = vector.load %arg14[%c0_66, %c0_67] : memref<3x256xf32, #tpu.memory_space<vmem>>, vector<1x256xf32>
    %75 = vector.broadcast %74 : vector<1x256xf32> to vector<8x256xf32>
    %76 = arith.mulf %73, %75 : vector<8x256xf32>
    %c6 = arith.constant 6 : index
    %c0_68 = arith.constant 0 : index
    %c0_69 = arith.constant 0 : index
    %77 = vector.load %arg12[%c6, %c0_68, %c0_69] : memref<9x16x8xbf16, #tpu.memory_space<vmem>>, vector<1x16x8xbf16>
    %78 = vector.shape_cast %77 : vector<1x16x8xbf16> to vector<16x8xbf16>
    %79 = arith.truncf %76 : vector<8x256xf32> to vector<8x256xbf16>
    %cst_70 = arith.constant dense<0.000000e+00> : vector<16x256xf32>
    %80 = tpu.matmul %78, %79, %cst_70 {dimension_numbers = #tpu.dot_dimension_numbers<[1], [0], [0], [1], [0, 0, 1, 1], [], []>} : vector<16x8xbf16>, vector<8x256xbf16>, vector<16x256xf32> -> vector<16x256xf32>
    %81 = arith.addf %72, %80 : vector<16x256xf32>
    %c0_71 = arith.constant 0 : index
    %c144 = arith.constant 144 : index
    %82 = vector.load %arg24[%c0_71, %c144] : memref<8x401xf32, #tpu.memory_space<vmem>>, vector<8x256xf32>
    %c7 = arith.constant 7 : index
    %c0_72 = arith.constant 0 : index
    %c0_73 = arith.constant 0 : index
    %83 = vector.load %arg12[%c7, %c0_72, %c0_73] : memref<9x16x8xbf16, #tpu.memory_space<vmem>>, vector<1x16x8xbf16>
    %84 = vector.shape_cast %83 : vector<1x16x8xbf16> to vector<16x8xbf16>
    %85 = arith.truncf %82 : vector<8x256xf32> to vector<8x256xbf16>
    %cst_74 = arith.constant dense<0.000000e+00> : vector<16x256xf32>
    %86 = tpu.matmul %84, %85, %cst_74 {dimension_numbers = #tpu.dot_dimension_numbers<[1], [0], [0], [1], [0, 0, 1, 1], [], []>} : vector<16x8xbf16>, vector<8x256xbf16>, vector<16x256xf32> -> vector<16x256xf32>
    %87 = arith.addf %81, %86 : vector<16x256xf32>
    %c0_75 = arith.constant 0 : index
    %c145 = arith.constant 145 : index
    %88 = vector.load %arg24[%c0_75, %c145] : memref<8x401xf32, #tpu.memory_space<vmem>>, vector<8x256xf32>
    %c2_76 = arith.constant 2 : index
    %c0_77 = arith.constant 0 : index
    %89 = vector.load %arg14[%c2_76, %c0_77] : memref<3x256xf32, #tpu.memory_space<vmem>>, vector<1x256xf32>
    %90 = vector.broadcast %89 : vector<1x256xf32> to vector<8x256xf32>
    %91 = arith.mulf %88, %90 : vector<8x256xf32>
    %c8 = arith.constant 8 : index
    %c0_78 = arith.constant 0 : index
    %c0_79 = arith.constant 0 : index
    %92 = vector.load %arg12[%c8, %c0_78, %c0_79] : memref<9x16x8xbf16, #tpu.memory_space<vmem>>, vector<1x16x8xbf16>
    %93 = vector.shape_cast %92 : vector<1x16x8xbf16> to vector<16x8xbf16>
    %94 = arith.truncf %91 : vector<8x256xf32> to vector<8x256xbf16>
    %cst_80 = arith.constant dense<0.000000e+00> : vector<16x256xf32>
    %95 = tpu.matmul %93, %94, %cst_80 {dimension_numbers = #tpu.dot_dimension_numbers<[1], [0], [0], [1], [0, 0, 1, 1], [], []>} : vector<16x8xbf16>, vector<8x256xbf16>, vector<16x256xf32> -> vector<16x256xf32>
    %96 = arith.addf %87, %95 : vector<16x256xf32>
    %c0_81 = arith.constant 0 : index
    %c0_82 = arith.constant 0 : index
    %97 = vector.load %arg13[%c0_81, %c0_82] : memref<16x1xf32, #tpu.memory_space<vmem>>, vector<16x1xf32>
    %98 = vector.broadcast %97 : vector<16x1xf32> to vector<16x256xf32>
    %99 = arith.addf %96, %98 : vector<16x256xf32>
    %c0_83 = arith.constant 0 : index
    %c0_84 = arith.constant 0 : index
    %c0_85 = arith.constant 0 : index
    %100 = vector.load %arg2[%c0_83, %c0_84, %c0_85] : memref<1x8x256xf32, #tpu.memory_space<vmem>>, vector<1x8x256xf32>
    %101 = vector.shape_cast %100 : vector<1x8x256xf32> to vector<8x256xf32>
    %c0_86 = arith.constant 0 : index
    %c0_87 = arith.constant 0 : index
    %102 = vector.load %arg6[%c0_86, %c0_87] : memref<8x1xf32, #tpu.memory_space<vmem>>, vector<8x1xf32>
    %103 = vector.broadcast %102 : vector<8x1xf32> to vector<8x256xf32>
    %104 = arith.mulf %101, %103 : vector<8x256xf32>
    %c0_88 = arith.constant 0 : index
    %c0_89 = arith.constant 0 : index
    %105 = vector.load %arg7[%c0_88, %c0_89] : memref<8x1xf32, #tpu.memory_space<vmem>>, vector<8x1xf32>
    %106 = vector.broadcast %105 : vector<8x1xf32> to vector<8x256xf32>
    %107 = arith.addf %104, %106 : vector<8x256xf32>
    %cst_90 = arith.constant 0.000000e+00 : f32
    %108 = vector.broadcast %cst_90 : f32 to vector<8x256xf32>
    %109 = arith.maximumf %107, %108 : vector<8x256xf32>
    %c0_91 = arith.constant 0 : index
    %c128_92 = arith.constant 128 : index
    %110 = vector.load %arg20[%c0_91, %c128_92] : memref<8x401xf32, #tpu.memory_space<vmem>>, vector<8x256xf32>
    tpu.vector_store %arg20[%c0_91, %c128_92], %109 {strides = array<i32>} : memref<8x401xf32, #tpu.memory_space<vmem>>, vector<8x256xf32>,
    %c0_93 = arith.constant 0 : index
    %c0_94 = arith.constant 0 : index
    %c0_95 = arith.constant 0 : index
    %111 = vector.load %arg3[%c0_93, %c0_94, %c0_95] : memref<1x8x256xf32, #tpu.memory_space<vmem>>, vector<1x8x256xf32>
    %112 = vector.shape_cast %111 : vector<1x8x256xf32> to vector<8x256xf32>
    %c0_96 = arith.constant 0 : index
    %c0_97 = arith.constant 0 : index
    %113 = vector.load %arg6[%c0_96, %c0_97] : memref<8x1xf32, #tpu.memory_space<vmem>>, vector<8x1xf32>
    %114 = vector.broadcast %113 : vector<8x1xf32> to vector<8x256xf32>
    %115 = arith.mulf %112, %114 : vector<8x256xf32>
    %c0_98 = arith.constant 0 : index
    %c0_99 = arith.constant 0 : index
    %116 = vector.load %arg7[%c0_98, %c0_99] : memref<8x1xf32, #tpu.memory_space<vmem>>, vector<8x1xf32>
    %117 = vector.broadcast %116 : vector<8x1xf32> to vector<8x256xf32>
    %118 = arith.addf %115, %117 : vector<8x256xf32>
    %cst_100 = arith.constant 0.000000e+00 : f32
    %119 = vector.broadcast %cst_100 : f32 to vector<8x256xf32>
    %120 = arith.maximumf %118, %119 : vector<8x256xf32>
    %c0_101 = arith.constant 0 : index
    %c128_102 = arith.constant 128 : index
    %121 = vector.load %arg21[%c0_101, %c128_102] : memref<8x401xf32, #tpu.memory_space<vmem>>, vector<8x256xf32>
    tpu.vector_store %arg21[%c0_101, %c128_102], %120 {strides = array<i32>} : memref<8x401xf32, #tpu.memory_space<vmem>>, vector<8x256xf32>,
    %c0_103 = arith.constant 0 : index
    %c0_104 = arith.constant 0 : index
    %c0_105 = arith.constant 0 : index
    %122 = vector.load %arg4[%c0_103, %c0_104, %c0_105] : memref<1x8x256xf32, #tpu.memory_space<vmem>>, vector<1x8x256xf32>
    %123 = vector.shape_cast %122 : vector<1x8x256xf32> to vector<8x256xf32>
    %c0_106 = arith.constant 0 : index
    %c0_107 = arith.constant 0 : index
    %124 = vector.load %arg6[%c0_106, %c0_107] : memref<8x1xf32, #tpu.memory_space<vmem>>, vector<8x1xf32>
    %125 = vector.broadcast %124 : vector<8x1xf32> to vector<8x256xf32>
    %126 = arith.mulf %123, %125 : vector<8x256xf32>
    %c0_108 = arith.constant 0 : index
    %c0_109 = arith.constant 0 : index
    %127 = vector.load %arg7[%c0_108, %c0_109] : memref<8x1xf32, #tpu.memory_space<vmem>>, vector<8x1xf32>
    %128 = vector.broadcast %127 : vector<8x1xf32> to vector<8x256xf32>
    %129 = arith.addf %126, %128 : vector<8x256xf32>
    %cst_110 = arith.constant 0.000000e+00 : f32
    %130 = vector.broadcast %cst_110 : f32 to vector<8x256xf32>
    %131 = arith.maximumf %129, %130 : vector<8x256xf32>
    %c0_111 = arith.constant 0 : index
    %c128_112 = arith.constant 128 : index
    %132 = vector.load %arg22[%c0_111, %c128_112] : memref<8x401xf32, #tpu.memory_space<vmem>>, vector<8x256xf32>
    tpu.vector_store %arg22[%c0_111, %c128_112], %131 {strides = array<i32>} : memref<8x401xf32, #tpu.memory_space<vmem>>, vector<8x256xf32>,
    %c0_113 = arith.constant 0 : index
    %c0_114 = arith.constant 0 : index
    %c0_115 = arith.constant 0 : index
    %133 = vector.load %arg5[%c0_113, %c0_114, %c0_115] : memref<1x8x256xf32, #tpu.memory_space<vmem>>, vector<1x8x256xf32>
    %134 = vector.shape_cast %133 : vector<1x8x256xf32> to vector<8x256xf32>
    %c0_116 = arith.constant 0 : index
    %c0_117 = arith.constant 0 : index
    %135 = vector.load %arg6[%c0_116, %c0_117] : memref<8x1xf32, #tpu.memory_space<vmem>>, vector<8x1xf32>
    %136 = vector.broadcast %135 : vector<8x1xf32> to vector<8x256xf32>
    %137 = arith.mulf %134, %136 : vector<8x256xf32>
    %c0_118 = arith.constant 0 : index
    %c0_119 = arith.constant 0 : index
    %138 = vector.load %arg7[%c0_118, %c0_119] : memref<8x1xf32, #tpu.memory_space<vmem>>, vector<8x1xf32>
    %139 = vector.broadcast %138 : vector<8x1xf32> to vector<8x256xf32>
    %140 = arith.addf %137, %139 : vector<8x256xf32>
    %cst_120 = arith.constant 0.000000e+00 : f32
    %141 = vector.broadcast %cst_120 : f32 to vector<8x256xf32>
    %142 = arith.maximumf %140, %141 : vector<8x256xf32>
    %c0_121 = arith.constant 0 : index
    %c128_122 = arith.constant 128 : index
    %143 = vector.load %arg23[%c0_121, %c128_122] : memref<8x401xf32, #tpu.memory_space<vmem>>, vector<8x256xf32>
    tpu.vector_store %arg23[%c0_121, %c128_122], %142 {strides = array<i32>} : memref<8x401xf32, #tpu.memory_space<vmem>>, vector<8x256xf32>,
    %c0_123 = arith.constant 0 : index
    %c111_124 = arith.constant 111 : index
    %144 = vector.load %arg23[%c0_123, %c111_124] : memref<8x401xf32, #tpu.memory_space<vmem>>, vector<8x256xf32>
    %c0_125 = arith.constant 0 : index
    %c0_126 = arith.constant 0 : index
    %145 = vector.load %arg14[%c0_125, %c0_126] : memref<3x256xf32, #tpu.memory_space<vmem>>, vector<1x256xf32>
    %146 = vector.broadcast %145 : vector<1x256xf32> to vector<8x256xf32>
    %147 = arith.mulf %144, %146 : vector<8x256xf32>
    %c0_127 = arith.constant 0 : index
    %c0_128 = arith.constant 0 : index
    %c0_129 = arith.constant 0 : index
    %148 = vector.load %arg8[%c0_127, %c0_128, %c0_129] : memref<9x16x8xbf16, #tpu.memory_space<vmem>>, vector<1x16x8xbf16>
    %149 = vector.shape_cast %148 : vector<1x16x8xbf16> to vector<16x8xbf16>
    %150 = arith.truncf %147 : vector<8x256xf32> to vector<8x256xbf16>
    %cst_130 = arith.constant dense<0.000000e+00> : vector<16x256xf32>
    %151 = tpu.matmul %149, %150, %cst_130 {dimension_numbers = #tpu.dot_dimension_numbers<[1], [0], [0], [1], [0, 0, 1, 1], [], []>} : vector<16x8xbf16>, vector<8x256xbf16>, vector<16x256xf32> -> vector<16x256xf32>
    %c0_131 = arith.constant 0 : index
    %c112_132 = arith.constant 112 : index
    %152 = vector.load %arg22[%c0_131, %c112_132] : memref<8x401xf32, #tpu.memory_space<vmem>>, vector<8x256xf32>
    %c1_133 = arith.constant 1 : index
    %c0_134 = arith.constant 0 : index
    %c0_135 = arith.constant 0 : index
    %153 = vector.load %arg8[%c1_133, %c0_134, %c0_135] : memref<9x16x8xbf16, #tpu.memory_space<vmem>>, vector<1x16x8xbf16>
    %154 = vector.shape_cast %153 : vector<1x16x8xbf16> to vector<16x8xbf16>
    %155 = arith.truncf %152 : vector<8x256xf32> to vector<8x256xbf16>
    %cst_136 = arith.constant dense<0.000000e+00> : vector<16x256xf32>
    %156 = tpu.matmul %154, %155, %cst_136 {dimension_numbers = #tpu.dot_dimension_numbers<[1], [0], [0], [1], [0, 0, 1, 1], [], []>} : vector<16x8xbf16>, vector<8x256xbf16>, vector<16x256xf32> -> vector<16x256xf32>
    %157 = arith.addf %151, %156 : vector<16x256xf32>
    %c0_137 = arith.constant 0 : index
    %c112_138 = arith.constant 112 : index
    %158 = vector.load %arg23[%c0_137, %c112_138] : memref<8x401xf32, #tpu.memory_space<vmem>>, vector<8x256xf32>
    %c2_139 = arith.constant 2 : index
    %c0_140 = arith.constant 0 : index
    %c0_141 = arith.constant 0 : index
    %159 = vector.load %arg8[%c2_139, %c0_140, %c0_141] : memref<9x16x8xbf16, #tpu.memory_space<vmem>>, vector<1x16x8xbf16>
    %160 = vector.shape_cast %159 : vector<1x16x8xbf16> to vector<16x8xbf16>
    %161 = arith.truncf %158 : vector<8x256xf32> to vector<8x256xbf16>
    %cst_142 = arith.constant dense<0.000000e+00> : vector<16x256xf32>
    %162 = tpu.matmul %160, %161, %cst_142 {dimension_numbers = #tpu.dot_dimension_numbers<[1], [0], [0], [1], [0, 0, 1, 1], [], []>} : vector<16x8xbf16>, vector<8x256xbf16>, vector<16x256xf32> -> vector<16x256xf32>
    %163 = arith.addf %157, %162 : vector<16x256xf32>
    %c0_143 = arith.constant 0 : index
    %c127_144 = arith.constant 127 : index
    %164 = vector.load %arg21[%c0_143, %c127_144] : memref<8x401xf32, #tpu.memory_space<vmem>>, vector<8x256xf32>
    %c0_145 = arith.constant 0 : index
    %c0_146 = arith.constant 0 : index
    %165 = vector.load %arg14[%c0_145, %c0_146] : memref<3x256xf32, #tpu.memory_space<vmem>>, vector<1x256xf32>
    %166 = vector.broadcast %165 : vector<1x256xf32> to vector<8x256xf32>
    %167 = arith.mulf %164, %166 : vector<8x256xf32>
    %c3_147 = arith.constant 3 : index
    %c0_148 = arith.constant 0 : index
    %c0_149 = arith.constant 0 : index
    %168 = vector.load %arg8[%c3_147, %c0_148, %c0_149] : memref<9x16x8xbf16, #tpu.memory_space<vmem>>, vector<1x16x8xbf16>
    %169 = vector.shape_cast %168 : vector<1x16x8xbf16> to vector<16x8xbf16>
    %170 = arith.truncf %167 : vector<8x256xf32> to vector<8x256xbf16>
    %cst_150 = arith.constant dense<0.000000e+00> : vector<16x256xf32>
    %171 = tpu.matmul %169, %170, %cst_150 {dimension_numbers = #tpu.dot_dimension_numbers<[1], [0], [0], [1], [0, 0, 1, 1], [], []>} : vector<16x8xbf16>, vector<8x256xbf16>, vector<16x256xf32> -> vector<16x256xf32>
    %172 = arith.addf %163, %171 : vector<16x256xf32>
    %c0_151 = arith.constant 0 : index
    %c128_152 = arith.constant 128 : index
    %173 = vector.load %arg20[%c0_151, %c128_152] : memref<8x401xf32, #tpu.memory_space<vmem>>, vector<8x256xf32>
    %c4_153 = arith.constant 4 : index
    %c0_154 = arith.constant 0 : index
    %c0_155 = arith.constant 0 : index
    %174 = vector.load %arg8[%c4_153, %c0_154, %c0_155] : memref<9x16x8xbf16, #tpu.memory_space<vmem>>, vector<1x16x8xbf16>
    %175 = vector.shape_cast %174 : vector<1x16x8xbf16> to vector<16x8xbf16>
    %176 = arith.truncf %173 : vector<8x256xf32> to vector<8x256xbf16>
    %cst_156 = arith.constant dense<0.000000e+00> : vector<16x256xf32>
    %177 = tpu.matmul %175, %176, %cst_156 {dimension_numbers = #tpu.dot_dimension_numbers<[1], [0], [0], [1], [0, 0, 1, 1], [], []>} : vector<16x8xbf16>, vector<8x256xbf16>, vector<16x256xf32> -> vector<16x256xf32>
    %178 = arith.addf %172, %177 : vector<16x256xf32>
    %c0_157 = arith.constant 0 : index
    %c128_158 = arith.constant 128 : index
    %179 = vector.load %arg21[%c0_157, %c128_158] : memref<8x401xf32, #tpu.memory_space<vmem>>, vector<8x256xf32>
    %c5_159 = arith.constant 5 : index
    %c0_160 = arith.constant 0 : index
    %c0_161 = arith.constant 0 : index
    %180 = vector.load %arg8[%c5_159, %c0_160, %c0_161] : memref<9x16x8xbf16, #tpu.memory_space<vmem>>, vector<1x16x8xbf16>
    %181 = vector.shape_cast %180 : vector<1x16x8xbf16> to vector<16x8xbf16>
    %182 = arith.truncf %179 : vector<8x256xf32> to vector<8x256xbf16>
    %cst_162 = arith.constant dense<0.000000e+00> : vector<16x256xf32>
    %183 = tpu.matmul %181, %182, %cst_162 {dimension_numbers = #tpu.dot_dimension_numbers<[1], [0], [0], [1], [0, 0, 1, 1], [], []>} : vector<16x8xbf16>, vector<8x256xbf16>, vector<16x256xf32> -> vector<16x256xf32>
    %184 = arith.addf %178, %183 : vector<16x256xf32>
    %c0_163 = arith.constant 0 : index
    %c127_164 = arith.constant 127 : index
    %185 = vector.load %arg23[%c0_163, %c127_164] : memref<8x401xf32, #tpu.memory_space<vmem>>, vector<8x256xf32>
    %c0_165 = arith.constant 0 : index
    %c0_166 = arith.constant 0 : index
    %186 = vector.load %arg14[%c0_165, %c0_166] : memref<3x256xf32, #tpu.memory_space<vmem>>, vector<1x256xf32>
    %187 = vector.broadcast %186 : vector<1x256xf32> to vector<8x256xf32>
    %188 = arith.mulf %185, %187 : vector<8x256xf32>
    %c6_167 = arith.constant 6 : index
    %c0_168 = arith.constant 0 : index
    %c0_169 = arith.constant 0 : index
    %189 = vector.load %arg8[%c6_167, %c0_168, %c0_169] : memref<9x16x8xbf16, #tpu.memory_space<vmem>>, vector<1x16x8xbf16>
    %190 = vector.shape_cast %189 : vector<1x16x8xbf16> to vector<16x8xbf16>
    %191 = arith.truncf %188 : vector<8x256xf32> to vector<8x256xbf16>
    %cst_170 = arith.constant dense<0.000000e+00> : vector<16x256xf32>
    %192 = tpu.matmul %190, %191, %cst_170 {dimension_numbers = #tpu.dot_dimension_numbers<[1], [0], [0], [1], [0, 0, 1, 1], [], []>} : vector<16x8xbf16>, vector<8x256xbf16>, vector<16x256xf32> -> vector<16x256xf32>
    %193 = arith.addf %184, %192 : vector<16x256xf32>
    %c0_171 = arith.constant 0 : index
    %c128_172 = arith.constant 128 : index
    %194 = vector.load %arg22[%c0_171, %c128_172] : memref<8x401xf32, #tpu.memory_space<vmem>>, vector<8x256xf32>
    %c7_173 = arith.constant 7 : index
    %c0_174 = arith.constant 0 : index
    %c0_175 = arith.constant 0 : index
    %195 = vector.load %arg8[%c7_173, %c0_174, %c0_175] : memref<9x16x8xbf16, #tpu.memory_space<vmem>>, vector<1x16x8xbf16>
    %196 = vector.shape_cast %195 : vector<1x16x8xbf16> to vector<16x8xbf16>
    %197 = arith.truncf %194 : vector<8x256xf32> to vector<8x256xbf16>
    %cst_176 = arith.constant dense<0.000000e+00> : vector<16x256xf32>
    %198 = tpu.matmul %196, %197, %cst_176 {dimension_numbers = #tpu.dot_dimension_numbers<[1], [0], [0], [1], [0, 0, 1, 1], [], []>} : vector<16x8xbf16>, vector<8x256xbf16>, vector<16x256xf32> -> vector<16x256xf32>
    %199 = arith.addf %193, %198 : vector<16x256xf32>
    %c0_177 = arith.constant 0 : index
    %c128_178 = arith.constant 128 : index
    %200 = vector.load %arg23[%c0_177, %c128_178] : memref<8x401xf32, #tpu.memory_space<vmem>>, vector<8x256xf32>
    %c8_179 = arith.constant 8 : index
    %c0_180 = arith.constant 0 : index
    %c0_181 = arith.constant 0 : index
    %201 = vector.load %arg8[%c8_179, %c0_180, %c0_181] : memref<9x16x8xbf16, #tpu.memory_space<vmem>>, vector<1x16x8xbf16>
    %202 = vector.shape_cast %201 : vector<1x16x8xbf16> to vector<16x8xbf16>
    %203 = arith.truncf %200 : vector<8x256xf32> to vector<8x256xbf16>
    %cst_182 = arith.constant dense<0.000000e+00> : vector<16x256xf32>
    %204 = tpu.matmul %202, %203, %cst_182 {dimension_numbers = #tpu.dot_dimension_numbers<[1], [0], [0], [1], [0, 0, 1, 1], [], []>} : vector<16x8xbf16>, vector<8x256xbf16>, vector<16x256xf32> -> vector<16x256xf32>
    %205 = arith.addf %199, %204 : vector<16x256xf32>
    %c0_183 = arith.constant 0 : index
    %c112_184 = arith.constant 112 : index
    %206 = vector.load %arg22[%c0_183, %c112_184] : memref<8x401xf32, #tpu.memory_space<vmem>>, vector<8x256xf32>
    %c0_185 = arith.constant 0 : index
    %c0_186 = arith.constant 0 : index
    %c0_187 = arith.constant 0 : index
    %207 = vector.load %arg8[%c0_185, %c0_186, %c0_187] : memref<9x16x8xbf16, #tpu.memory_space<vmem>>, vector<1x16x8xbf16>
    %208 = vector.shape_cast %207 : vector<1x16x8xbf16> to vector<16x8xbf16>
    %209 = arith.truncf %206 : vector<8x256xf32> to vector<8x256xbf16>
    %cst_188 = arith.constant dense<0.000000e+00> : vector<16x256xf32>
    %210 = tpu.matmul %208, %209, %cst_188 {dimension_numbers = #tpu.dot_dimension_numbers<[1], [0], [0], [1], [0, 0, 1, 1], [], []>} : vector<16x8xbf16>, vector<8x256xbf16>, vector<16x256xf32> -> vector<16x256xf32>
    %c0_189 = arith.constant 0 : index
    %c112_190 = arith.constant 112 : index
    %211 = vector.load %arg23[%c0_189, %c112_190] : memref<8x401xf32, #tpu.memory_space<vmem>>, vector<8x256xf32>
    %c1_191 = arith.constant 1 : index
    %c0_192 = arith.constant 0 : index
    %c0_193 = arith.constant 0 : index
    %212 = vector.load %arg8[%c1_191, %c0_192, %c0_193] : memref<9x16x8xbf16, #tpu.memory_space<vmem>>, vector<1x16x8xbf16>
    %213 = vector.shape_cast %212 : vector<1x16x8xbf16> to vector<16x8xbf16>
    %214 = arith.truncf %211 : vector<8x256xf32> to vector<8x256xbf16>
    %cst_194 = arith.constant dense<0.000000e+00> : vector<16x256xf32>
    %215 = tpu.matmul %213, %214, %cst_194 {dimension_numbers = #tpu.dot_dimension_numbers<[1], [0], [0], [1], [0, 0, 1, 1], [], []>} : vector<16x8xbf16>, vector<8x256xbf16>, vector<16x256xf32> -> vector<16x256xf32>
    %216 = arith.addf %210, %215 : vector<16x256xf32>
    %c0_195 = arith.constant 0 : index
    %c113_196 = arith.constant 113 : index
    %217 = vector.load %arg22[%c0_195, %c113_196] : memref<8x401xf32, #tpu.memory_space<vmem>>, vector<8x256xf32>
    %c2_197 = arith.constant 2 : index
    %c0_198 = arith.constant 0 : index
    %218 = vector.load %arg14[%c2_197, %c0_198] : memref<3x256xf32, #tpu.memory_space<vmem>>, vector<1x256xf32>
    %219 = vector.broadcast %218 : vector<1x256xf32> to vector<8x256xf32>
    %220 = arith.mulf %217, %219 : vector<8x256xf32>
    %c2_199 = arith.constant 2 : index
    %c0_200 = arith.constant 0 : index
    %c0_201 = arith.constant 0 : index
    %221 = vector.load %arg8[%c2_199, %c0_200, %c0_201] : memref<9x16x8xbf16, #tpu.memory_space<vmem>>, vector<1x16x8xbf16>
    %222 = vector.shape_cast %221 : vector<1x16x8xbf16> to vector<16x8xbf16>
    %223 = arith.truncf %220 : vector<8x256xf32> to vector<8x256xbf16>
    %cst_202 = arith.constant dense<0.000000e+00> : vector<16x256xf32>
    %224 = tpu.matmul %222, %223, %cst_202 {dimension_numbers = #tpu.dot_dimension_numbers<[1], [0], [0], [1], [0, 0, 1, 1], [], []>} : vector<16x8xbf16>, vector<8x256xbf16>, vector<16x256xf32> -> vector<16x256xf32>
    %225 = arith.addf %216, %224 : vector<16x256xf32>
    %c0_203 = arith.constant 0 : index
    %c128_204 = arith.constant 128 : index
    %226 = vector.load %arg20[%c0_203, %c128_204] : memref<8x401xf32, #tpu.memory_space<vmem>>, vector<8x256xf32>
    %c3_205 = arith.constant 3 : index
    %c0_206 = arith.constant 0 : index
    %c0_207 = arith.constant 0 : index
    %227 = vector.load %arg8[%c3_205, %c0_206, %c0_207] : memref<9x16x8xbf16, #tpu.memory_space<vmem>>, vector<1x16x8xbf16>
    %228 = vector.shape_cast %227 : vector<1x16x8xbf16> to vector<16x8xbf16>
    %229 = arith.truncf %226 : vector<8x256xf32> to vector<8x256xbf16>
    %cst_208 = arith.constant dense<0.000000e+00> : vector<16x256xf32>
    %230 = tpu.matmul %228, %229, %cst_208 {dimension_numbers = #tpu.dot_dimension_numbers<[1], [0], [0], [1], [0, 0, 1, 1], [], []>} : vector<16x8xbf16>, vector<8x256xbf16>, vector<16x256xf32> -> vector<16x256xf32>
    %231 = arith.addf %225, %230 : vector<16x256xf32>
    %c0_209 = arith.constant 0 : index
    %c128_210 = arith.constant 128 : index
    %232 = vector.load %arg21[%c0_209, %c128_210] : memref<8x401xf32, #tpu.memory_space<vmem>>, vector<8x256xf32>
    %c4_211 = arith.constant 4 : index
    %c0_212 = arith.constant 0 : index
    %c0_213 = arith.constant 0 : index
    %233 = vector.load %arg8[%c4_211, %c0_212, %c0_213] : memref<9x16x8xbf16, #tpu.memory_space<vmem>>, vector<1x16x8xbf16>
    %234 = vector.shape_cast %233 : vector<1x16x8xbf16> to vector<16x8xbf16>
    %235 = arith.truncf %232 : vector<8x256xf32> to vector<8x256xbf16>
    %cst_214 = arith.constant dense<0.000000e+00> : vector<16x256xf32>
    %236 = tpu.matmul %234, %235, %cst_214 {dimension_numbers = #tpu.dot_dimension_numbers<[1], [0], [0], [1], [0, 0, 1, 1], [], []>} : vector<16x8xbf16>, vector<8x256xbf16>, vector<16x256xf32> -> vector<16x256xf32>
    %237 = arith.addf %231, %236 : vector<16x256xf32>
    %c0_215 = arith.constant 0 : index
    %c129_216 = arith.constant 129 : index
    %238 = vector.load %arg20[%c0_215, %c129_216] : memref<8x401xf32, #tpu.memory_space<vmem>>, vector<8x256xf32>
    %c2_217 = arith.constant 2 : index
    %c0_218 = arith.constant 0 : index
    %239 = vector.load %arg14[%c2_217, %c0_218] : memref<3x256xf32, #tpu.memory_space<vmem>>, vector<1x256xf32>
    %240 = vector.broadcast %239 : vector<1x256xf32> to vector<8x256xf32>
    %241 = arith.mulf %238, %240 : vector<8x256xf32>
    %c5_219 = arith.constant 5 : index
    %c0_220 = arith.constant 0 : index
    %c0_221 = arith.constant 0 : index
    %242 = vector.load %arg8[%c5_219, %c0_220, %c0_221] : memref<9x16x8xbf16, #tpu.memory_space<vmem>>, vector<1x16x8xbf16>
    %243 = vector.shape_cast %242 : vector<1x16x8xbf16> to vector<16x8xbf16>
    %244 = arith.truncf %241 : vector<8x256xf32> to vector<8x256xbf16>
    %cst_222 = arith.constant dense<0.000000e+00> : vector<16x256xf32>
    %245 = tpu.matmul %243, %244, %cst_222 {dimension_numbers = #tpu.dot_dimension_numbers<[1], [0], [0], [1], [0, 0, 1, 1], [], []>} : vector<16x8xbf16>, vector<8x256xbf16>, vector<16x256xf32> -> vector<16x256xf32>
    %246 = arith.addf %237, %245 : vector<16x256xf32>
    %c0_223 = arith.constant 0 : index
    %c128_224 = arith.constant 128 : index
    %247 = vector.load %arg22[%c0_223, %c128_224] : memref<8x401xf32, #tpu.memory_space<vmem>>, vector<8x256xf32>
    %c6_225 = arith.constant 6 : index
    %c0_226 = arith.constant 0 : index
    %c0_227 = arith.constant 0 : index
    %248 = vector.load %arg8[%c6_225, %c0_226, %c0_227] : memref<9x16x8xbf16, #tpu.memory_space<vmem>>, vector<1x16x8xbf16>
    %249 = vector.shape_cast %248 : vector<1x16x8xbf16> to vector<16x8xbf16>
    %250 = arith.truncf %247 : vector<8x256xf32> to vector<8x256xbf16>
    %cst_228 = arith.constant dense<0.000000e+00> : vector<16x256xf32>
    %251 = tpu.matmul %249, %250, %cst_228 {dimension_numbers = #tpu.dot_dimension_numbers<[1], [0], [0], [1], [0, 0, 1, 1], [], []>} : vector<16x8xbf16>, vector<8x256xbf16>, vector<16x256xf32> -> vector<16x256xf32>
    %252 = arith.addf %246, %251 : vector<16x256xf32>
    %c0_229 = arith.constant 0 : index
    %c128_230 = arith.constant 128 : index
    %253 = vector.load %arg23[%c0_229, %c128_230] : memref<8x401xf32, #tpu.memory_space<vmem>>, vector<8x256xf32>
    %c7_231 = arith.constant 7 : index
    %c0_232 = arith.constant 0 : index
    %c0_233 = arith.constant 0 : index
    %254 = vector.load %arg8[%c7_231, %c0_232, %c0_233] : memref<9x16x8xbf16, #tpu.memory_space<vmem>>, vector<1x16x8xbf16>
    %255 = vector.shape_cast %254 : vector<1x16x8xbf16> to vector<16x8xbf16>
    %256 = arith.truncf %253 : vector<8x256xf32> to vector<8x256xbf16>
    %cst_234 = arith.constant dense<0.000000e+00> : vector<16x256xf32>
    %257 = tpu.matmul %255, %256, %cst_234 {dimension_numbers = #tpu.dot_dimension_numbers<[1], [0], [0], [1], [0, 0, 1, 1], [], []>} : vector<16x8xbf16>, vector<8x256xbf16>, vector<16x256xf32> -> vector<16x256xf32>
    %258 = arith.addf %252, %257 : vector<16x256xf32>
    %c0_235 = arith.constant 0 : index
    %c129_236 = arith.constant 129 : index
    %259 = vector.load %arg22[%c0_235, %c129_236] : memref<8x401xf32, #tpu.memory_space<vmem>>, vector<8x256xf32>
    %c2_237 = arith.constant 2 : index
    %c0_238 = arith.constant 0 : index
    %260 = vector.load %arg14[%c2_237, %c0_238] : memref<3x256xf32, #tpu.memory_space<vmem>>, vector<1x256xf32>
    %261 = vector.broadcast %260 : vector<1x256xf32> to vector<8x256xf32>
    %262 = arith.mulf %259, %261 : vector<8x256xf32>
    %c8_239 = arith.constant 8 : index
    %c0_240 = arith.constant 0 : index
    %c0_241 = arith.constant 0 : index
    %263 = vector.load %arg8[%c8_239, %c0_240, %c0_241] : memref<9x16x8xbf16, #tpu.memory_space<vmem>>, vector<1x16x8xbf16>
    %264 = vector.shape_cast %263 : vector<1x16x8xbf16> to vector<16x8xbf16>
    %265 = arith.truncf %262 : vector<8x256xf32> to vector<8x256xbf16>
    %cst_242 = arith.constant dense<0.000000e+00> : vector<16x256xf32>
    %266 = tpu.matmul %264, %265, %cst_242 {dimension_numbers = #tpu.dot_dimension_numbers<[1], [0], [0], [1], [0, 0, 1, 1], [], []>} : vector<16x8xbf16>, vector<8x256xbf16>, vector<16x256xf32> -> vector<16x256xf32>
    %267 = arith.addf %258, %266 : vector<16x256xf32>
    %268 = arith.maximumf %205, %267 : vector<16x256xf32>
    %c0_243 = arith.constant 0 : index
    %c127_244 = arith.constant 127 : index
    %269 = vector.load %arg21[%c0_243, %c127_244] : memref<8x401xf32, #tpu.memory_space<vmem>>, vector<8x256xf32>
    %c0_245 = arith.constant 0 : index
    %c0_246 = arith.constant 0 : index
    %270 = vector.load %arg14[%c0_245, %c0_246] : memref<3x256xf32, #tpu.memory_space<vmem>>, vector<1x256xf32>
    %271 = vector.broadcast %270 : vector<1x256xf32> to vector<8x256xf32>
    %272 = arith.mulf %269, %271 : vector<8x256xf32>
    %c0_247 = arith.constant 0 : index
    %c0_248 = arith.constant 0 : index
    %c0_249 = arith.constant 0 : index
    %273 = vector.load %arg8[%c0_247, %c0_248, %c0_249] : memref<9x16x8xbf16, #tpu.memory_space<vmem>>, vector<1x16x8xbf16>
    %274 = vector.shape_cast %273 : vector<1x16x8xbf16> to vector<16x8xbf16>
    %275 = arith.truncf %272 : vector<8x256xf32> to vector<8x256xbf16>
    %cst_250 = arith.constant dense<0.000000e+00> : vector<16x256xf32>
    %276 = tpu.matmul %274, %275, %cst_250 {dimension_numbers = #tpu.dot_dimension_numbers<[1], [0], [0], [1], [0, 0, 1, 1], [], []>} : vector<16x8xbf16>, vector<8x256xbf16>, vector<16x256xf32> -> vector<16x256xf32>
    %c0_251 = arith.constant 0 : index
    %c128_252 = arith.constant 128 : index
    %277 = vector.load %arg20[%c0_251, %c128_252] : memref<8x401xf32, #tpu.memory_space<vmem>>, vector<8x256xf32>
    %c1_253 = arith.constant 1 : index
    %c0_254 = arith.constant 0 : index
    %c0_255 = arith.constant 0 : index
    %278 = vector.load %arg8[%c1_253, %c0_254, %c0_255] : memref<9x16x8xbf16, #tpu.memory_space<vmem>>, vector<1x16x8xbf16>
    %279 = vector.shape_cast %278 : vector<1x16x8xbf16> to vector<16x8xbf16>
    %280 = arith.truncf %277 : vector<8x256xf32> to vector<8x256xbf16>
    %cst_256 = arith.constant dense<0.000000e+00> : vector<16x256xf32>
    %281 = tpu.matmul %279, %280, %cst_256 {dimension_numbers = #tpu.dot_dimension_numbers<[1], [0], [0], [1], [0, 0, 1, 1], [], []>} : vector<16x8xbf16>, vector<8x256xbf16>, vector<16x256xf32> -> vector<16x256xf32>
    %282 = arith.addf %276, %281 : vector<16x256xf32>
    %c0_257 = arith.constant 0 : index
    %c128_258 = arith.constant 128 : index
    %283 = vector.load %arg21[%c0_257, %c128_258] : memref<8x401xf32, #tpu.memory_space<vmem>>, vector<8x256xf32>
    %c2_259 = arith.constant 2 : index
    %c0_260 = arith.constant 0 : index
    %c0_261 = arith.constant 0 : index
    %284 = vector.load %arg8[%c2_259, %c0_260, %c0_261] : memref<9x16x8xbf16, #tpu.memory_space<vmem>>, vector<1x16x8xbf16>
    %285 = vector.shape_cast %284 : vector<1x16x8xbf16> to vector<16x8xbf16>
    %286 = arith.truncf %283 : vector<8x256xf32> to vector<8x256xbf16>
    %cst_262 = arith.constant dense<0.000000e+00> : vector<16x256xf32>
    %287 = tpu.matmul %285, %286, %cst_262 {dimension_numbers = #tpu.dot_dimension_numbers<[1], [0], [0], [1], [0, 0, 1, 1], [], []>} : vector<16x8xbf16>, vector<8x256xbf16>, vector<16x256xf32> -> vector<16x256xf32>
    %288 = arith.addf %282, %287 : vector<16x256xf32>
    %c0_263 = arith.constant 0 : index
    %c127_264 = arith.constant 127 : index
    %289 = vector.load %arg23[%c0_263, %c127_264] : memref<8x401xf32, #tpu.memory_space<vmem>>, vector<8x256xf32>
    %c0_265 = arith.constant 0 : index
    %c0_266 = arith.constant 0 : index
    %290 = vector.load %arg14[%c0_265, %c0_266] : memref<3x256xf32, #tpu.memory_space<vmem>>, vector<1x256xf32>
    %291 = vector.broadcast %290 : vector<1x256xf32> to vector<8x256xf32>
    %292 = arith.mulf %289, %291 : vector<8x256xf32>
    %c3_267 = arith.constant 3 : index
    %c0_268 = arith.constant 0 : index
    %c0_269 = arith.constant 0 : index
    %293 = vector.load %arg8[%c3_267, %c0_268, %c0_269] : memref<9x16x8xbf16, #tpu.memory_space<vmem>>, vector<1x16x8xbf16>
    %294 = vector.shape_cast %293 : vector<1x16x8xbf16> to vector<16x8xbf16>
    %295 = arith.truncf %292 : vector<8x256xf32> to vector<8x256xbf16>
    %cst_270 = arith.constant dense<0.000000e+00> : vector<16x256xf32>
    %296 = tpu.matmul %294, %295, %cst_270 {dimension_numbers = #tpu.dot_dimension_numbers<[1], [0], [0], [1], [0, 0, 1, 1], [], []>} : vector<16x8xbf16>, vector<8x256xbf16>, vector<16x256xf32> -> vector<16x256xf32>
    %297 = arith.addf %288, %296 : vector<16x256xf32>
    %c0_271 = arith.constant 0 : index
    %c128_272 = arith.constant 128 : index
    %298 = vector.load %arg22[%c0_271, %c128_272] : memref<8x401xf32, #tpu.memory_space<vmem>>, vector<8x256xf32>
    %c4_273 = arith.constant 4 : index
    %c0_274 = arith.constant 0 : index
    %c0_275 = arith.constant 0 : index
    %299 = vector.load %arg8[%c4_273, %c0_274, %c0_275] : memref<9x16x8xbf16, #tpu.memory_space<vmem>>, vector<1x16x8xbf16>
    %300 = vector.shape_cast %299 : vector<1x16x8xbf16> to vector<16x8xbf16>
    %301 = arith.truncf %298 : vector<8x256xf32> to vector<8x256xbf16>
    %cst_276 = arith.constant dense<0.000000e+00> : vector<16x256xf32>
    %302 = tpu.matmul %300, %301, %cst_276 {dimension_numbers = #tpu.dot_dimension_numbers<[1], [0], [0], [1], [0, 0, 1, 1], [], []>} : vector<16x8xbf16>, vector<8x256xbf16>, vector<16x256xf32> -> vector<16x256xf32>
    %303 = arith.addf %297, %302 : vector<16x256xf32>
    %c0_277 = arith.constant 0 : index
    %c128_278 = arith.constant 128 : index
    %304 = vector.load %arg23[%c0_277, %c128_278] : memref<8x401xf32, #tpu.memory_space<vmem>>, vector<8x256xf32>
    %c5_279 = arith.constant 5 : index
    %c0_280 = arith.constant 0 : index
    %c0_281 = arith.constant 0 : index
    %305 = vector.load %arg8[%c5_279, %c0_280, %c0_281] : memref<9x16x8xbf16, #tpu.memory_space<vmem>>, vector<1x16x8xbf16>
    %306 = vector.shape_cast %305 : vector<1x16x8xbf16> to vector<16x8xbf16>
    %307 = arith.truncf %304 : vector<8x256xf32> to vector<8x256xbf16>
    %cst_282 = arith.constant dense<0.000000e+00> : vector<16x256xf32>
    %308 = tpu.matmul %306, %307, %cst_282 {dimension_numbers = #tpu.dot_dimension_numbers<[1], [0], [0], [1], [0, 0, 1, 1], [], []>} : vector<16x8xbf16>, vector<8x256xbf16>, vector<16x256xf32> -> vector<16x256xf32>
    %309 = arith.addf %303, %308 : vector<16x256xf32>
    %c0_283 = arith.constant 0 : index
    %c143_284 = arith.constant 143 : index
    %310 = vector.load %arg21[%c0_283, %c143_284] : memref<8x401xf32, #tpu.memory_space<vmem>>, vector<8x256xf32>
    %c0_285 = arith.constant 0 : index
    %c0_286 = arith.constant 0 : index
    %311 = vector.load %arg14[%c0_285, %c0_286] : memref<3x256xf32, #tpu.memory_space<vmem>>, vector<1x256xf32>
    %312 = vector.broadcast %311 : vector<1x256xf32> to vector<8x256xf32>
    %313 = arith.mulf %310, %312 : vector<8x256xf32>
    %c6_287 = arith.constant 6 : index
    %c0_288 = arith.constant 0 : index
    %c0_289 = arith.constant 0 : index
    %314 = vector.load %arg8[%c6_287, %c0_288, %c0_289] : memref<9x16x8xbf16, #tpu.memory_space<vmem>>, vector<1x16x8xbf16>
    %315 = vector.shape_cast %314 : vector<1x16x8xbf16> to vector<16x8xbf16>
    %316 = arith.truncf %313 : vector<8x256xf32> to vector<8x256xbf16>
    %cst_290 = arith.constant dense<0.000000e+00> : vector<16x256xf32>
    %317 = tpu.matmul %315, %316, %cst_290 {dimension_numbers = #tpu.dot_dimension_numbers<[1], [0], [0], [1], [0, 0, 1, 1], [], []>} : vector<16x8xbf16>, vector<8x256xbf16>, vector<16x256xf32> -> vector<16x256xf32>
    %318 = arith.addf %309, %317 : vector<16x256xf32>
    %c0_291 = arith.constant 0 : index
    %c144_292 = arith.constant 144 : index
    %319 = vector.load %arg20[%c0_291, %c144_292] : memref<8x401xf32, #tpu.memory_space<vmem>>, vector<8x256xf32>
    %c7_293 = arith.constant 7 : index
    %c0_294 = arith.constant 0 : index
    %c0_295 = arith.constant 0 : index
    %320 = vector.load %arg8[%c7_293, %c0_294, %c0_295] : memref<9x16x8xbf16, #tpu.memory_space<vmem>>, vector<1x16x8xbf16>
    %321 = vector.shape_cast %320 : vector<1x16x8xbf16> to vector<16x8xbf16>
    %322 = arith.truncf %319 : vector<8x256xf32> to vector<8x256xbf16>
    %cst_296 = arith.constant dense<0.000000e+00> : vector<16x256xf32>
    %323 = tpu.matmul %321, %322, %cst_296 {dimension_numbers = #tpu.dot_dimension_numbers<[1], [0], [0], [1], [0, 0, 1, 1], [], []>} : vector<16x8xbf16>, vector<8x256xbf16>, vector<16x256xf32> -> vector<16x256xf32>
    %324 = arith.addf %318, %323 : vector<16x256xf32>
    %c0_297 = arith.constant 0 : index
    %c144_298 = arith.constant 144 : index
    %325 = vector.load %arg21[%c0_297, %c144_298] : memref<8x401xf32, #tpu.memory_space<vmem>>, vector<8x256xf32>
    %c8_299 = arith.constant 8 : index
    %c0_300 = arith.constant 0 : index
    %c0_301 = arith.constant 0 : index
    %326 = vector.load %arg8[%c8_299, %c0_300, %c0_301] : memref<9x16x8xbf16, #tpu.memory_space<vmem>>, vector<1x16x8xbf16>
    %327 = vector.shape_cast %326 : vector<1x16x8xbf16> to vector<16x8xbf16>
    %328 = arith.truncf %325 : vector<8x256xf32> to vector<8x256xbf16>
    %cst_302 = arith.constant dense<0.000000e+00> : vector<16x256xf32>
    %329 = tpu.matmul %327, %328, %cst_302 {dimension_numbers = #tpu.dot_dimension_numbers<[1], [0], [0], [1], [0, 0, 1, 1], [], []>} : vector<16x8xbf16>, vector<8x256xbf16>, vector<16x256xf32> -> vector<16x256xf32>
    %330 = arith.addf %324, %329 : vector<16x256xf32>
    %331 = arith.maximumf %268, %330 : vector<16x256xf32>
    %c0_303 = arith.constant 0 : index
    %c128_304 = arith.constant 128 : index
    %332 = vector.load %arg20[%c0_303, %c128_304] : memref<8x401xf32, #tpu.memory_space<vmem>>, vector<8x256xf32>
    %c0_305 = arith.constant 0 : index
    %c0_306 = arith.constant 0 : index
    %c0_307 = arith.constant 0 : index
    %333 = vector.load %arg8[%c0_305, %c0_306, %c0_307] : memref<9x16x8xbf16, #tpu.memory_space<vmem>>, vector<1x16x8xbf16>
    %334 = vector.shape_cast %333 : vector<1x16x8xbf16> to vector<16x8xbf16>
    %335 = arith.truncf %332 : vector<8x256xf32> to vector<8x256xbf16>
    %cst_308 = arith.constant dense<0.000000e+00> : vector<16x256xf32>
    %336 = tpu.matmul %334, %335, %cst_308 {dimension_numbers = #tpu.dot_dimension_numbers<[1], [0], [0], [1], [0, 0, 1, 1], [], []>} : vector<16x8xbf16>, vector<8x256xbf16>, vector<16x256xf32> -> vector<16x256xf32>
    %c0_309 = arith.constant 0 : index
    %c128_310 = arith.constant 128 : index
    %337 = vector.load %arg21[%c0_309, %c128_310] : memref<8x401xf32, #tpu.memory_space<vmem>>, vector<8x256xf32>
    %c1_311 = arith.constant 1 : index
    %c0_312 = arith.constant 0 : index
    %c0_313 = arith.constant 0 : index
    %338 = vector.load %arg8[%c1_311, %c0_312, %c0_313] : memref<9x16x8xbf16, #tpu.memory_space<vmem>>, vector<1x16x8xbf16>
    %339 = vector.shape_cast %338 : vector<1x16x8xbf16> to vector<16x8xbf16>
    %340 = arith.truncf %337 : vector<8x256xf32> to vector<8x256xbf16>
    %cst_314 = arith.constant dense<0.000000e+00> : vector<16x256xf32>
    %341 = tpu.matmul %339, %340, %cst_314 {dimension_numbers = #tpu.dot_dimension_numbers<[1], [0], [0], [1], [0, 0, 1, 1], [], []>} : vector<16x8xbf16>, vector<8x256xbf16>, vector<16x256xf32> -> vector<16x256xf32>
    %342 = arith.addf %336, %341 : vector<16x256xf32>
    %c0_315 = arith.constant 0 : index
    %c129_316 = arith.constant 129 : index
    %343 = vector.load %arg20[%c0_315, %c129_316] : memref<8x401xf32, #tpu.memory_space<vmem>>, vector<8x256xf32>
    %c2_317 = arith.constant 2 : index
    %c0_318 = arith.constant 0 : index
    %344 = vector.load %arg14[%c2_317, %c0_318] : memref<3x256xf32, #tpu.memory_space<vmem>>, vector<1x256xf32>
    %345 = vector.broadcast %344 : vector<1x256xf32> to vector<8x256xf32>
    %346 = arith.mulf %343, %345 : vector<8x256xf32>
    %c2_319 = arith.constant 2 : index
    %c0_320 = arith.constant 0 : index
    %c0_321 = arith.constant 0 : index
    %347 = vector.load %arg8[%c2_319, %c0_320, %c0_321] : memref<9x16x8xbf16, #tpu.memory_space<vmem>>, vector<1x16x8xbf16>
    %348 = vector.shape_cast %347 : vector<1x16x8xbf16> to vector<16x8xbf16>
    %349 = arith.truncf %346 : vector<8x256xf32> to vector<8x256xbf16>
    %cst_322 = arith.constant dense<0.000000e+00> : vector<16x256xf32>
    %350 = tpu.matmul %348, %349, %cst_322 {dimension_numbers = #tpu.dot_dimension_numbers<[1], [0], [0], [1], [0, 0, 1, 1], [], []>} : vector<16x8xbf16>, vector<8x256xbf16>, vector<16x256xf32> -> vector<16x256xf32>
    %351 = arith.addf %342, %350 : vector<16x256xf32>
    %c0_323 = arith.constant 0 : index
    %c128_324 = arith.constant 128 : index
    %352 = vector.load %arg22[%c0_323, %c128_324] : memref<8x401xf32, #tpu.memory_space<vmem>>, vector<8x256xf32>
    %c3_325 = arith.constant 3 : index
    %c0_326 = arith.constant 0 : index
    %c0_327 = arith.constant 0 : index
    %353 = vector.load %arg8[%c3_325, %c0_326, %c0_327] : memref<9x16x8xbf16, #tpu.memory_space<vmem>>, vector<1x16x8xbf16>
    %354 = vector.shape_cast %353 : vector<1x16x8xbf16> to vector<16x8xbf16>
    %355 = arith.truncf %352 : vector<8x256xf32> to vector<8x256xbf16>
    %cst_328 = arith.constant dense<0.000000e+00> : vector<16x256xf32>
    %356 = tpu.matmul %354, %355, %cst_328 {dimension_numbers = #tpu.dot_dimension_numbers<[1], [0], [0], [1], [0, 0, 1, 1], [], []>} : vector<16x8xbf16>, vector<8x256xbf16>, vector<16x256xf32> -> vector<16x256xf32>
    %357 = arith.addf %351, %356 : vector<16x256xf32>
    %c0_329 = arith.constant 0 : index
    %c128_330 = arith.constant 128 : index
    %358 = vector.load %arg23[%c0_329, %c128_330] : memref<8x401xf32, #tpu.memory_space<vmem>>, vector<8x256xf32>
    %c4_331 = arith.constant 4 : index
    %c0_332 = arith.constant 0 : index
    %c0_333 = arith.constant 0 : index
    %359 = vector.load %arg8[%c4_331, %c0_332, %c0_333] : memref<9x16x8xbf16, #tpu.memory_space<vmem>>, vector<1x16x8xbf16>
    %360 = vector.shape_cast %359 : vector<1x16x8xbf16> to vector<16x8xbf16>
    %361 = arith.truncf %358 : vector<8x256xf32> to vector<8x256xbf16>
    %cst_334 = arith.constant dense<0.000000e+00> : vector<16x256xf32>
    %362 = tpu.matmul %360, %361, %cst_334 {dimension_numbers = #tpu.dot_dimension_numbers<[1], [0], [0], [1], [0, 0, 1, 1], [], []>} : vector<16x8xbf16>, vector<8x256xbf16>, vector<16x256xf32> -> vector<16x256xf32>
    %363 = arith.addf %357, %362 : vector<16x256xf32>
    %c0_335 = arith.constant 0 : index
    %c129_336 = arith.constant 129 : index
    %364 = vector.load %arg22[%c0_335, %c129_336] : memref<8x401xf32, #tpu.memory_space<vmem>>, vector<8x256xf32>
    %c2_337 = arith.constant 2 : index
    %c0_338 = arith.constant 0 : index
    %365 = vector.load %arg14[%c2_337, %c0_338] : memref<3x256xf32, #tpu.memory_space<vmem>>, vector<1x256xf32>
    %366 = vector.broadcast %365 : vector<1x256xf32> to vector<8x256xf32>
    %367 = arith.mulf %364, %366 : vector<8x256xf32>
    %c5_339 = arith.constant 5 : index
    %c0_340 = arith.constant 0 : index
    %c0_341 = arith.constant 0 : index
    %368 = vector.load %arg8[%c5_339, %c0_340, %c0_341] : memref<9x16x8xbf16, #tpu.memory_space<vmem>>, vector<1x16x8xbf16>
    %369 = vector.shape_cast %368 : vector<1x16x8xbf16> to vector<16x8xbf16>
    %370 = arith.truncf %367 : vector<8x256xf32> to vector<8x256xbf16>
    %cst_342 = arith.constant dense<0.000000e+00> : vector<16x256xf32>
    %371 = tpu.matmul %369, %370, %cst_342 {dimension_numbers = #tpu.dot_dimension_numbers<[1], [0], [0], [1], [0, 0, 1, 1], [], []>} : vector<16x8xbf16>, vector<8x256xbf16>, vector<16x256xf32> -> vector<16x256xf32>
    %372 = arith.addf %363, %371 : vector<16x256xf32>
    %c0_343 = arith.constant 0 : index
    %c144_344 = arith.constant 144 : index
    %373 = vector.load %arg20[%c0_343, %c144_344] : memref<8x401xf32, #tpu.memory_space<vmem>>, vector<8x256xf32>
    %c6_345 = arith.constant 6 : index
    %c0_346 = arith.constant 0 : index
    %c0_347 = arith.constant 0 : index
    %374 = vector.load %arg8[%c6_345, %c0_346, %c0_347] : memref<9x16x8xbf16, #tpu.memory_space<vmem>>, vector<1x16x8xbf16>
    %375 = vector.shape_cast %374 : vector<1x16x8xbf16> to vector<16x8xbf16>
    %376 = arith.truncf %373 : vector<8x256xf32> to vector<8x256xbf16>
    %cst_348 = arith.constant dense<0.000000e+00> : vector<16x256xf32>
    %377 = tpu.matmul %375, %376, %cst_348 {dimension_numbers = #tpu.dot_dimension_numbers<[1], [0], [0], [1], [0, 0, 1, 1], [], []>} : vector<16x8xbf16>, vector<8x256xbf16>, vector<16x256xf32> -> vector<16x256xf32>
    %378 = arith.addf %372, %377 : vector<16x256xf32>
    %c0_349 = arith.constant 0 : index
    %c144_350 = arith.constant 144 : index
    %379 = vector.load %arg21[%c0_349, %c144_350] : memref<8x401xf32, #tpu.memory_space<vmem>>, vector<8x256xf32>
    %c7_351 = arith.constant 7 : index
    %c0_352 = arith.constant 0 : index
    %c0_353 = arith.constant 0 : index
    %380 = vector.load %arg8[%c7_351, %c0_352, %c0_353] : memref<9x16x8xbf16, #tpu.memory_space<vmem>>, vector<1x16x8xbf16>
    %381 = vector.shape_cast %380 : vector<1x16x8xbf16> to vector<16x8xbf16>
    %382 = arith.truncf %379 : vector<8x256xf32> to vector<8x256xbf16>
    %cst_354 = arith.constant dense<0.000000e+00> : vector<16x256xf32>
    %383 = tpu.matmul %381, %382, %cst_354 {dimension_numbers = #tpu.dot_dimension_numbers<[1], [0], [0], [1], [0, 0, 1, 1], [], []>} : vector<16x8xbf16>, vector<8x256xbf16>, vector<16x256xf32> -> vector<16x256xf32>
    %384 = arith.addf %378, %383 : vector<16x256xf32>
    %c0_355 = arith.constant 0 : index
    %c145_356 = arith.constant 145 : index
    %385 = vector.load %arg20[%c0_355, %c145_356] : memref<8x401xf32, #tpu.memory_space<vmem>>, vector<8x256xf32>
    %c2_357 = arith.constant 2 : index
    %c0_358 = arith.constant 0 : index
    %386 = vector.load %arg14[%c2_357, %c0_358] : memref<3x256xf32, #tpu.memory_space<vmem>>, vector<1x256xf32>
    %387 = vector.broadcast %386 : vector<1x256xf32> to vector<8x256xf32>
    %388 = arith.mulf %385, %387 : vector<8x256xf32>
    %c8_359 = arith.constant 8 : index
    %c0_360 = arith.constant 0 : index
    %c0_361 = arith.constant 0 : index
    %389 = vector.load %arg8[%c8_359, %c0_360, %c0_361] : memref<9x16x8xbf16, #tpu.memory_space<vmem>>, vector<1x16x8xbf16>
    %390 = vector.shape_cast %389 : vector<1x16x8xbf16> to vector<16x8xbf16>
    %391 = arith.truncf %388 : vector<8x256xf32> to vector<8x256xbf16>
    %cst_362 = arith.constant dense<0.000000e+00> : vector<16x256xf32>
    %392 = tpu.matmul %390, %391, %cst_362 {dimension_numbers = #tpu.dot_dimension_numbers<[1], [0], [0], [1], [0, 0, 1, 1], [], []>} : vector<16x8xbf16>, vector<8x256xbf16>, vector<16x256xf32> -> vector<16x256xf32>
    %393 = arith.addf %384, %392 : vector<16x256xf32>
    %394 = arith.maximumf %331, %393 : vector<16x256xf32>
    %395 = arith.addf %99, %394 : vector<16x256xf32>
    %c0_363 = arith.constant 0 : index
    %c0_364 = arith.constant 0 : index
    %396 = vector.load %arg9[%c0_363, %c0_364] : memref<16x1xf32, #tpu.memory_space<vmem>>, vector<16x1xf32>
    %397 = vector.broadcast %396 : vector<16x1xf32> to vector<16x256xf32>
    %398 = arith.addf %395, %397 : vector<16x256xf32>
    %c0_365 = arith.constant 0 : index
    %c0_366 = arith.constant 0 : index
    %399 = vector.load %arg15[%c0_365, %c0_366] : memref<16x1xf32, #tpu.memory_space<vmem>>, vector<16x1xf32>
    %400 = vector.broadcast %399 : vector<16x1xf32> to vector<16x256xf32>
    %401 = arith.mulf %398, %400 : vector<16x256xf32>
    %c0_367 = arith.constant 0 : index
    %c0_368 = arith.constant 0 : index
    %402 = vector.load %arg16[%c0_367, %c0_368] : memref<16x1xf32, #tpu.memory_space<vmem>>, vector<16x1xf32>
    %403 = vector.broadcast %402 : vector<16x1xf32> to vector<16x256xf32>
    %404 = arith.addf %401, %403 : vector<16x256xf32>
    %cst_369 = arith.constant 0.000000e+00 : f32
    %405 = vector.broadcast %cst_369 : f32 to vector<16x256xf32>
    %406 = arith.maximumf %404, %405 : vector<16x256xf32>
    %cst_370 = arith.constant dense<0.000000e+00> : vector<16xf32>
    %407 = vector.multi_reduction <add>, %406, %cst_370 [1] : vector<16x256xf32> to vector<16xf32>
    %408 = vector.shape_cast %407 : vector<16xf32> to vector<16x1xf32>
    %cst_371 = arith.constant 3.906250e-03 : f32
    %409 = vector.broadcast %cst_371 : f32 to vector<16x1xf32>
    %410 = arith.mulf %408, %409 : vector<16x1xf32>
    %c0_372 = arith.constant 0 : index
    %c0_373 = arith.constant 0 : index
    %411 = vector.load %arg17[%c0_372, %c0_373] : memref<8x16xf32, #tpu.memory_space<vmem>>, vector<8x16xf32>
    %cst_374 = arith.constant dense<0.000000e+00> : vector<8x1xf32>
    %412 = tpu.matmul %411, %410, %cst_374 {dimension_numbers = #tpu.dot_dimension_numbers<[1], [0], [0], [1], [0, 0, 1, 1], [], []>} : vector<8x16xf32>, vector<16x1xf32>, vector<8x1xf32> -> vector<8x1xf32>
    %c0_375 = arith.constant 0 : index
    %c0_376 = arith.constant 0 : index
    %413 = vector.load %arg18[%c0_375, %c0_376] : memref<8x1xf32, #tpu.memory_space<vmem>>, vector<8x1xf32>
    %414 = arith.addf %412, %413 : vector<8x1xf32>
    %415 = vector.broadcast %414 : vector<8x1xf32> to vector<8x256xf32>
    %416 = arith.mulf %16, %415 : vector<8x256xf32>
    %c0_377 = arith.constant 0 : index
    %c0_378 = arith.constant 0 : index
    %c0_379 = arith.constant 0 : index
    %417 = vector.load %arg19[%c0_377, %c0_378, %c0_379] : memref<1x8x256xf32, #tpu.memory_space<vmem>>, vector<1x8x256xf32>
    %418 = vector.shape_cast %417 : vector<1x8x256xf32> to vector<8x256xf32>
    %419 = vector.shape_cast %416 : vector<8x256xf32> to vector<1x8x256xf32>
    tpu.vector_store %arg19[%c0_377, %c0_378, %c0_379], %419 {strides = array<i32>} : memref<1x8x256xf32, #tpu.memory_space<vmem>>, vector<1x8x256xf32>,
    return
  }
  func.func @transform_0(%arg0: i32) -> (i32, i32, i32) {
    %c0_i32 = arith.constant 0 : i32
    %c0_i32_0 = arith.constant 0 : i32
    %c0_i32_1 = arith.constant 0 : i32
    return %arg0, %c0_i32, %c0_i32_0 : i32, i32, i32
  }
  func.func @transform_1(%arg0: i32) -> (i32, i32, i32) {
    %c0_i32 = arith.constant 0 : i32
    %c0_i32_0 = arith.constant 0 : i32
    %c0_i32_1 = arith.constant 0 : i32
    return %arg0, %c0_i32, %c0_i32_0 : i32, i32, i32
  }
  func.func @transform_2(%arg0: i32) -> (i32, i32, i32) {
    %c0_i32 = arith.constant 0 : i32
    %c0_i32_0 = arith.constant 0 : i32
    %c0_i32_1 = arith.constant 0 : i32
    return %arg0, %c0_i32, %c0_i32_0 : i32, i32, i32
  }
  func.func @transform_3(%arg0: i32) -> (i32, i32, i32) {
    %c0_i32 = arith.constant 0 : i32
    %c0_i32_0 = arith.constant 0 : i32
    %c0_i32_1 = arith.constant 0 : i32
    return %arg0, %c0_i32, %c0_i32_0 : i32, i32, i32
  }
  func.func @transform_4(%arg0: i32) -> (i32, i32, i32) {
    %c0_i32 = arith.constant 0 : i32
    %c0_i32_0 = arith.constant 0 : i32
    %c0_i32_1 = arith.constant 0 : i32
    return %arg0, %c0_i32, %c0_i32_0 : i32, i32, i32
  }
  func.func @transform_5(%arg0: i32) -> (i32, i32) {
    %c0_i32 = arith.constant 0 : i32
    %c0_i32_0 = arith.constant 0 : i32
    %c0_i32_1 = arith.constant 0 : i32
    return %c0_i32, %c0_i32_0 : i32, i32
  }
  func.func @transform_6(%arg0: i32) -> (i32, i32) {
    %c0_i32 = arith.constant 0 : i32
    %c0_i32_0 = arith.constant 0 : i32
    %c0_i32_1 = arith.constant 0 : i32
    return %c0_i32, %c0_i32_0 : i32, i32
  }
  func.func @transform_7(%arg0: i32) -> (i32, i32, i32) {
    %c0_i32 = arith.constant 0 : i32
    %c0_i32_0 = arith.constant 0 : i32
    %c0_i32_1 = arith.constant 0 : i32
    %c0_i32_2 = arith.constant 0 : i32
    return %c0_i32, %c0_i32_0, %c0_i32_1 : i32, i32, i32
  }
  func.func @transform_8(%arg0: i32) -> (i32, i32) {
    %c0_i32 = arith.constant 0 : i32
    %c0_i32_0 = arith.constant 0 : i32
    %c0_i32_1 = arith.constant 0 : i32
    return %c0_i32, %c0_i32_0 : i32, i32
  }
  func.func @transform_9(%arg0: i32) -> (i32, i32) {
    %c0_i32 = arith.constant 0 : i32
    %c0_i32_0 = arith.constant 0 : i32
    %c0_i32_1 = arith.constant 0 : i32
    return %c0_i32, %c0_i32_0 : i32, i32
  }
  func.func @transform_10(%arg0: i32) -> (i32, i32) {
    %c0_i32 = arith.constant 0 : i32
    %c0_i32_0 = arith.constant 0 : i32
    %c0_i32_1 = arith.constant 0 : i32
    return %c0_i32, %c0_i32_0 : i32, i32
  }
  func.func @transform_11(%arg0: i32) -> (i32, i32, i32) {
    %c0_i32 = arith.constant 0 : i32
    %c0_i32_0 = arith.constant 0 : i32
    %c0_i32_1 = arith.constant 0 : i32
    %c0_i32_2 = arith.constant 0 : i32
    return %c0_i32, %c0_i32_0, %c0_i32_1 : i32, i32, i32
  }
  func.func @transform_12(%arg0: i32) -> (i32, i32) {
    %c0_i32 = arith.constant 0 : i32
    %c0_i32_0 = arith.constant 0 : i32
    %c0_i32_1 = arith.constant 0 : i32
    return %c0_i32, %c0_i32_0 : i32, i32
  }
  func.func @transform_13(%arg0: i32) -> (i32, i32) {
    %c0_i32 = arith.constant 0 : i32
    %c0_i32_0 = arith.constant 0 : i32
    %c0_i32_1 = arith.constant 0 : i32
    return %c0_i32, %c0_i32_0 : i32, i32
  }
  func.func @transform_14(%arg0: i32) -> (i32, i32) {
    %c0_i32 = arith.constant 0 : i32
    %c0_i32_0 = arith.constant 0 : i32
    %c0_i32_1 = arith.constant 0 : i32
    return %c0_i32, %c0_i32_0 : i32, i32
  }
  func.func @transform_15(%arg0: i32) -> (i32, i32) {
    %c0_i32 = arith.constant 0 : i32
    %c0_i32_0 = arith.constant 0 : i32
    %c0_i32_1 = arith.constant 0 : i32
    return %c0_i32, %c0_i32_0 : i32, i32
  }
  func.func @transform_16(%arg0: i32) -> (i32, i32) {
    %c0_i32 = arith.constant 0 : i32
    %c0_i32_0 = arith.constant 0 : i32
    %c0_i32_1 = arith.constant 0 : i32
    return %c0_i32, %c0_i32_0 : i32, i32
  }
  func.func @transform_17(%arg0: i32) -> (i32, i32) {
    %c0_i32 = arith.constant 0 : i32
    %c0_i32_0 = arith.constant 0 : i32
    %c0_i32_1 = arith.constant 0 : i32
    return %c0_i32, %c0_i32_0 : i32, i32
  }
  func.func @transform_18(%arg0: i32) -> (i32, i32, i32) {
    %c0_i32 = arith.constant 0 : i32
    %c0_i32_0 = arith.constant 0 : i32
    %c0_i32_1 = arith.constant 0 : i32
    return %arg0, %c0_i32, %c0_i32_0 : i32, i32, i32
  }
}

</mosaic_0001>

<llo_original>
// kernel: tpu_custom_call.1
$region0: #{tpu_custom_call.1}
  #allocation0 [shape = 'u32[]', space=smem, size = 0x4, offset = 0x4, fixed_abs, tag = 'smem constant byte address 0x4 - core index']
  #allocation1 [shape = 'u32[144,128]{1,0:T(1,128)}', space=vmem, size = 0x12000, scoped, tag = 'internal scratch']
  #allocation2 [shape = 'f32[8,401]{1,0:T(8,128)}', space=vmem, size = 0x4000, scoped, tag = 'scratch operand']
  #allocation3 [shape = 'f32[8,401]{1,0:T(8,128)}', space=vmem, size = 0x4000, scoped, tag = 'scratch operand']
  #allocation4 [shape = 'f32[8,401]{1,0:T(8,128)}', space=vmem, size = 0x4000, scoped, tag = 'scratch operand']
  #allocation5 [shape = 'f32[8,401]{1,0:T(8,128)}', space=vmem, size = 0x4000, scoped, tag = 'scratch operand']
  #allocation6 [shape = 'f32[8,401]{1,0:T(8,128)}', space=vmem, size = 0x4000, scoped, tag = 'scratch operand']
  %s0 = inlined_call_operand.vmem [shape: f32[2,8,256], index: 0, kind: input, shape index: {}]
  %s1 = inlined_call_operand.vmem [shape: f32[2,8,256], index: 1, kind: input, shape index: {}]
  %s2 = inlined_call_operand.vmem [shape: f32[2,8,256], index: 2, kind: input, shape index: {}]
  %s3 = inlined_call_operand.vmem [shape: f32[2,8,256], index: 3, kind: input, shape index: {}]
  %s4 = inlined_call_operand.vmem [shape: f32[2,8,256], index: 4, kind: input, shape index: {}]
  %s5 = inlined_call_operand.vmem [shape: f32[8,1], index: 5, kind: input, shape index: {}]
  %s6 = inlined_call_operand.vmem [shape: f32[8,1], index: 6, kind: input, shape index: {}]
  %s7 = inlined_call_operand.vmem [shape: bf16[9,16,8], index: 7, kind: input, shape index: {}]
  %s8 = inlined_call_operand.vmem [shape: f32[16,1], index: 8, kind: input, shape index: {}]
  %s9 = inlined_call_operand.vmem [shape: f32[8,1], index: 9, kind: input, shape index: {}]
  %s10 = inlined_call_operand.vmem [shape: f32[8,1], index: 10, kind: input, shape index: {}]
  %s11 = inlined_call_operand.vmem [shape: bf16[9,16,8], index: 11, kind: input, shape index: {}]
  %s12 = inlined_call_operand.vmem [shape: f32[16,1], index: 12, kind: input, shape index: {}]
  %s13 = inlined_call_operand.vmem [shape: f32[3,256], index: 13, kind: input, shape index: {}]
  %s14 = inlined_call_operand.vmem [shape: f32[16,1], index: 14, kind: input, shape index: {}]
  %s15 = inlined_call_operand.vmem [shape: f32[16,1], index: 15, kind: input, shape index: {}]
  %s16 = inlined_call_operand.vmem [shape: f32[8,16], index: 16, kind: input, shape index: {}]
  %s17 = inlined_call_operand.vmem [shape: f32[8,1], index: 17, kind: input, shape index: {}]
  %s18 = inlined_call_operand.hbm [shape: f32[2,8,256], index: 18, kind: output, shape index: {}]
  %s19 = sld [smem:[#allocation0]]
  $region105: #{tpu_custom_call.1} parent=0
    _
  %s21 = ssub.s32 1, %s19
  %s22 = scalar_select 0, %s21, %s19
  $region1: #{tpu_custom_call.1} parent=0
    #allocation7 [shape = 'u8[16384]{0}', space=vmem, size = 0x4000, scoped, tag = 'output window, operand 0']
    #allocation8 [shape = 's32[2]{0}', space=sflag, size = 0x8, scoped, tag = 'scoped memory for tpu_custom_call.1']
    %23 = vsyncpa [#allocation8], 0
    %s24 = scalar_lea.sflag [#allocation8], 1
    %25 = vsyncpa %s24, 0
    loop: start=0, step=1, limit=4
    $region2: #{tpu_custom_call.1} parent=1 // loop_pre_header
      _
    $region3: #{tpu_custom_call.1} parent=1 // loop_header
      %s27 = sphi 0, %s31
      %p28 = scmp.ge.s32.totalorder %s27, 4
      %s37 = sphi 0, %s39
      %s40 = sphi 0, %s37
      %s41 = sphi 0, %s40
      %s57 = sphi 0, %s41
      %s63 = sphi 0, %s65
      %s66 = sphi 0, %s63
      %s67 = sphi 0, %s66
      %s83 = sphi 0, %s67
      %s89 = sphi 0, %s91
      %s92 = sphi 0, %s89
      %s93 = sphi 0, %s92
      %s109 = sphi 0, %s93
      %s115 = sphi 0, %s117
      %s118 = sphi 0, %s115
      %s119 = sphi 0, %s118
      %s135 = sphi 0, %s119
      %s141 = sphi 0, %s143
      %s144 = sphi 0, %s141
      %s145 = sphi 0, %s144
      %s161 = sphi 0, %s145
      %s165 = sphi 0, %s165
      %s167 = sphi 0, %s165
      %s168 = sphi 0, %s167
      %s182 = sphi 0, %s168
      %s186 = sphi 0, %s186
      %s188 = sphi 0, %s186
      %s189 = sphi 0, %s188
      %s203 = sphi 0, %s189
      %s207 = sphi 0, %s207
      %s209 = sphi 0, %s207
      %s210 = sphi 0, %s209
      %s224 = sphi 0, %s210
      %s228 = sphi 0, %s228
      %s230 = sphi 0, %s228
      %s231 = sphi 0, %s230
      %s245 = sphi 0, %s231
      %s249 = sphi 0, %s249
      %s251 = sphi 0, %s249
      %s252 = sphi 0, %s251
      %s266 = sphi 0, %s252
      %s270 = sphi 0, %s270
      %s272 = sphi 0, %s270
      %s273 = sphi 0, %s272
      %s287 = sphi 0, %s273
      %s291 = sphi 0, %s291
      %s293 = sphi 0, %s291
      %s294 = sphi 0, %s293
      %s308 = sphi 0, %s294
      %s312 = sphi 0, %s312
      %s314 = sphi 0, %s312
      %s315 = sphi 0, %s314
      %s329 = sphi 0, %s315
      %s333 = sphi 0, %s333
      %s335 = sphi 0, %s333
      %s336 = sphi 0, %s335
      %s350 = sphi 0, %s336
      %s354 = sphi 0, %s354
      %s356 = sphi 0, %s354
      %s357 = sphi 0, %s356
      %s371 = sphi 0, %s357
      %s375 = sphi 0, %s375
      %s377 = sphi 0, %s375
      %s378 = sphi 0, %s377
      %s392 = sphi 0, %s378
      %s396 = sphi 0, %s396
      %s398 = sphi 0, %s396
      %s399 = sphi 0, %s398
      %s413 = sphi 0, %s399
      %s417 = sphi 0, %s417
      %s419 = sphi 0, %s417
      %s420 = sphi 0, %s419
      %s434 = sphi 0, %s420
      %s440 = sphi 0, %s442
      %s443 = sphi 0, %s440
      %s444 = sphi 0, %s443
      %s460 = sphi 0, %s444
    $region4: #{tpu_custom_call.1} parent=1 // loop_header_branch
      %30 = sbr.rel (%p28) target = $region8
    $region5: #{tpu_custom_call.1} parent=1 // loop_body
      %s32 = ssub.s32 %s27, 1
      %s33 = ssub.s32 %s27, 2
      %s34 = sadd.s32 %s27, 1
      %s35 = ssub.s32 %s27, %s34
      %p36 = scmp.eq.s32.totalorder %s35, 0
      %s38 = sadd.s32 %s37, 1
      %s39 = scalar_select %p36, %s37, %s38
      %p42 = pneg %p36
      %p43 = scmp.eq.s32.totalorder %s27, 1
      %p44 = por %p42, %p43
      %p45 = scmp.ne.s32.totalorder %s37, %s40
      %p46 = scmp.eq.s32.totalorder %s27, 0
      %p47 = por %p45, %p46
      %p48 = scmp.ne.s32.totalorder %s37, %s40
      %p49 = scmp.eq.s32.totalorder %s32, 1
      %p50 = por %p48, %p49
      %p51 = scmp.ne.s32.totalorder %s40, %s41
      %p52 = scmp.eq.s32.totalorder %s32, 0
      %p53 = por %p51, %p52
      %p54 = scmp.ne.s32.totalorder %s40, %s41
      %p55 = scmp.eq.s32.totalorder %s33, 1
      %p56 = por %p54, %p55
      %p58 = scmp.ne.s32.totalorder %s41, %s57
      %p59 = scmp.eq.s32.totalorder %s33, 0
      %p60 = por %p58, %p59
      %s61 = ssub.s32 %s27, %s34
      %p62 = scmp.eq.s32.totalorder %s61, 0
      %s64 = sadd.s32 %s63, 1
      %s65 = scalar_select %p62, %s63, %s64
      %p68 = pneg %p62
      %p69 = scmp.eq.s32.totalorder %s27, 1
      %p70 = por %p68, %p69
      %p71 = scmp.ne.s32.totalorder %s63, %s66
      %p72 = scmp.eq.s32.totalorder %s27, 0
      %p73 = por %p71, %p72
      %p74 = scmp.ne.s32.totalorder %s63, %s66
      %p75 = scmp.eq.s32.totalorder %s32, 1
      %p76 = por %p74, %p75
      %p77 = scmp.ne.s32.totalorder %s66, %s67
      %p78 = scmp.eq.s32.totalorder %s32, 0
      %p79 = por %p77, %p78
      %p80 = scmp.ne.s32.totalorder %s66, %s67
      %p81 = scmp.eq.s32.totalorder %s33, 1
      %p82 = por %p80, %p81
      %p84 = scmp.ne.s32.totalorder %s67, %s83
      %p85 = scmp.eq.s32.totalorder %s33, 0
      %p86 = por %p84, %p85
      %s87 = ssub.s32 %s27, %s34
      %p88 = scmp.eq.s32.totalorder %s87, 0
      %s90 = sadd.s32 %s89, 1
      %s91 = scalar_select %p88, %s89, %s90
      %p94 = pneg %p88
      %p95 = scmp.eq.s32.totalorder %s27, 1
      %p96 = por %p94, %p95
      %p97 = scmp.ne.s32.totalorder %s89, %s92
      %p98 = scmp.eq.s32.totalorder %s27, 0
      %p99 = por %p97, %p98
      %p100 = scmp.ne.s32.totalorder %s89, %s92
      %p101 = scmp.eq.s32.totalorder %s32, 1
      %p102 = por %p100, %p101
      %p103 = scmp.ne.s32.totalorder %s92, %s93
      %p104 = scmp.eq.s32.totalorder %s32, 0
      %p105 = por %p103, %p104
      %p106 = scmp.ne.s32.totalorder %s92, %s93
      %p107 = scmp.eq.s32.totalorder %s33, 1
      %p108 = por %p106, %p107
      %p110 = scmp.ne.s32.totalorder %s93, %s109
      %p111 = scmp.eq.s32.totalorder %s33, 0
      %p112 = por %p110, %p111
      %s113 = ssub.s32 %s27, %s34
      %p114 = scmp.eq.s32.totalorder %s113, 0
      %s116 = sadd.s32 %s115, 1
      %s117 = scalar_select %p114, %s115, %s116
      %p120 = pneg %p114
      %p121 = scmp.eq.s32.totalorder %s27, 1
      %p122 = por %p120, %p121
      %p123 = scmp.ne.s32.totalorder %s115, %s118
      %p124 = scmp.eq.s32.totalorder %s27, 0
      %p125 = por %p123, %p124
      %p126 = scmp.ne.s32.totalorder %s115, %s118
      %p127 = scmp.eq.s32.totalorder %s32, 1
      %p128 = por %p126, %p127
      %p129 = scmp.ne.s32.totalorder %s118, %s119
      %p130 = scmp.eq.s32.totalorder %s32, 0
      %p131 = por %p129, %p130
      %p132 = scmp.ne.s32.totalorder %s118, %s119
      %p133 = scmp.eq.s32.totalorder %s33, 1
      %p134 = por %p132, %p133
      %p136 = scmp.ne.s32.totalorder %s119, %s135
      %p137 = scmp.eq.s32.totalorder %s33, 0
      %p138 = por %p136, %p137
      %s139 = ssub.s32 %s27, %s34
      %p140 = scmp.eq.s32.totalorder %s139, 0
      %s142 = sadd.s32 %s141, 1
      %s143 = scalar_select %p140, %s141, %s142
      %p146 = pneg %p140
      %p147 = scmp.eq.s32.totalorder %s27, 1
      %p148 = por %p146, %p147
      %p149 = scmp.ne.s32.totalorder %s141, %s144
      %p150 = scmp.eq.s32.totalorder %s27, 0
      %p151 = por %p149, %p150
      %p152 = scmp.ne.s32.totalorder %s141, %s144
      %p153 = scmp.eq.s32.totalorder %s32, 1
      %p154 = por %p152, %p153
      %p155 = scmp.ne.s32.totalorder %s144, %s145
      %p156 = scmp.eq.s32.totalorder %s32, 0
      %p157 = por %p155, %p156
      %p158 = scmp.ne.s32.totalorder %s144, %s145
      %p159 = scmp.eq.s32.totalorder %s33, 1
      %p160 = por %p158, %p159
      %p162 = scmp.ne.s32.totalorder %s145, %s161
      %p163 = scmp.eq.s32.totalorder %s33, 0
      %p164 = por %p162, %p163
      %s166 = sadd.s32 %s165, 1
      %p169 = scmp.eq.s32.totalorder %s27, 1
      %p170 = scmp.ne.s32.totalorder %s165, %s167
      %p171 = scmp.eq.s32.totalorder %s27, 0
      %p172 = por %p170, %p171
      %p173 = scmp.ne.s32.totalorder %s165, %s167
      %p174 = scmp.eq.s32.totalorder %s32, 1
      %p175 = por %p173, %p174
      %p176 = scmp.ne.s32.totalorder %s167, %s168
      %p177 = scmp.eq.s32.totalorder %s32, 0
      %p178 = por %p176, %p177
      %p179 = scmp.ne.s32.totalorder %s167, %s168
      %p180 = scmp.eq.s32.totalorder %s33, 1
      %p181 = por %p179, %p180
      %p183 = scmp.ne.s32.totalorder %s168, %s182
      %p184 = scmp.eq.s32.totalorder %s33, 0
      %p185 = por %p183, %p184
      %s187 = sadd.s32 %s186, 1
      %p190 = scmp.eq.s32.totalorder %s27, 1
      %p191 = scmp.ne.s32.totalorder %s186, %s188
      %p192 = scmp.eq.s32.totalorder %s27, 0
      %p193 = por %p191, %p192
      %p194 = scmp.ne.s32.totalorder %s186, %s188
      %p195 = scmp.eq.s32.totalorder %s32, 1
      %p196 = por %p194, %p195
      %p197 = scmp.ne.s32.totalorder %s188, %s189
      %p198 = scmp.eq.s32.totalorder %s32, 0
      %p199 = por %p197, %p198
      %p200 = scmp.ne.s32.totalorder %s188, %s189
      %p201 = scmp.eq.s32.totalorder %s33, 1
      %p202 = por %p200, %p201
      %p204 = scmp.ne.s32.totalorder %s189, %s203
      %p205 = scmp.eq.s32.totalorder %s33, 0
      %p206 = por %p204, %p205
      %s208 = sadd.s32 %s207, 1
      %p211 = scmp.eq.s32.totalorder %s27, 1
      %p212 = scmp.ne.s32.totalorder %s207, %s209
      %p213 = scmp.eq.s32.totalorder %s27, 0
      %p214 = por %p212, %p213
      %p215 = scmp.ne.s32.totalorder %s207, %s209
      %p216 = scmp.eq.s32.totalorder %s32, 1
      %p217 = por %p215, %p216
      %p218 = scmp.ne.s32.totalorder %s209, %s210
      %p219 = scmp.eq.s32.totalorder %s32, 0
      %p220 = por %p218, %p219
      %p221 = scmp.ne.s32.totalorder %s209, %s210
      %p222 = scmp.eq.s32.totalorder %s33, 1
      %p223 = por %p221, %p222
      %p225 = scmp.ne.s32.totalorder %s210, %s224
      %p226 = scmp.eq.s32.totalorder %s33, 0
      %p227 = por %p225, %p226
      %s229 = sadd.s32 %s228, 1
      %p232 = scmp.eq.s32.totalorder %s27, 1
      %p233 = scmp.ne.s32.totalorder %s228, %s230
      %p234 = scmp.eq.s32.totalorder %s27, 0
      %p235 = por %p233, %p234
      %p236 = scmp.ne.s32.totalorder %s228, %s230
      %p237 = scmp.eq.s32.totalorder %s32, 1
      %p238 = por %p236, %p237
      %p239 = scmp.ne.s32.totalorder %s230, %s231
      %p240 = scmp.eq.s32.totalorder %s32, 0
      %p241 = por %p239, %p240
      %p242 = scmp.ne.s32.totalorder %s230, %s231
      %p243 = scmp.eq.s32.totalorder %s33, 1
      %p244 = por %p242, %p243
      %p246 = scmp.ne.s32.totalorder %s231, %s245
      %p247 = scmp.eq.s32.totalorder %s33, 0
      %p248 = por %p246, %p247
      %s250 = sadd.s32 %s249, 1
      %p253 = scmp.eq.s32.totalorder %s27, 1
      %p254 = scmp.ne.s32.totalorder %s249, %s251
      %p255 = scmp.eq.s32.totalorder %s27, 0
      %p256 = por %p254, %p255
      %p257 = scmp.ne.s32.totalorder %s249, %s251
      %p258 = scmp.eq.s32.totalorder %s32, 1
      %p259 = por %p257, %p258
      %p260 = scmp.ne.s32.totalorder %s251, %s252
      %p261 = scmp.eq.s32.totalorder %s32, 0
      %p262 = por %p260, %p261
      %p263 = scmp.ne.s32.totalorder %s251, %s252
      %p264 = scmp.eq.s32.totalorder %s33, 1
      %p265 = por %p263, %p264
      %p267 = scmp.ne.s32.totalorder %s252, %s266
      %p268 = scmp.eq.s32.totalorder %s33, 0
      %p269 = por %p267, %p268
      %s271 = sadd.s32 %s270, 1
      %p274 = scmp.eq.s32.totalorder %s27, 1
      %p275 = scmp.ne.s32.totalorder %s270, %s272
      %p276 = scmp.eq.s32.totalorder %s27, 0
      %p277 = por %p275, %p276
      %p278 = scmp.ne.s32.totalorder %s270, %s272
      %p279 = scmp.eq.s32.totalorder %s32, 1
      %p280 = por %p278, %p279
      %p281 = scmp.ne.s32.totalorder %s272, %s273
      %p282 = scmp.eq.s32.totalorder %s32, 0
      %p283 = por %p281, %p282
      %p284 = scmp.ne.s32.totalorder %s272, %s273
      %p285 = scmp.eq.s32.totalorder %s33, 1
      %p286 = por %p284, %p285
      %p288 = scmp.ne.s32.totalorder %s273, %s287
      %p289 = scmp.eq.s32.totalorder %s33, 0
      %p290 = por %p288, %p289
      %s292 = sadd.s32 %s291, 1
      %p295 = scmp.eq.s32.totalorder %s27, 1
      %p296 = scmp.ne.s32.totalorder %s291, %s293
      %p297 = scmp.eq.s32.totalorder %s27, 0
      %p298 = por %p296, %p297
      %p299 = scmp.ne.s32.totalorder %s291, %s293
      %p300 = scmp.eq.s32.totalorder %s32, 1
      %p301 = por %p299, %p300
      %p302 = scmp.ne.s32.totalorder %s293, %s294
      %p303 = scmp.eq.s32.totalorder %s32, 0
      %p304 = por %p302, %p303
      %p305 = scmp.ne.s32.totalorder %s293, %s294
      %p306 = scmp.eq.s32.totalorder %s33, 1
      %p307 = por %p305, %p306
      %p309 = scmp.ne.s32.totalorder %s294, %s308
      %p310 = scmp.eq.s32.totalorder %s33, 0
      %p311 = por %p309, %p310
      %s313 = sadd.s32 %s312, 1
      %p316 = scmp.eq.s32.totalorder %s27, 1
      %p317 = scmp.ne.s32.totalorder %s312, %s314
      %p318 = scmp.eq.s32.totalorder %s27, 0
      %p319 = por %p317, %p318
      %p320 = scmp.ne.s32.totalorder %s312, %s314
      %p321 = scmp.eq.s32.totalorder %s32, 1
      %p322 = por %p320, %p321
      %p323 = scmp.ne.s32.totalorder %s314, %s315
      %p324 = scmp.eq.s32.totalorder %s32, 0
      %p325 = por %p323, %p324
      %p326 = scmp.ne.s32.totalorder %s314, %s315
      %p327 = scmp.eq.s32.totalorder %s33, 1
      %p328 = por %p326, %p327
      %p330 = scmp.ne.s32.totalorder %s315, %s329
      %p331 = scmp.eq.s32.totalorder %s33, 0
      %p332 = por %p330, %p331
      %s334 = sadd.s32 %s333, 1
      %p337 = scmp.eq.s32.totalorder %s27, 1
      %p338 = scmp.ne.s32.totalorder %s333, %s335
      %p339 = scmp.eq.s32.totalorder %s27, 0
      %p340 = por %p338, %p339
      %p341 = scmp.ne.s32.totalorder %s333, %s335
      %p342 = scmp.eq.s32.totalorder %s32, 1
      %p343 = por %p341, %p342
      %p344 = scmp.ne.s32.totalorder %s335, %s336
      %p345 = scmp.eq.s32.totalorder %s32, 0
      %p346 = por %p344, %p345
      %p347 = scmp.ne.s32.totalorder %s335, %s336
      %p348 = scmp.eq.s32.totalorder %s33, 1
      %p349 = por %p347, %p348
      %p351 = scmp.ne.s32.totalorder %s336, %s350
      %p352 = scmp.eq.s32.totalorder %s33, 0
      %p353 = por %p351, %p352
      %s355 = sadd.s32 %s354, 1
      %p358 = scmp.eq.s32.totalorder %s27, 1
      %p359 = scmp.ne.s32.totalorder %s354, %s356
      %p360 = scmp.eq.s32.totalorder %s27, 0
      %p361 = por %p359, %p360
      %p362 = scmp.ne.s32.totalorder %s354, %s356
      %p363 = scmp.eq.s32.totalorder %s32, 1
      %p364 = por %p362, %p363
      %p365 = scmp.ne.s32.totalorder %s356, %s357
      %p366 = scmp.eq.s32.totalorder %s32, 0
      %p367 = por %p365, %p366
      %p368 = scmp.ne.s32.totalorder %s356, %s357
      %p369 = scmp.eq.s32.totalorder %s33, 1
      %p370 = por %p368, %p369
      %p372 = scmp.ne.s32.totalorder %s357, %s371
      %p373 = scmp.eq.s32.totalorder %s33, 0
      %p374 = por %p372, %p373
      %s376 = sadd.s32 %s375, 1
      %p379 = scmp.eq.s32.totalorder %s27, 1
      %p380 = scmp.ne.s32.totalorder %s375, %s377
      %p381 = scmp.eq.s32.totalorder %s27, 0
      %p382 = por %p380, %p381
      %p383 = scmp.ne.s32.totalorder %s375, %s377
      %p384 = scmp.eq.s32.totalorder %s32, 1
      %p385 = por %p383, %p384
      %p386 = scmp.ne.s32.totalorder %s377, %s378
      %p387 = scmp.eq.s32.totalorder %s32, 0
      %p388 = por %p386, %p387
      %p389 = scmp.ne.s32.totalorder %s377, %s378
      %p390 = scmp.eq.s32.totalorder %s33, 1
      %p391 = por %p389, %p390
      %p393 = scmp.ne.s32.totalorder %s378, %s392
      %p394 = scmp.eq.s32.totalorder %s33, 0
      %p395 = por %p393, %p394
      %s397 = sadd.s32 %s396, 1
      %p400 = scmp.eq.s32.totalorder %s27, 1
      %p401 = scmp.ne.s32.totalorder %s396, %s398
      %p402 = scmp.eq.s32.totalorder %s27, 0
      %p403 = por %p401, %p402
      %p404 = scmp.ne.s32.totalorder %s396, %s398
      %p405 = scmp.eq.s32.totalorder %s32, 1
      %p406 = por %p404, %p405
      %p407 = scmp.ne.s32.totalorder %s398, %s399
      %p408 = scmp.eq.s32.totalorder %s32, 0
      %p409 = por %p407, %p408
      %p410 = scmp.ne.s32.totalorder %s398, %s399
      %p411 = scmp.eq.s32.totalorder %s33, 1
      %p412 = por %p410, %p411
      %p414 = scmp.ne.s32.totalorder %s399, %s413
      %p415 = scmp.eq.s32.totalorder %s33, 0
      %p416 = por %p414, %p415
      %s418 = sadd.s32 %s417, 1
      %p421 = scmp.eq.s32.totalorder %s27, 1
      %p422 = scmp.ne.s32.totalorder %s417, %s419
      %p423 = scmp.eq.s32.totalorder %s27, 0
      %p424 = por %p422, %p423
      %p425 = scmp.ne.s32.totalorder %s417, %s419
      %p426 = scmp.eq.s32.totalorder %s32, 1
      %p427 = por %p425, %p426
      %p428 = scmp.ne.s32.totalorder %s419, %s420
      %p429 = scmp.eq.s32.totalorder %s32, 0
      %p430 = por %p428, %p429
      %p431 = scmp.ne.s32.totalorder %s419, %s420
      %p432 = scmp.eq.s32.totalorder %s33, 1
      %p433 = por %p431, %p432
      %p435 = scmp.ne.s32.totalorder %s420, %s434
      %p436 = scmp.eq.s32.totalorder %s33, 0
      %p437 = por %p435, %p436
      %s438 = ssub.s32 %s27, %s34
      %p439 = scmp.eq.s32.totalorder %s438, 0
      %s441 = sadd.s32 %s440, 1
      %s442 = scalar_select %p439, %s440, %s441
      %p445 = pneg %p439
      %p446 = scmp.eq.s32.totalorder %s27, 1
      %p447 = por %p445, %p446
      %p448 = scmp.ne.s32.totalorder %s440, %s443
      %p449 = scmp.eq.s32.totalorder %s27, 0
      %p450 = por %p448, %p449
      %p451 = scmp.ne.s32.totalorder %s440, %s443
      %p452 = scmp.eq.s32.totalorder %s32, 1
      %p453 = por %p451, %p452
      %p454 = scmp.ne.s32.totalorder %s443, %s444
      %p455 = scmp.eq.s32.totalorder %s32, 0
      %p456 = por %p454, %p455
      %p457 = scmp.ne.s32.totalorder %s443, %s444
      %p458 = scmp.eq.s32.totalorder %s33, 1
      %p459 = por %p457, %p458
      %p461 = scmp.ne.s32.totalorder %s444, %s460
      %p462 = scmp.eq.s32.totalorder %s33, 0
      %p463 = por %p461, %p462
      %p464 = scmp.le.s32.totalorder 1, %s27
      %p465 = scmp.lt.s32.totalorder %s27, 3
      %p466 = pnand %p464, %p465
      %p467 = pneg %p466
      // Predicated region
      $region9: #{tpu_custom_call.1} parent=5 // pred_check
        _
      $region10: #{tpu_custom_call.1} parent=5 // pred_check_branch
        %469 = sbr.rel (%p466) target = $region12
      $region11: #{tpu_custom_call.1} parent=5 // pred_region
        %s470 = ssub.s32 %s27, 1
        // Predicated region
        $region13: #{tpu_custom_call.1} parent=11 // pred_check
          %p471 = pneg %p178
        $region14: #{tpu_custom_call.1} parent=11 // pred_check_branch
          %473 = sbr.rel (%p471) target = $region16
        $region15: #{tpu_custom_call.1} parent=11 // pred_region
          _
        $region16: #{tpu_custom_call.1} parent=11 // pred_fallthru
          _
        // Predicated region
        $region17: #{tpu_custom_call.1} parent=11 // pred_check
          %p474 = pneg %p199
        $region18: #{tpu_custom_call.1} parent=11 // pred_check_branch
          %476 = sbr.rel (%p474) target = $region20
        $region19: #{tpu_custom_call.1} parent=11 // pred_region
          _
        $region20: #{tpu_custom_call.1} parent=11 // pred_fallthru
          _
        // Predicated region
        $region21: #{tpu_custom_call.1} parent=11 // pred_check
          %p477 = pneg %p220
        $region22: #{tpu_custom_call.1} parent=11 // pred_check_branch
          %479 = sbr.rel (%p477) target = $region24
        $region23: #{tpu_custom_call.1} parent=11 // pred_region
          _
        $region24: #{tpu_custom_call.1} parent=11 // pred_fallthru
          _
        // Predicated region
        $region25: #{tpu_custom_call.1} parent=11 // pred_check
          %p480 = pneg %p241
        $region26: #{tpu_custom_call.1} parent=11 // pred_check_branch
          %482 = sbr.rel (%p480) target = $region28
        $region27: #{tpu_custom_call.1} parent=11 // pred_region
          _
        $region28: #{tpu_custom_call.1} parent=11 // pred_fallthru
          _
        // Predicated region
        $region29: #{tpu_custom_call.1} parent=11 // pred_check
          %p483 = pneg %p262
        $region30: #{tpu_custom_call.1} parent=11 // pred_check_branch
          %485 = sbr.rel (%p483) target = $region32
        $region31: #{tpu_custom_call.1} parent=11 // pred_region
          _
        $region32: #{tpu_custom_call.1} parent=11 // pred_fallthru
          _
        // Predicated region
        $region33: #{tpu_custom_call.1} parent=11 // pred_check
          %p486 = pneg %p283
        $region34: #{tpu_custom_call.1} parent=11 // pred_check_branch
          %488 = sbr.rel (%p486) target = $region36
        $region35: #{tpu_custom_call.1} parent=11 // pred_region
          _
        $region36: #{tpu_custom_call.1} parent=11 // pred_fallthru
          _
        // Predicated region
        $region37: #{tpu_custom_call.1} parent=11 // pred_check
          %p489 = pneg %p304
        $region38: #{tpu_custom_call.1} parent=11 // pred_check_branch
          %491 = sbr.rel (%p489) target = $region40
        $region39: #{tpu_custom_call.1} parent=11 // pred_region
          _
        $region40: #{tpu_custom_call.1} parent=11 // pred_fallthru
          _
        // Predicated region
        $region41: #{tpu_custom_call.1} parent=11 // pred_check
          %p492 = pneg %p325
        $region42: #{tpu_custom_call.1} parent=11 // pred_check_branch
          %494 = sbr.rel (%p492) target = $region44
        $region43: #{tpu_custom_call.1} parent=11 // pred_region
          _
        $region44: #{tpu_custom_call.1} parent=11 // pred_fallthru
          _
        // Predicated region
        $region45: #{tpu_custom_call.1} parent=11 // pred_check
          %p495 = pneg %p346
        $region46: #{tpu_custom_call.1} parent=11 // pred_check_branch
          %497 = sbr.rel (%p495) target = $region48
        $region47: #{tpu_custom_call.1} parent=11 // pred_region
          _
        $region48: #{tpu_custom_call.1} parent=11 // pred_fallthru
          _
        // Predicated region
        $region49: #{tpu_custom_call.1} parent=11 // pred_check
          %p498 = pneg %p367
        $region50: #{tpu_custom_call.1} parent=11 // pred_check_branch
          %500 = sbr.rel (%p498) target = $region52
        $region51: #{tpu_custom_call.1} parent=11 // pred_region
          _
        $region52: #{tpu_custom_call.1} parent=11 // pred_fallthru
          _
        // Predicated region
        $region53: #{tpu_custom_call.1} parent=11 // pred_check
          %p501 = pneg %p388
        $region54: #{tpu_custom_call.1} parent=11 // pred_check_branch
          %503 = sbr.rel (%p501) target = $region56
        $region55: #{tpu_custom_call.1} parent=11 // pred_region
          _
        $region56: #{tpu_custom_call.1} parent=11 // pred_fallthru
          _
        // Predicated region
        $region57: #{tpu_custom_call.1} parent=11 // pred_check
          %p504 = pneg %p409
        $region58: #{tpu_custom_call.1} parent=11 // pred_check_branch
          %506 = sbr.rel (%p504) target = $region60
        $region59: #{tpu_custom_call.1} parent=11 // pred_region
          _
        $region60: #{tpu_custom_call.1} parent=11 // pred_fallthru
          _
        // Predicated region
        $region61: #{tpu_custom_call.1} parent=11 // pred_check
          %p507 = pneg %p430
        $region62: #{tpu_custom_call.1} parent=11 // pred_check_branch
          %509 = sbr.rel (%p507) target = $region64
        $region63: #{tpu_custom_call.1} parent=11 // pred_region
          _
        $region64: #{tpu_custom_call.1} parent=11 // pred_fallthru
          _
      $region12: #{tpu_custom_call.1} parent=5 // pred_fallthru
        _
      %p510 = scmp.lt.s32.totalorder %s27, 2
      // Predicated region
      $region65: #{tpu_custom_call.1} parent=5 // pred_check
        %p511 = pneg %p510
      $region66: #{tpu_custom_call.1} parent=5 // pred_check_branch
        %513 = sbr.rel (%p511) target = $region68
      $region67: #{tpu_custom_call.1} parent=5 // pred_region
        // Predicated region
        $region69: #{tpu_custom_call.1} parent=67 // pred_check
          %p514 = pneg %p47
        $region70: #{tpu_custom_call.1} parent=67 // pred_check_branch
          %516 = sbr.rel (%p514) target = $region72
        $region71: #{tpu_custom_call.1} parent=67 // pred_region
          %p517 = scmp.lt.s32.totalorder %s27, 1
          %s518 = scalar_select %p517, %s27, 1
          %s519 = smul.addr %s518, 2
          %s520 = smul.addr %s519, 8
          %s521 = scalar_lea.vmem %s0, %s520
        $region72: #{tpu_custom_call.1} parent=67 // pred_fallthru
          _
        // Predicated region
        $region73: #{tpu_custom_call.1} parent=67 // pred_check
          %p522 = pneg %p73
        $region74: #{tpu_custom_call.1} parent=67 // pred_check_branch
          %524 = sbr.rel (%p522) target = $region76
        $region75: #{tpu_custom_call.1} parent=67 // pred_region
          %p525 = scmp.lt.s32.totalorder %s27, 1
          %s526 = scalar_select %p525, %s27, 1
          %s527 = smul.addr %s526, 2
          %s528 = smul.addr %s527, 8
          %s529 = scalar_lea.vmem %s1, %s528
        $region76: #{tpu_custom_call.1} parent=67 // pred_fallthru
          _
        // Predicated region
        $region77: #{tpu_custom_call.1} parent=67 // pred_check
          %p530 = pneg %p99
        $region78: #{tpu_custom_call.1} parent=67 // pred_check_branch
          %532 = sbr.rel (%p530) target = $region80
        $region79: #{tpu_custom_call.1} parent=67 // pred_region
          %p533 = scmp.lt.s32.totalorder %s27, 1
          %s534 = scalar_select %p533, %s27, 1
          %s535 = smul.addr %s534, 2
          %s536 = smul.addr %s535, 8
          %s537 = scalar_lea.vmem %s2, %s536
        $region80: #{tpu_custom_call.1} parent=67 // pred_fallthru
          _
        // Predicated region
        $region81: #{tpu_custom_call.1} parent=67 // pred_check
          %p538 = pneg %p125
        $region82: #{tpu_custom_call.1} parent=67 // pred_check_branch
          %540 = sbr.rel (%p538) target = $region84
        $region83: #{tpu_custom_call.1} parent=67 // pred_region
          %p541 = scmp.lt.s32.totalorder %s27, 1
          %s542 = scalar_select %p541, %s27, 1
          %s543 = smul.addr %s542, 2
          %s544 = smul.addr %s543, 8
          %s545 = scalar_lea.vmem %s3, %s544
        $region84: #{tpu_custom_call.1} parent=67 // pred_fallthru
          _
        // Predicated region
        $region85: #{tpu_custom_call.1} parent=67 // pred_check
          %p546 = pneg %p151
        $region86: #{tpu_custom_call.1} parent=67 // pred_check_branch
          %548 = sbr.rel (%p546) target = $region88
        $region87: #{tpu_custom_call.1} parent=67 // pred_region
          %p549 = scmp.lt.s32.totalorder %s27, 1
          %s550 = scalar_select %p549, %s27, 1
          %s551 = smul.addr %s550, 2
          %s552 = smul.addr %s551, 8
          %s553 = scalar_lea.vmem %s4, %s552
        $region88: #{tpu_custom_call.1} parent=67 // pred_fallthru
          _
      $region68: #{tpu_custom_call.1} parent=5 // pred_fallthru
        _
      %p554 = scmp.le.s32.totalorder 1, %s27
      %p555 = scmp.lt.s32.totalorder %s27, 3
      %p556 = pnand %p554, %p555
      %p557 = pneg %p556
      // Predicated region
      $region89: #{tpu_custom_call.1} parent=5 // pred_check
        _
      $region90: #{tpu_custom_call.1} parent=5 // pred_check_branch
        %559 = sbr.rel (%p556) target = $region92
      $region91: #{tpu_custom_call.1} parent=5 // pred_region
        %s560 = ssub.s32 %s27, 1
        %p561 = scmp.lt.s32.totalorder %s32, 1
        %s562 = scalar_select %p561, %s32, 1
        %s563 = smul.addr %s562, 2
        %s564 = smul.addr %s563, 8
        %s565 = scalar_lea.vmem %s0, %s564
        %p566 = pneg %p53
        %p567 = pneg %p50
        %p568 = scmp.lt.s32.totalorder %s32, 1
        %s569 = scalar_select %p568, %s32, 1
        %s570 = smul.addr %s569, 2
        %s571 = smul.addr %s570, 8
        %s572 = scalar_lea.vmem %s1, %s571
        %p573 = pneg %p79
        %p574 = pneg %p76
        %p575 = scmp.lt.s32.totalorder %s32, 1
        %s576 = scalar_select %p575, %s32, 1
        %s577 = smul.addr %s576, 2
        %s578 = smul.addr %s577, 8
        %s579 = scalar_lea.vmem %s2, %s578
        %p580 = pneg %p105
        %p581 = pneg %p102
        %p582 = scmp.lt.s32.totalorder %s32, 1
        %s583 = scalar_select %p582, %s32, 1
        %s584 = smul.addr %s583, 2
        %s585 = smul.addr %s584, 8
        %s586 = scalar_lea.vmem %s3, %s585
        %p587 = pneg %p131
        %p588 = pneg %p128
        %p589 = scmp.lt.s32.totalorder %s32, 1
        %s590 = scalar_select %p589, %s32, 1
        %s591 = smul.addr %s590, 2
        %s592 = smul.addr %s591, 8
        %s593 = scalar_lea.vmem %s4, %s592
        %p594 = pneg %p157
        %p595 = pneg %p154
        %p596 = pneg %p178
        %p597 = pneg %p175
        %p598 = pneg %p199
        %p599 = pneg %p196
        %p600 = pneg %p220
        %p601 = pneg %p217
        %p602 = pneg %p241
        %p603 = pneg %p238
        %p604 = pneg %p262
        %p605 = pneg %p259
        %p606 = pneg %p283
        %p607 = pneg %p280
        %p608 = pneg %p304
        %p609 = pneg %p301
        %p610 = pneg %p325
        %p611 = pneg %p322
        %p612 = pneg %p346
        %p613 = pneg %p343
        %p614 = pneg %p367
        %p615 = pneg %p364
        %p616 = pneg %p388
        %p617 = pneg %p385
        %p618 = pneg %p409
        %p619 = pneg %p406
        %p620 = pneg %p430
        %p621 = pneg %p427
        %p622 = pneg %p456
        %p623 = pneg %p453
        %s624 = sand.u32 %s443, 1
        %s625 = scalar_lea.sflag [#allocation8], %s624
        %s626 = sand.u32 %s443, 1
        %s627 = smul.addr %s626, 16
        %s628 = scalar_lea.vmem [#allocation7], %s627
        %p629 = scmp.lt.s32.totalorder %s32, 1
        %s630 = scalar_select %p629, %s32, 1
        %s631 = smul.addr %s630, 2
        %s632 = smul.addr %s631, 8
        %s633 = scalar_lea.vmem %s0, %s632
        %p634 = scmp.lt.s32.totalorder %s32, 1
        %s635 = scalar_select %p634, %s32, 1
        %s636 = smul.addr %s635, 2
        %s637 = smul.addr %s636, 8
        %s638 = scalar_lea.vmem %s1, %s637
        %p639 = scmp.lt.s32.totalorder %s32, 1
        %s640 = scalar_select %p639, %s32, 1
        %s641 = smul.addr %s640, 2
        %s642 = smul.addr %s641, 8
        %s643 = scalar_lea.vmem %s2, %s642
        %p644 = scmp.lt.s32.totalorder %s32, 1
        %s645 = scalar_select %p644, %s32, 1
        %s646 = smul.addr %s645, 2
        %s647 = smul.addr %s646, 8
        %s648 = scalar_lea.vmem %s3, %s647
        %p649 = scmp.lt.s32.totalorder %s32, 1
        %s650 = scalar_select %p649, %s32, 1
        %s651 = smul.addr %s650, 2
        %s652 = smul.addr %s651, 8
        %s653 = scalar_lea.vmem %s4, %s652
        %vm655 = vcmask 1048440
        %656 = vst.msk [vmem:[#allocation2] sm:$0xff] %vm655, 0.0
        %vm657 = vcmask 138240
        %658 = vst.msk [vmem:[#allocation2 + $0x18] sm:$0xff] %vm657, 0.0
        %659 = vst.msk [vmem:[#allocation3] sm:$0xff] %vm655, 0.0
        %660 = vst.msk [vmem:[#allocation3 + $0x18] sm:$0xff] %vm657, 0.0
        %661 = vst.msk [vmem:[#allocation4] sm:$0xff] %vm655, 0.0
        %662 = vst.msk [vmem:[#allocation4 + $0x18] sm:$0xff] %vm657, 0.0
        %663 = vst.msk [vmem:[#allocation5] sm:$0xff] %vm655, 0.0
        %664 = vst.msk [vmem:[#allocation5 + $0x18] sm:$0xff] %vm657, 0.0
        %665 = vst.msk [vmem:[#allocation6] sm:$0xff] %vm655, 0.0
        %666 = vst.msk [vmem:[#allocation6 + $0x18] sm:$0xff] %vm657, 0.0
        %v667 = vld [vmem:[%s633] sm:$0xff]
        %v668 = vld [vmem:[%s633 + $0x8] sm:$0xff]
        %v669 = vld [vmem:[%s9] sm:$0xff]
        %671 = vset.pattern.permute.xlu0 0
        %672 = vperm.xlu0 %671, %v669
        %v673 = vpop.permute.xlu0 %672
        %v675 = vmul.f32 %v667, %v673
        %v676 = vmul.f32 %v668, %v673
        %v677 = vld [vmem:[%s10] sm:$0xff]
        %679 = vset.pattern.permute.xlu0 0
        %680 = vperm.xlu0 %679, %v677
        %v681 = vpop.permute.xlu0 %680
        %v683 = vadd.f32 %v675, %v681
        %v684 = vadd.f32 %v676, %v681
        %v685 = vmax.f32 %v683, 0.0
        %v686 = vmax.f32 %v684, 0.0
        %687 = vst [vmem:[#allocation6 + $0x8] sm:$0xff] %v685
        %688 = vst [vmem:[#allocation6 + $0x10] sm:$0xff] %v686
        %v689 = vld [vmem:[#allocation6] sm:$0xff]
        %v690 = vld [vmem:[#allocation6 + $0x8] sm:$0xff]
        %v691 = vld [vmem:[#allocation6 + $0x10] sm:$0xff]
        %v692 = vld [vmem:[%s13] ss:$4 sm:$0x3]
        %v694 = vlaneseq
        %v695 = vshrl.u32 %v694, 7
        %v696 = vsub.s32 0, %v695
        %v697 = vrot.slane %v692, %v696
        %v698 = vlaneseq
        %v699 = vshrl.u32 %v698, 7
        %v700 = vsub.s32 1, %v699
        %v701 = vrot.slane %v692, %v700
        %702 = vrot.lane.b32.xlu0 %v697, 111
        %v703 = vpop.permute.xlu0 %702
        %704 = vrot.lane.b32.xlu0 %v701, 111
        %v705 = vpop.permute.xlu0 %704
        %vm706 = vcmask 908288
        %v707 = vsel %vm706, %v703, %v705
        %v711 = vmul.f32 %v689, %v703
        %v712 = vmul.f32 %v690, %v707
        %v713 = vmul.f32 %v691, %v705
        %v714 = vld [vmem:[%s11] sm:$0xf]
        %v715 = vld [vmem:[%s11 + $0x4] sm:$0xf]
        %v716 = vpack.c.bf16 %v711, %v711
        %v717 = vpack.c.bf16 %v712, %v712
        %v718 = vpack.c.bf16 %v713, %v713
        %s719 = scalar_lea.vmem %s11, 8
        %v720 = vld [vmem:[%s719] sm:$0xf]
        %v721 = vld [vmem:[%s719 + $0x4] sm:$0xf]
        %v722 = vpack.c.bf16 %v689, %v689
        %v723 = vpack.c.bf16 %v690, %v690
        %v724 = vpack.c.bf16 %v691, %v691
        %v727 = vunpack.c.l.b16 %v720
        %v728 = vunpack.c.l.b16 %v721
        %v729 = vpack.c.b16 %v728, %v727
        %733 = vrot.lane.b32.xlu0 %v722, 16
        %v734 = vpop.permute.xlu0 %733
        %735 = vrot.lane.b32.xlu0 %v723, 16
        %v736 = vpop.permute.xlu0 %735
        %737 = vrot.lane.b32.xlu0 %v724, 16
        %v738 = vpop.permute.xlu0 %737
        %vm739 = vcmask 130048
        %v740 = vsel %vm739, %v734, %v736
        %v741 = vsel %vm739, %v736, %v738
        %vm742 = vcmask 64512
        %v744 = vsel %vm742, %v729, 0
        %vm746 = vcmask 1043456
        %v748 = vsel %vm746, %v740, 0
        %v751 = vsel %vm746, %v741, 0
        %753 = vmatprep.subr.bf16.mxu0 %v751
        %754 = vmatpush1.bf16.msra.mxu0 %v748
        %755 = vmatprep.subr.bf16.mxu0 0
        %756 = vmatpush1.bf16.msra.mxu0 0
        %757 = vmatprep.subr.bf16.mxu0 0
        %758 = vmatpush1.bf16.msra.mxu0 0
        %759 = vmatprep.subr.bf16.mxu0 0
        %760 = vmatpush1.bf16.msra.mxu0 0
        %761 = vmatprep.subr.bf16.mxu0 0
        %762 = vmatpush1.bf16.msra.mxu0 0
        %763 = vmatprep.subr.bf16.mxu0 0
        %764 = vmatpush1.bf16.msra.mxu0 0
        %765 = vmatprep.subr.bf16.mxu0 0
        %766 = vmatpush1.bf16.msra.mxu0 0
        %767 = vmatprep.subr.bf16.mxu0 0
        %768 = vmatpush1.bf16.msra.mxu0 0
        %769 = vmatprep.subr.bf16.mxu0 0
        %770 = vmatpush1.bf16.msra.mxu0 0
        %771 = vmatprep.subr.bf16.mxu0 0
        %772 = vmatpush1.bf16.msra.mxu0 0
        %773 = vmatprep.subr.bf16.mxu0 0
        %774 = vmatpush1.bf16.msra.mxu0 0
        %775 = vmatprep.subr.bf16.mxu0 0
        %776 = vmatpush1.bf16.msra.mxu0 0
        %777 = vmatprep.subr.bf16.mxu0 0
        %778 = vmatpush1.bf16.msra.mxu0 0
        %779 = vmatprep.subr.bf16.mxu0 0
        %780 = vmatpush1.bf16.msra.mxu0 0
        %781 = vmatprep.subr.bf16.mxu0 0
        %782 = vmatpush1.bf16.msra.mxu0 0
        %783 = vmatprep.subr.bf16.mxu0 0
        %784 = vmatpush1.bf16.msra.mxu0 0
        %785 = vmatprep.mubr.bf16.mxu0 0
        %786 = vmatmul.mubr.bf16.gmra.mrb[0].mxu0 %v744
        %v787 = vpop.f32.mrb[0].mxu0
        %v788 = vadd.f32 0.0, %v787
        %v789 = vpop.f32.mrb[0].mxu0
        %v790 = vadd.f32 0.0, %v789
        %v791 = vpop.f32.mrb[0].mxu0
        %v792 = vadd.f32 0.0, %v791
        %v793 = vpop.f32.mrb[0].mxu0
        %v794 = vadd.f32 0.0, %v793
        %795 = vdwg.mxu0
        %v798 = vunpack.c.l.b16 %v714
        %v799 = vunpack.c.l.b16 %v715
        %v800 = vpack.c.b16 %v799, %v798
        %804 = vrot.lane.b32.xlu0 %v716, 17
        %v805 = vpop.permute.xlu0 %804
        %806 = vrot.lane.b32.xlu0 %v717, 17
        %v807 = vpop.permute.xlu0 %806
        %808 = vrot.lane.b32.xlu0 %v718, 17
        %v809 = vpop.permute.xlu0 %808
        %vm810 = vcmask 138240
        %v811 = vsel %vm810, %v805, %v807
        %v812 = vsel %vm810, %v807, %v809
        %v814 = vsel %vm742, %v800, 0
        %v817 = vsel %vm746, %v811, 0
        %v820 = vsel %vm746, %v812, 0
        %822 = vmatprep.subr.bf16.mxu0 %v820
        %823 = vmatpush1.bf16.msra.mxu0 %v817
        %824 = vmatprep.subr.bf16.mxu0 0
        %825 = vmatpush1.bf16.msra.mxu0 0
        %826 = vmatprep.subr.bf16.mxu0 0
        %827 = vmatpush1.bf16.msra.mxu0 0
        %828 = vmatprep.subr.bf16.mxu0 0
        %829 = vmatpush1.bf16.msra.mxu0 0
        %830 = vmatprep.subr.bf16.mxu0 0
        %831 = vmatpush1.bf16.msra.mxu0 0
        %832 = vmatprep.subr.bf16.mxu0 0
        %833 = vmatpush1.bf16.msra.mxu0 0
        %834 = vmatprep.subr.bf16.mxu0 0
        %835 = vmatpush1.bf16.msra.mxu0 0
        %836 = vmatprep.subr.bf16.mxu0 0
        %837 = vmatpush1.bf16.msra.mxu0 0
        %838 = vmatprep.subr.bf16.mxu0 0
        %839 = vmatpush1.bf16.msra.mxu0 0
        %840 = vmatprep.subr.bf16.mxu0 0
        %841 = vmatpush1.bf16.msra.mxu0 0
        %842 = vmatprep.subr.bf16.mxu0 0
        %843 = vmatpush1.bf16.msra.mxu0 0
        %844 = vmatprep.subr.bf16.mxu0 0
        %845 = vmatpush1.bf16.msra.mxu0 0
        %846 = vmatprep.subr.bf16.mxu0 0
        %847 = vmatpush1.bf16.msra.mxu0 0
        %848 = vmatprep.subr.bf16.mxu0 0
        %849 = vmatpush1.bf16.msra.mxu0 0
        %850 = vmatprep.subr.bf16.mxu0 0
        %851 = vmatpush1.bf16.msra.mxu0 0
        %852 = vmatprep.subr.bf16.mxu0 0
        %853 = vmatpush1.bf16.msra.mxu0 0
        %854 = vmatprep.mubr.bf16.mxu0 0
        %855 = vmatmul.mubr.bf16.gmra.mrb[0].mxu0 %v814
        %v856 = vpop.f32.mrb[0].mxu0
        %v857 = vadd.f32 %v788, %v856
        %v858 = vpop.f32.mrb[0].mxu0
        %v859 = vadd.f32 %v790, %v858
        %v860 = vpop.f32.mrb[0].mxu0
        %v861 = vadd.f32 %v792, %v860
        %v862 = vpop.f32.mrb[0].mxu0
        %v863 = vadd.f32 %v794, %v862
        %864 = vdwg.mxu0
        %s865 = scalar_lea.vmem %s13, 2
        %v866 = vld [vmem:[%s865] ss:$4 sm:$0x3]
        %v868 = vlaneseq
        %v869 = vshrl.u32 %v868, 7
        %v870 = vsub.s32 0, %v869
        %v871 = vrot.slane %v866, %v870
        %v872 = vlaneseq
        %v873 = vshrl.u32 %v872, 7
        %v874 = vsub.s32 1, %v873
        %v875 = vrot.slane %v866, %v874
        %876 = vrot.lane.b32.xlu0 %v871, 113
        %v877 = vpop.permute.xlu0 %876
        %878 = vrot.lane.b32.xlu0 %v875, 113
        %v879 = vpop.permute.xlu0 %878
        %vm880 = vcmask 924672
        %v881 = vsel %vm880, %v877, %v879
        %v885 = vmul.f32 %v689, %v877
        %v886 = vmul.f32 %v690, %v881
        %v887 = vmul.f32 %v691, %v879
        %s888 = scalar_lea.vmem %s11, 16
        %v889 = vld [vmem:[%s888] sm:$0xf]
        %v890 = vld [vmem:[%s888 + $0x4] sm:$0xf]
        %v891 = vpack.c.bf16 %v885, %v885
        %v892 = vpack.c.bf16 %v886, %v886
        %v893 = vpack.c.bf16 %v887, %v887
        %v896 = vunpack.c.l.b16 %v889
        %v897 = vunpack.c.l.b16 %v890
        %v898 = vpack.c.b16 %v897, %v896
        %902 = vrot.lane.b32.xlu0 %v891, 15
        %v903 = vpop.permute.xlu0 %902
        %904 = vrot.lane.b32.xlu0 %v892, 15
        %v905 = vpop.permute.xlu0 %904
        %906 = vrot.lane.b32.xlu0 %v893, 15
        %v907 = vpop.permute.xlu0 %906
        %vm908 = vcmask 121856
        %v909 = vsel %vm908, %v903, %v905
        %v910 = vsel %vm908, %v905, %v907
        %v912 = vsel %vm742, %v898, 0
        %v915 = vsel %vm746, %v909, 0
        %v918 = vsel %vm746, %v910, 0
        %920 = vmatprep.subr.bf16.mxu0 %v918
        %921 = vmatpush1.bf16.msra.mxu0 %v915
        %922 = vmatprep.subr.bf16.mxu0 0
        %923 = vmatpush1.bf16.msra.mxu0 0
        %924 = vmatprep.subr.bf16.mxu0 0
        %925 = vmatpush1.bf16.msra.mxu0 0
        %926 = vmatprep.subr.bf16.mxu0 0
        %927 = vmatpush1.bf16.msra.mxu0 0
        %928 = vmatprep.subr.bf16.mxu0 0
        %929 = vmatpush1.bf16.msra.mxu0 0
        %930 = vmatprep.subr.bf16.mxu0 0
        %931 = vmatpush1.bf16.msra.mxu0 0
        %932 = vmatprep.subr.bf16.mxu0 0
        %933 = vmatpush1.bf16.msra.mxu0 0
        %934 = vmatprep.subr.bf16.mxu0 0
        %935 = vmatpush1.bf16.msra.mxu0 0
        %936 = vmatprep.subr.bf16.mxu0 0
        %937 = vmatpush1.bf16.msra.mxu0 0
        %938 = vmatprep.subr.bf16.mxu0 0
        %939 = vmatpush1.bf16.msra.mxu0 0
        %940 = vmatprep.subr.bf16.mxu0 0
        %941 = vmatpush1.bf16.msra.mxu0 0
        %942 = vmatprep.subr.bf16.mxu0 0
        %943 = vmatpush1.bf16.msra.mxu0 0
        %944 = vmatprep.subr.bf16.mxu0 0
        %945 = vmatpush1.bf16.msra.mxu0 0
        %946 = vmatprep.subr.bf16.mxu0 0
        %947 = vmatpush1.bf16.msra.mxu0 0
        %948 = vmatprep.subr.bf16.mxu0 0
        %949 = vmatpush1.bf16.msra.mxu0 0
        %950 = vmatprep.subr.bf16.mxu0 0
        %951 = vmatpush1.bf16.msra.mxu0 0
        %952 = vmatprep.mubr.bf16.mxu0 0
        %953 = vmatmul.mubr.bf16.gmra.mrb[0].mxu0 %v912
        %v954 = vpop.f32.mrb[0].mxu0
        %v955 = vadd.f32 0.0, %v954
        %v956 = vpop.f32.mrb[0].mxu0
        %v957 = vadd.f32 0.0, %v956
        %v958 = vpop.f32.mrb[0].mxu0
        %v959 = vadd.f32 0.0, %v958
        %v960 = vpop.f32.mrb[0].mxu0
        %v961 = vadd.f32 0.0, %v960
        %962 = vdwg.mxu0
        %v963 = vadd.f32 %v857, %v955
        %v964 = vadd.f32 %v859, %v957
        %v965 = vadd.f32 %v861, %v959
        %v966 = vadd.f32 %v863, %v961
        %967 = vrot.lane.b32.xlu0 %v697, 127
        %v968 = vpop.permute.xlu0 %967
        %969 = vrot.lane.b32.xlu0 %v701, 127
        %v970 = vpop.permute.xlu0 %969
        %vm971 = vcmask 1039360
        %v972 = vsel %vm971, %v968, %v970
        %v976 = vmul.f32 %v689, %v968
        %v977 = vmul.f32 %v690, %v972
        %v978 = vmul.f32 %v691, %v970
        %s979 = scalar_lea.vmem %s11, 24
        %v980 = vld [vmem:[%s979] sm:$0xf]
        %v981 = vld [vmem:[%s979 + $0x4] sm:$0xf]
        %v982 = vpack.c.bf16 %v976, %v976
        %v983 = vpack.c.bf16 %v977, %v977
        %v984 = vpack.c.bf16 %v978, %v978
        %v987 = vunpack.c.l.b16 %v980
        %v988 = vunpack.c.l.b16 %v981
        %v989 = vpack.c.b16 %v988, %v987
        %993 = vrot.lane.b32.xlu0 %v982, 1
        %v994 = vpop.permute.xlu0 %993
        %995 = vrot.lane.b32.xlu0 %v983, 1
        %v996 = vpop.permute.xlu0 %995
        %997 = vrot.lane.b32.xlu0 %v984, 1
        %v998 = vpop.permute.xlu0 %997
        %vm999 = vcmask 7168
        %v1000 = vsel %vm999, %v994, %v996
        %v1001 = vsel %vm999, %v996, %v998
        %v1003 = vsel %vm742, %v989, 0
        %v1006 = vsel %vm746, %v1000, 0
        %v1009 = vsel %vm746, %v1001, 0
        %1011 = vmatprep.subr.bf16.mxu0 %v1009
        %1012 = vmatpush1.bf16.msra.mxu0 %v1006
        %1013 = vmatprep.subr.bf16.mxu0 0
        %1014 = vmatpush1.bf16.msra.mxu0 0
        %1015 = vmatprep.subr.bf16.mxu0 0
        %1016 = vmatpush1.bf16.msra.mxu0 0
        %1017 = vmatprep.subr.bf16.mxu0 0
        %1018 = vmatpush1.bf16.msra.mxu0 0
        %1019 = vmatprep.subr.bf16.mxu0 0
        %1020 = vmatpush1.bf16.msra.mxu0 0
        %1021 = vmatprep.subr.bf16.mxu0 0
        %1022 = vmatpush1.bf16.msra.mxu0 0
        %1023 = vmatprep.subr.bf16.mxu0 0
        %1024 = vmatpush1.bf16.msra.mxu0 0
        %1025 = vmatprep.subr.bf16.mxu0 0
        %1026 = vmatpush1.bf16.msra.mxu0 0
        %1027 = vmatprep.subr.bf16.mxu0 0
        %1028 = vmatpush1.bf16.msra.mxu0 0
        %1029 = vmatprep.subr.bf16.mxu0 0
        %1030 = vmatpush1.bf16.msra.mxu0 0
        %1031 = vmatprep.subr.bf16.mxu0 0
        %1032 = vmatpush1.bf16.msra.mxu0 0
        %1033 = vmatprep.subr.bf16.mxu0 0
        %1034 = vmatpush1.bf16.msra.mxu0 0
        %1035 = vmatprep.subr.bf16.mxu0 0
        %1036 = vmatpush1.bf16.msra.mxu0 0
        %1037 = vmatprep.subr.bf16.mxu0 0
        %1038 = vmatpush1.bf16.msra.mxu0 0
        %1039 = vmatprep.subr.bf16.mxu0 0
        %1040 = vmatpush1.bf16.msra.mxu0 0
        %1041 = vmatprep.subr.bf16.mxu0 0
        %1042 = vmatpush1.bf16.msra.mxu0 0
        %1043 = vmatprep.mubr.bf16.mxu0 0
        %1044 = vmatmul.mubr.bf16.gmra.mrb[0].mxu0 %v1003
        %v1045 = vpop.f32.mrb[0].mxu0
        %v1046 = vadd.f32 0.0, %v1045
        %v1047 = vpop.f32.mrb[0].mxu0
        %v1048 = vadd.f32 0.0, %v1047
        %v1049 = vpop.f32.mrb[0].mxu0
        %v1050 = vadd.f32 0.0, %v1049
        %v1051 = vpop.f32.mrb[0].mxu0
        %v1052 = vadd.f32 0.0, %v1051
        %1053 = vdwg.mxu0
        %v1054 = vadd.f32 %v963, %v1046
        %v1055 = vadd.f32 %v964, %v1048
        %v1056 = vadd.f32 %v965, %v1050
        %v1057 = vadd.f32 %v966, %v1052
        %s1058 = scalar_lea.vmem %s11, 32
        %v1059 = vld [vmem:[%s1058] sm:$0xf]
        %v1060 = vld [vmem:[%s1058 + $0x4] sm:$0xf]
        %v1063 = vunpack.c.l.b16 %v1059
        %v1064 = vunpack.c.l.b16 %v1060
        %v1065 = vpack.c.b16 %v1064, %v1063
        %v1067 = vsel %vm742, %v1065, 0
        %v1070 = vsel %vm746, %v723, 0
        %v1073 = vsel %vm746, %v724, 0
        %1075 = vmatprep.subr.bf16.mxu0 %v1073
        %1076 = vmatpush1.bf16.msra.mxu0 %v1070
        %1077 = vmatprep.subr.bf16.mxu0 0
        %1078 = vmatpush1.bf16.msra.mxu0 0
        %1079 = vmatprep.subr.bf16.mxu0 0
        %1080 = vmatpush1.bf16.msra.mxu0 0
        %1081 = vmatprep.subr.bf16.mxu0 0
        %1082 = vmatpush1.bf16.msra.mxu0 0
        %1083 = vmatprep.subr.bf16.mxu0 0
        %1084 = vmatpush1.bf16.msra.mxu0 0
        %1085 = vmatprep.subr.bf16.mxu0 0
        %1086 = vmatpush1.bf16.msra.mxu0 0
        %1087 = vmatprep.subr.bf16.mxu0 0
        %1088 = vmatpush1.bf16.msra.mxu0 0
        %1089 = vmatprep.subr.bf16.mxu0 0
        %1090 = vmatpush1.bf16.msra.mxu0 0
        %1091 = vmatprep.subr.bf16.mxu0 0
        %1092 = vmatpush1.bf16.msra.mxu0 0
        %1093 = vmatprep.subr.bf16.mxu0 0
        %1094 = vmatpush1.bf16.msra.mxu0 0
        %1095 = vmatprep.subr.bf16.mxu0 0
        %1096 = vmatpush1.bf16.msra.mxu0 0
        %1097 = vmatprep.subr.bf16.mxu0 0
        %1098 = vmatpush1.bf16.msra.mxu0 0
        %1099 = vmatprep.subr.bf16.mxu0 0
        %1100 = vmatpush1.bf16.msra.mxu0 0
        %1101 = vmatprep.subr.bf16.mxu0 0
        %1102 = vmatpush1.bf16.msra.mxu0 0
        %1103 = vmatprep.subr.bf16.mxu0 0
        %1104 = vmatpush1.bf16.msra.mxu0 0
        %1105 = vmatprep.subr.bf16.mxu0 0
        %1106 = vmatpush1.bf16.msra.mxu0 0
        %1107 = vmatprep.mubr.bf16.mxu0 0
        %1108 = vmatmul.mubr.bf16.gmra.mrb[0].mxu0 %v1067
        %v1109 = vpop.f32.mrb[0].mxu0
        %v1110 = vadd.f32 0.0, %v1109
        %v1111 = vpop.f32.mrb[0].mxu0
        %v1112 = vadd.f32 0.0, %v1111
        %v1113 = vpop.f32.mrb[0].mxu0
        %v1114 = vadd.f32 0.0, %v1113
        %v1115 = vpop.f32.mrb[0].mxu0
        %v1116 = vadd.f32 0.0, %v1115
        %1117 = vdwg.mxu0
        %v1118 = vadd.f32 %v1054, %v1110
        %v1119 = vadd.f32 %v1055, %v1112
        %v1120 = vadd.f32 %v1056, %v1114
        %v1121 = vadd.f32 %v1057, %v1116
        %v1122 = vld [vmem:[#allocation6 + $0x8] sm:$0xff]
        %v1123 = vld [vmem:[#allocation6 + $0x10] sm:$0xff]
        %v1124 = vld [vmem:[#allocation6 + $0x18] sm:$0xff]
        %1125 = vrot.lane.b32.xlu0 %v871, 1
        %v1126 = vpop.permute.xlu0 %1125
        %1127 = vrot.lane.b32.xlu0 %v875, 1
        %v1128 = vpop.permute.xlu0 %1127
        %vm1129 = vcmask 7168
        %v1130 = vsel %vm1129, %v1126, %v1128
        %v1134 = vmul.f32 %v1122, %v1126
        %v1135 = vmul.f32 %v1123, %v1130
        %v1136 = vmul.f32 %v1124, %v1128
        %s1137 = scalar_lea.vmem %s11, 40
        %v1138 = vld [vmem:[%s1137] sm:$0xf]
        %v1139 = vld [vmem:[%s1137 + $0x4] sm:$0xf]
        %v1140 = vpack.c.bf16 %v1134, %v1134
        %v1141 = vpack.c.bf16 %v1135, %v1135
        %v1142 = vpack.c.bf16 %v1136, %v1136
        %v1145 = vunpack.c.l.b16 %v1138
        %v1146 = vunpack.c.l.b16 %v1139
        %v1147 = vpack.c.b16 %v1146, %v1145
        %1151 = vrot.lane.b32.xlu0 %v1140, 127
        %v1152 = vpop.permute.xlu0 %1151
        %1153 = vrot.lane.b32.xlu0 %v1141, 127
        %v1154 = vpop.permute.xlu0 %1153
        %1155 = vrot.lane.b32.xlu0 %v1142, 127
        %v1156 = vpop.permute.xlu0 %1155
        %vm1157 = vcmask 1039360
        %v1158 = vsel %vm1157, %v1152, %v1154
        %v1159 = vsel %vm1157, %v1154, %v1156
        %v1161 = vsel %vm742, %v1147, 0
        %v1164 = vsel %vm746, %v1158, 0
        %v1167 = vsel %vm746, %v1159, 0
        %1169 = vmatprep.subr.bf16.mxu0 %v1167
        %1170 = vmatpush1.bf16.msra.mxu0 %v1164
        %1171 = vmatprep.subr.bf16.mxu0 0
        %1172 = vmatpush1.bf16.msra.mxu0 0
        %1173 = vmatprep.subr.bf16.mxu0 0
        %1174 = vmatpush1.bf16.msra.mxu0 0
        %1175 = vmatprep.subr.bf16.mxu0 0
        %1176 = vmatpush1.bf16.msra.mxu0 0
        %1177 = vmatprep.subr.bf16.mxu0 0
        %1178 = vmatpush1.bf16.msra.mxu0 0
        %1179 = vmatprep.subr.bf16.mxu0 0
        %1180 = vmatpush1.bf16.msra.mxu0 0
        %1181 = vmatprep.subr.bf16.mxu0 0
        %1182 = vmatpush1.bf16.msra.mxu0 0
        %1183 = vmatprep.subr.bf16.mxu0 0
        %1184 = vmatpush1.bf16.msra.mxu0 0
        %1185 = vmatprep.subr.bf16.mxu0 0
        %1186 = vmatpush1.bf16.msra.mxu0 0
        %1187 = vmatprep.subr.bf16.mxu0 0
        %1188 = vmatpush1.bf16.msra.mxu0 0
        %1189 = vmatprep.subr.bf16.mxu0 0
        %1190 = vmatpush1.bf16.msra.mxu0 0
        %1191 = vmatprep.subr.bf16.mxu0 0
        %1192 = vmatpush1.bf16.msra.mxu0 0
        %1193 = vmatprep.subr.bf16.mxu0 0
        %1194 = vmatpush1.bf16.msra.mxu0 0
        %1195 = vmatprep.subr.bf16.mxu0 0
        %1196 = vmatpush1.bf16.msra.mxu0 0
        %1197 = vmatprep.subr.bf16.mxu0 0
        %1198 = vmatpush1.bf16.msra.mxu0 0
        %1199 = vmatprep.subr.bf16.mxu0 0
        %1200 = vmatpush1.bf16.msra.mxu0 0
        %1201 = vmatprep.mubr.bf16.mxu0 0
        %1202 = vmatmul.mubr.bf16.gmra.mrb[0].mxu0 %v1161
        %v1203 = vpop.f32.mrb[0].mxu0
        %v1204 = vadd.f32 0.0, %v1203
        %v1205 = vpop.f32.mrb[0].mxu0
        %v1206 = vadd.f32 0.0, %v1205
        %v1207 = vpop.f32.mrb[0].mxu0
        %v1208 = vadd.f32 0.0, %v1207
        %v1209 = vpop.f32.mrb[0].mxu0
        %v1210 = vadd.f32 0.0, %v1209
        %1211 = vdwg.mxu0
        %v1212 = vadd.f32 %v1118, %v1204
        %v1213 = vadd.f32 %v1119, %v1206
        %v1214 = vadd.f32 %v1120, %v1208
        %v1215 = vadd.f32 %v1121, %v1210
        %1216 = vrot.lane.b32.xlu0 %v697, 15
        %v1217 = vpop.permute.xlu0 %1216
        %1218 = vrot.lane.b32.xlu0 %v701, 15
        %v1219 = vpop.permute.xlu0 %1218
        %vm1220 = vcmask 121856
        %v1221 = vsel %vm1220, %v1217, %v1219
        %v1225 = vmul.f32 %v1122, %v1217
        %v1226 = vmul.f32 %v1123, %v1221
        %v1227 = vmul.f32 %v1124, %v1219
        %s1228 = scalar_lea.vmem %s11, 48
        %v1229 = vld [vmem:[%s1228] sm:$0xf]
        %v1230 = vld [vmem:[%s1228 + $0x4] sm:$0xf]
        %v1231 = vpack.c.bf16 %v1225, %v1225
        %v1232 = vpack.c.bf16 %v1226, %v1226
        %v1233 = vpack.c.bf16 %v1227, %v1227
        %v1236 = vunpack.c.l.b16 %v1229
        %v1237 = vunpack.c.l.b16 %v1230
        %v1238 = vpack.c.b16 %v1237, %v1236
        %1242 = vrot.lane.b32.xlu0 %v1231, 113
        %v1243 = vpop.permute.xlu0 %1242
        %1244 = vrot.lane.b32.xlu0 %v1232, 113
        %v1245 = vpop.permute.xlu0 %1244
        %1246 = vrot.lane.b32.xlu0 %v1233, 113
        %v1247 = vpop.permute.xlu0 %1246
        %vm1248 = vcmask 924672
        %v1249 = vsel %vm1248, %v1243, %v1245
        %v1250 = vsel %vm1248, %v1245, %v1247
        %v1252 = vsel %vm742, %v1238, 0
        %v1255 = vsel %vm746, %v1249, 0
        %v1258 = vsel %vm746, %v1250, 0
        %1260 = vmatprep.subr.bf16.mxu0 %v1258
        %1261 = vmatpush1.bf16.msra.mxu0 %v1255
        %1262 = vmatprep.subr.bf16.mxu0 0
        %1263 = vmatpush1.bf16.msra.mxu0 0
        %1264 = vmatprep.subr.bf16.mxu0 0
        %1265 = vmatpush1.bf16.msra.mxu0 0
        %1266 = vmatprep.subr.bf16.mxu0 0
        %1267 = vmatpush1.bf16.msra.mxu0 0
        %1268 = vmatprep.subr.bf16.mxu0 0
        %1269 = vmatpush1.bf16.msra.mxu0 0
        %1270 = vmatprep.subr.bf16.mxu0 0
        %1271 = vmatpush1.bf16.msra.mxu0 0
        %1272 = vmatprep.subr.bf16.mxu0 0
        %1273 = vmatpush1.bf16.msra.mxu0 0
        %1274 = vmatprep.subr.bf16.mxu0 0
        %1275 = vmatpush1.bf16.msra.mxu0 0
        %1276 = vmatprep.subr.bf16.mxu0 0
        %1277 = vmatpush1.bf16.msra.mxu0 0
        %1278 = vmatprep.subr.bf16.mxu0 0
        %1279 = vmatpush1.bf16.msra.mxu0 0
        %1280 = vmatprep.subr.bf16.mxu0 0
        %1281 = vmatpush1.bf16.msra.mxu0 0
        %1282 = vmatprep.subr.bf16.mxu0 0
        %1283 = vmatpush1.bf16.msra.mxu0 0
        %1284 = vmatprep.subr.bf16.mxu0 0
        %1285 = vmatpush1.bf16.msra.mxu0 0
        %1286 = vmatprep.subr.bf16.mxu0 0
        %1287 = vmatpush1.bf16.msra.mxu0 0
        %1288 = vmatprep.subr.bf16.mxu0 0
        %1289 = vmatpush1.bf16.msra.mxu0 0
        %1290 = vmatprep.subr.bf16.mxu0 0
        %1291 = vmatpush1.bf16.msra.mxu0 0
        %1292 = vmatprep.mubr.bf16.mxu0 0
        %1293 = vmatmul.mubr.bf16.gmra.mrb[0].mxu0 %v1252
        %v1294 = vpop.f32.mrb[0].mxu0
        %v1295 = vadd.f32 0.0, %v1294
        %v1296 = vpop.f32.mrb[0].mxu0
        %v1297 = vadd.f32 0.0, %v1296
        %v1298 = vpop.f32.mrb[0].mxu0
        %v1299 = vadd.f32 0.0, %v1298
        %v1300 = vpop.f32.mrb[0].mxu0
        %v1301 = vadd.f32 0.0, %v1300
        %1302 = vdwg.mxu0
        %v1303 = vadd.f32 %v1212, %v1295
        %v1304 = vadd.f32 %v1213, %v1297
        %v1305 = vadd.f32 %v1214, %v1299
        %v1306 = vadd.f32 %v1215, %v1301
        %s1307 = scalar_lea.vmem %s11, 56
        %v1308 = vld [vmem:[%s1307] sm:$0xf]
        %v1309 = vld [vmem:[%s1307 + $0x4] sm:$0xf]
        %v1310 = vpack.c.bf16 %v1122, %v1122
        %v1311 = vpack.c.bf16 %v1123, %v1123
        %v1312 = vpack.c.bf16 %v1124, %v1124
        %v1315 = vunpack.c.l.b16 %v1308
        %v1316 = vunpack.c.l.b16 %v1309
        %v1317 = vpack.c.b16 %v1316, %v1315
        %1321 = vrot.lane.b32.xlu0 %v1310, 112
        %v1322 = vpop.permute.xlu0 %1321
        %1323 = vrot.lane.b32.xlu0 %v1311, 112
        %v1324 = vpop.permute.xlu0 %1323
        %1325 = vrot.lane.b32.xlu0 %v1312, 112
        %v1326 = vpop.permute.xlu0 %1325
        %vm1327 = vcmask 916480
        %v1328 = vsel %vm1327, %v1322, %v1324
        %v1329 = vsel %vm1327, %v1324, %v1326
        %v1331 = vsel %vm742, %v1317, 0
        %v1334 = vsel %vm746, %v1328, 0
        %v1337 = vsel %vm746, %v1329, 0
        %1339 = vmatprep.subr.bf16.mxu0 %v1337
        %1340 = vmatpush1.bf16.msra.mxu0 %v1334
        %1341 = vmatprep.subr.bf16.mxu0 0
        %1342 = vmatpush1.bf16.msra.mxu0 0
        %1343 = vmatprep.subr.bf16.mxu0 0
        %1344 = vmatpush1.bf16.msra.mxu0 0
        %1345 = vmatprep.subr.bf16.mxu0 0
        %1346 = vmatpush1.bf16.msra.mxu0 0
        %1347 = vmatprep.subr.bf16.mxu0 0
        %1348 = vmatpush1.bf16.msra.mxu0 0
        %1349 = vmatprep.subr.bf16.mxu0 0
        %1350 = vmatpush1.bf16.msra.mxu0 0
        %1351 = vmatprep.subr.bf16.mxu0 0
        %1352 = vmatpush1.bf16.msra.mxu0 0
        %1353 = vmatprep.subr.bf16.mxu0 0
        %1354 = vmatpush1.bf16.msra.mxu0 0
        %1355 = vmatprep.subr.bf16.mxu0 0
        %1356 = vmatpush1.bf16.msra.mxu0 0
        %1357 = vmatprep.subr.bf16.mxu0 0
        %1358 = vmatpush1.bf16.msra.mxu0 0
        %1359 = vmatprep.subr.bf16.mxu0 0
        %1360 = vmatpush1.bf16.msra.mxu0 0
        %1361 = vmatprep.subr.bf16.mxu0 0
        %1362 = vmatpush1.bf16.msra.mxu0 0
        %1363 = vmatprep.subr.bf16.mxu0 0
        %1364 = vmatpush1.bf16.msra.mxu0 0
        %1365 = vmatprep.subr.bf16.mxu0 0
        %1366 = vmatpush1.bf16.msra.mxu0 0
        %1367 = vmatprep.subr.bf16.mxu0 0
        %1368 = vmatpush1.bf16.msra.mxu0 0
        %1369 = vmatprep.subr.bf16.mxu0 0
        %1370 = vmatpush1.bf16.msra.mxu0 0
        %1371 = vmatprep.mubr.bf16.mxu0 0
        %1372 = vmatmul.mubr.bf16.gmra.mrb[0].mxu0 %v1331
        %v1373 = vpop.f32.mrb[0].mxu0
        %v1374 = vadd.f32 0.0, %v1373
        %v1375 = vpop.f32.mrb[0].mxu0
        %v1376 = vadd.f32 0.0, %v1375
        %v1377 = vpop.f32.mrb[0].mxu0
        %v1378 = vadd.f32 0.0, %v1377
        %v1379 = vpop.f32.mrb[0].mxu0
        %v1380 = vadd.f32 0.0, %v1379
        %1381 = vdwg.mxu0
        %v1382 = vadd.f32 %v1303, %v1374
        %v1383 = vadd.f32 %v1304, %v1376
        %v1384 = vadd.f32 %v1305, %v1378
        %v1385 = vadd.f32 %v1306, %v1380
        %1386 = vrot.lane.b32.xlu0 %v871, 17
        %v1387 = vpop.permute.xlu0 %1386
        %1388 = vrot.lane.b32.xlu0 %v875, 17
        %v1389 = vpop.permute.xlu0 %1388
        %v1390 = vsel %vm657, %v1387, %v1389
        %v1394 = vmul.f32 %v1122, %v1387
        %v1395 = vmul.f32 %v1123, %v1390
        %v1396 = vmul.f32 %v1124, %v1389
        %s1397 = scalar_lea.vmem %s11, 64
        %v1398 = vld [vmem:[%s1397] sm:$0xf]
        %v1399 = vld [vmem:[%s1397 + $0x4] sm:$0xf]
        %v1400 = vpack.c.bf16 %v1394, %v1394
        %v1401 = vpack.c.bf16 %v1395, %v1395
        %v1402 = vpack.c.bf16 %v1396, %v1396
        %v1405 = vunpack.c.l.b16 %v1398
        %v1406 = vunpack.c.l.b16 %v1399
        %v1407 = vpack.c.b16 %v1406, %v1405
        %1411 = vrot.lane.b32.xlu0 %v1400, 111
        %v1412 = vpop.permute.xlu0 %1411
        %1413 = vrot.lane.b32.xlu0 %v1401, 111
        %v1414 = vpop.permute.xlu0 %1413
        %1415 = vrot.lane.b32.xlu0 %v1402, 111
        %v1416 = vpop.permute.xlu0 %1415
        %vm1417 = vcmask 908288
        %v1418 = vsel %vm1417, %v1412, %v1414
        %v1419 = vsel %vm1417, %v1414, %v1416
        %v1421 = vsel %vm742, %v1407, 0
        %v1424 = vsel %vm746, %v1418, 0
        %v1427 = vsel %vm746, %v1419, 0
        %1429 = vmatprep.subr.bf16.mxu0 %v1427
        %1430 = vmatpush1.bf16.msra.mxu0 %v1424
        %1431 = vmatprep.subr.bf16.mxu0 0
        %1432 = vmatpush1.bf16.msra.mxu0 0
        %1433 = vmatprep.subr.bf16.mxu0 0
        %1434 = vmatpush1.bf16.msra.mxu0 0
        %1435 = vmatprep.subr.bf16.mxu0 0
        %1436 = vmatpush1.bf16.msra.mxu0 0
        %1437 = vmatprep.subr.bf16.mxu0 0
        %1438 = vmatpush1.bf16.msra.mxu0 0
        %1439 = vmatprep.subr.bf16.mxu0 0
        %1440 = vmatpush1.bf16.msra.mxu0 0
        %1441 = vmatprep.subr.bf16.mxu0 0
        %1442 = vmatpush1.bf16.msra.mxu0 0
        %1443 = vmatprep.subr.bf16.mxu0 0
        %1444 = vmatpush1.bf16.msra.mxu0 0
        %1445 = vmatprep.subr.bf16.mxu0 0
        %1446 = vmatpush1.bf16.msra.mxu0 0
        %1447 = vmatprep.subr.bf16.mxu0 0
        %1448 = vmatpush1.bf16.msra.mxu0 0
        %1449 = vmatprep.subr.bf16.mxu0 0
        %1450 = vmatpush1.bf16.msra.mxu0 0
        %1451 = vmatprep.subr.bf16.mxu0 0
        %1452 = vmatpush1.bf16.msra.mxu0 0
        %1453 = vmatprep.subr.bf16.mxu0 0
        %1454 = vmatpush1.bf16.msra.mxu0 0
        %1455 = vmatprep.subr.bf16.mxu0 0
        %1456 = vmatpush1.bf16.msra.mxu0 0
        %1457 = vmatprep.subr.bf16.mxu0 0
        %1458 = vmatpush1.bf16.msra.mxu0 0
        %1459 = vmatprep.subr.bf16.mxu0 0
        %1460 = vmatpush1.bf16.msra.mxu0 0
        %1461 = vmatprep.mubr.bf16.mxu0 0
        %1462 = vmatmul.mubr.bf16.gmra.mrb[0].mxu0 %v1421
        %v1463 = vpop.f32.mrb[0].mxu0
        %v1464 = vadd.f32 0.0, %v1463
        %v1465 = vpop.f32.mrb[0].mxu0
        %v1466 = vadd.f32 0.0, %v1465
        %v1467 = vpop.f32.mrb[0].mxu0
        %v1468 = vadd.f32 0.0, %v1467
        %v1469 = vpop.f32.mrb[0].mxu0
        %v1470 = vadd.f32 0.0, %v1469
        %1471 = vdwg.mxu0
        %v1472 = vadd.f32 %v1382, %v1464
        %v1473 = vadd.f32 %v1383, %v1466
        %v1474 = vadd.f32 %v1384, %v1468
        %v1475 = vadd.f32 %v1385, %v1470
        %v1476 = vld [vmem:[%s12] sm:$0xff]
        %v1477 = vld [vmem:[%s12 + $0x8] sm:$0xff]
        %1479 = vset.pattern.permute.xlu0 0
        %1480 = vperm.xlu0 %1479, %v1476
        %v1481 = vpop.permute.xlu0 %1480
        %1484 = vset.pattern.permute.xlu0 0
        %1485 = vperm.xlu0 %1484, %v1477
        %v1486 = vpop.permute.xlu0 %1485
        %v1488 = vadd.f32 %v1472, %v1481
        %v1489 = vadd.f32 %v1473, %v1481
        %v1490 = vadd.f32 %v1474, %v1486
        %v1491 = vadd.f32 %v1475, %v1486
        %v1492 = vld [vmem:[%s638] sm:$0xff]
        %v1493 = vld [vmem:[%s638 + $0x8] sm:$0xff]
        %v1494 = vld [vmem:[%s5] sm:$0xff]
        %1496 = vset.pattern.permute.xlu0 0
        %1497 = vperm.xlu0 %1496, %v1494
        %v1498 = vpop.permute.xlu0 %1497
        %v1500 = vmul.f32 %v1492, %v1498
        %v1501 = vmul.f32 %v1493, %v1498
        %v1502 = vld [vmem:[%s6] sm:$0xff]
        %1504 = vset.pattern.permute.xlu0 0
        %1505 = vperm.xlu0 %1504, %v1502
        %v1506 = vpop.permute.xlu0 %1505
        %v1508 = vadd.f32 %v1500, %v1506
        %v1509 = vadd.f32 %v1501, %v1506
        %v1510 = vmax.f32 %v1508, 0.0
        %v1511 = vmax.f32 %v1509, 0.0
        %1512 = vst [vmem:[#allocation2 + $0x8] sm:$0xff] %v1510
        %1513 = vst [vmem:[#allocation2 + $0x10] sm:$0xff] %v1511
        %v1514 = vld [vmem:[%s643] sm:$0xff]
        %v1515 = vld [vmem:[%s643 + $0x8] sm:$0xff]
        %v1516 = vld [vmem:[%s5] sm:$0xff]
        %1518 = vset.pattern.permute.xlu0 0
        %1519 = vperm.xlu0 %1518, %v1516
        %v1520 = vpop.permute.xlu0 %1519
        %v1522 = vmul.f32 %v1514, %v1520
        %v1523 = vmul.f32 %v1515, %v1520
        %v1524 = vld [vmem:[%s6] sm:$0xff]
        %1526 = vset.pattern.permute.xlu0 0
        %1527 = vperm.xlu0 %1526, %v1524
        %v1528 = vpop.permute.xlu0 %1527
        %v1530 = vadd.f32 %v1522, %v1528
        %v1531 = vadd.f32 %v1523, %v1528
        %v1532 = vmax.f32 %v1530, 0.0
        %v1533 = vmax.f32 %v1531, 0.0
        %1534 = vst [vmem:[#allocation3 + $0x8] sm:$0xff] %v1532
        %1535 = vst [vmem:[#allocation3 + $0x10] sm:$0xff] %v1533
        %v1536 = vld [vmem:[%s648] sm:$0xff]
        %v1537 = vld [vmem:[%s648 + $0x8] sm:$0xff]
        %v1538 = vld [vmem:[%s5] sm:$0xff]
        %1540 = vset.pattern.permute.xlu0 0
        %1541 = vperm.xlu0 %1540, %v1538
        %v1542 = vpop.permute.xlu0 %1541
        %v1544 = vmul.f32 %v1536, %v1542
        %v1545 = vmul.f32 %v1537, %v1542
        %v1546 = vld [vmem:[%s6] sm:$0xff]
        %1548 = vset.pattern.permute.xlu0 0
        %1549 = vperm.xlu0 %1548, %v1546
        %v1550 = vpop.permute.xlu0 %1549
        %v1552 = vadd.f32 %v1544, %v1550
        %v1553 = vadd.f32 %v1545, %v1550
        %v1554 = vmax.f32 %v1552, 0.0
        %v1555 = vmax.f32 %v1553, 0.0
        %1556 = vst [vmem:[#allocation4 + $0x8] sm:$0xff] %v1554
        %1557 = vst [vmem:[#allocation4 + $0x10] sm:$0xff] %v1555
        %v1558 = vld [vmem:[%s653] sm:$0xff]
        %v1559 = vld [vmem:[%s653 + $0x8] sm:$0xff]
        %v1560 = vld [vmem:[%s5] sm:$0xff]
        %1562 = vset.pattern.permute.xlu0 0
        %1563 = vperm.xlu0 %1562, %v1560
        %v1564 = vpop.permute.xlu0 %1563
        %v1566 = vmul.f32 %v1558, %v1564
        %v1567 = vmul.f32 %v1559, %v1564
        %v1568 = vld [vmem:[%s6] sm:$0xff]
        %1570 = vset.pattern.permute.xlu0 0
        %1571 = vperm.xlu0 %1570, %v1568
        %v1572 = vpop.permute.xlu0 %1571
        %v1574 = vadd.f32 %v1566, %v1572
        %v1575 = vadd.f32 %v1567, %v1572
        %v1576 = vmax.f32 %v1574, 0.0
        %v1577 = vmax.f32 %v1575, 0.0
        %1578 = vst [vmem:[#allocation5 + $0x8] sm:$0xff] %v1576
        %1579 = vst [vmem:[#allocation5 + $0x10] sm:$0xff] %v1577
        %v1580 = vld [vmem:[#allocation5] sm:$0xff]
        %v1581 = vld [vmem:[#allocation5 + $0x8] sm:$0xff]
        %v1582 = vld [vmem:[#allocation5 + $0x10] sm:$0xff]
        %v1583 = vld [vmem:[%s13] ss:$4 sm:$0x3]
        %v1585 = vlaneseq
        %v1586 = vshrl.u32 %v1585, 7
        %v1587 = vsub.s32 0, %v1586
        %v1588 = vrot.slane %v1583, %v1587
        %v1589 = vlaneseq
        %v1590 = vshrl.u32 %v1589, 7
        %v1591 = vsub.s32 1, %v1590
        %v1592 = vrot.slane %v1583, %v1591
        %1593 = vrot.lane.b32.xlu0 %v1588, 111
        %v1594 = vpop.permute.xlu0 %1593
        %1595 = vrot.lane.b32.xlu0 %v1592, 111
        %v1596 = vpop.permute.xlu0 %1595
        %v1597 = vsel %vm706, %v1594, %v1596
        %v1601 = vmul.f32 %v1580, %v1594
        %v1602 = vmul.f32 %v1581, %v1597
        %v1603 = vmul.f32 %v1582, %v1596
        %v1604 = vld [vmem:[%s7] sm:$0xf]
        %v1605 = vld [vmem:[%s7 + $0x4] sm:$0xf]
        %v1606 = vpack.c.bf16 %v1601, %v1601
        %v1607 = vpack.c.bf16 %v1602, %v1602
        %v1608 = vpack.c.bf16 %v1603, %v1603
        %v1609 = vld [vmem:[#allocation4] sm:$0xff]
        %v1610 = vld [vmem:[#allocation4 + $0x8] sm:$0xff]
        %v1611 = vld [vmem:[#allocation4 + $0x10] sm:$0xff]
        %s1612 = scalar_lea.vmem %s7, 8
        %v1613 = vld [vmem:[%s1612] sm:$0xf]
        %v1614 = vld [vmem:[%s1612 + $0x4] sm:$0xf]
        %v1615 = vpack.c.bf16 %v1609, %v1609
        %v1616 = vpack.c.bf16 %v1610, %v1610
        %v1617 = vpack.c.bf16 %v1611, %v1611
        %v1620 = vunpack.c.l.b16 %v1613
        %v1621 = vunpack.c.l.b16 %v1614
        %v1622 = vpack.c.b16 %v1621, %v1620
        %1626 = vrot.lane.b32.xlu0 %v1615, 16
        %v1627 = vpop.permute.xlu0 %1626
        %1628 = vrot.lane.b32.xlu0 %v1616, 16
        %v1629 = vpop.permute.xlu0 %1628
        %1630 = vrot.lane.b32.xlu0 %v1617, 16
        %v1631 = vpop.permute.xlu0 %1630
        %v1632 = vsel %vm739, %v1627, %v1629
        %v1633 = vsel %vm739, %v1629, %v1631
        %v1635 = vsel %vm742, %v1622, 0
        %v1638 = vsel %vm746, %v1632, 0
        %v1641 = vsel %vm746, %v1633, 0
        %1643 = vmatprep.subr.bf16.mxu0 %v1641
        %1644 = vmatpush1.bf16.msra.mxu0 %v1638
        %1645 = vmatprep.subr.bf16.mxu0 0
        %1646 = vmatpush1.bf16.msra.mxu0 0
        %1647 = vmatprep.subr.bf16.mxu0 0
        %1648 = vmatpush1.bf16.msra.mxu0 0
        %1649 = vmatprep.subr.bf16.mxu0 0
        %1650 = vmatpush1.bf16.msra.mxu0 0
        %1651 = vmatprep.subr.bf16.mxu0 0
        %1652 = vmatpush1.bf16.msra.mxu0 0
        %1653 = vmatprep.subr.bf16.mxu0 0
        %1654 = vmatpush1.bf16.msra.mxu0 0
        %1655 = vmatprep.subr.bf16.mxu0 0
        %1656 = vmatpush1.bf16.msra.mxu0 0
        %1657 = vmatprep.subr.bf16.mxu0 0
        %1658 = vmatpush1.bf16.msra.mxu0 0
        %1659 = vmatprep.subr.bf16.mxu0 0
        %1660 = vmatpush1.bf16.msra.mxu0 0
        %1661 = vmatprep.subr.bf16.mxu0 0
        %1662 = vmatpush1.bf16.msra.mxu0 0
        %1663 = vmatprep.subr.bf16.mxu0 0
        %1664 = vmatpush1.bf16.msra.mxu0 0
        %1665 = vmatprep.subr.bf16.mxu0 0
        %1666 = vmatpush1.bf16.msra.mxu0 0
        %1667 = vmatprep.subr.bf16.mxu0 0
        %1668 = vmatpush1.bf16.msra.mxu0 0
        %1669 = vmatprep.subr.bf16.mxu0 0
        %1670 = vmatpush1.bf16.msra.mxu0 0
        %1671 = vmatprep.subr.bf16.mxu0 0
        %1672 = vmatpush1.bf16.msra.mxu0 0
        %1673 = vmatprep.subr.bf16.mxu0 0
        %1674 = vmatpush1.bf16.msra.mxu0 0
        %1675 = vmatprep.mubr.bf16.mxu0 0
        %1676 = vmatmul.mubr.bf16.gmra.mrb[0].mxu0 %v1635
        %v1677 = vpop.f32.mrb[0].mxu0
        %v1678 = vadd.f32 0.0, %v1677
        %v1679 = vpop.f32.mrb[0].mxu0
        %v1680 = vadd.f32 0.0, %v1679
        %v1681 = vpop.f32.mrb[0].mxu0
        %v1682 = vadd.f32 0.0, %v1681
        %v1683 = vpop.f32.mrb[0].mxu0
        %v1684 = vadd.f32 0.0, %v1683
        %1685 = vdwg.mxu0
        %v1688 = vunpack.c.l.b16 %v1604
        %v1689 = vunpack.c.l.b16 %v1605
        %v1690 = vpack.c.b16 %v1689, %v1688
        %1694 = vrot.lane.b32.xlu0 %v1606, 17
        %v1695 = vpop.permute.xlu0 %1694
        %1696 = vrot.lane.b32.xlu0 %v1607, 17
        %v1697 = vpop.permute.xlu0 %1696
        %1698 = vrot.lane.b32.xlu0 %v1608, 17
        %v1699 = vpop.permute.xlu0 %1698
        %v1700 = vsel %vm810, %v1695, %v1697
        %v1701 = vsel %vm810, %v1697, %v1699
        %v1703 = vsel %vm742, %v1690, 0
        %v1706 = vsel %vm746, %v1700, 0
        %v1709 = vsel %vm746, %v1701, 0
        %1711 = vmatprep.subr.bf16.mxu0 %v1709
        %1712 = vmatpush1.bf16.msra.mxu0 %v1706
        %1713 = vmatprep.subr.bf16.mxu0 0
        %1714 = vmatpush1.bf16.msra.mxu0 0
        %1715 = vmatprep.subr.bf16.mxu0 0
        %1716 = vmatpush1.bf16.msra.mxu0 0
        %1717 = vmatprep.subr.bf16.mxu0 0
        %1718 = vmatpush1.bf16.msra.mxu0 0
        %1719 = vmatprep.subr.bf16.mxu0 0
        %1720 = vmatpush1.bf16.msra.mxu0 0
        %1721 = vmatprep.subr.bf16.mxu0 0
        %1722 = vmatpush1.bf16.msra.mxu0 0
        %1723 = vmatprep.subr.bf16.mxu0 0
        %1724 = vmatpush1.bf16.msra.mxu0 0
        %1725 = vmatprep.subr.bf16.mxu0 0
        %1726 = vmatpush1.bf16.msra.mxu0 0
        %1727 = vmatprep.subr.bf16.mxu0 0
        %1728 = vmatpush1.bf16.msra.mxu0 0
        %1729 = vmatprep.subr.bf16.mxu0 0
        %1730 = vmatpush1.bf16.msra.mxu0 0
        %1731 = vmatprep.subr.bf16.mxu0 0
        %1732 = vmatpush1.bf16.msra.mxu0 0
        %1733 = vmatprep.subr.bf16.mxu0 0
        %1734 = vmatpush1.bf16.msra.mxu0 0
        %1735 = vmatprep.subr.bf16.mxu0 0
        %1736 = vmatpush1.bf16.msra.mxu0 0
        %1737 = vmatprep.subr.bf16.mxu0 0
        %1738 = vmatpush1.bf16.msra.mxu0 0
        %1739 = vmatprep.subr.bf16.mxu0 0
        %1740 = vmatpush1.bf16.msra.mxu0 0
        %1741 = vmatprep.subr.bf16.mxu0 0
        %1742 = vmatpush1.bf16.msra.mxu0 0
        %1743 = vmatprep.mubr.bf16.mxu0 0
        %1744 = vmatmul.mubr.bf16.gmra.mrb[0].mxu0 %v1703
        %v1745 = vpop.f32.mrb[0].mxu0
        %v1746 = vadd.f32 %v1678, %v1745
        %v1747 = vpop.f32.mrb[0].mxu0
        %v1748 = vadd.f32 %v1680, %v1747
        %v1749 = vpop.f32.mrb[0].mxu0
        %v1750 = vadd.f32 %v1682, %v1749
        %v1751 = vpop.f32.mrb[0].mxu0
        %v1752 = vadd.f32 %v1684, %v1751
        %1753 = vdwg.mxu0
        %s1754 = scalar_lea.vmem %s7, 16
        %v1755 = vld [vmem:[%s1754] sm:$0xf]
        %v1756 = vld [vmem:[%s1754 + $0x4] sm:$0xf]
        %v1757 = vpack.c.bf16 %v1580, %v1580
        %v1758 = vpack.c.bf16 %v1581, %v1581
        %v1759 = vpack.c.bf16 %v1582, %v1582
        %v1762 = vunpack.c.l.b16 %v1755
        %v1763 = vunpack.c.l.b16 %v1756
        %v1764 = vpack.c.b16 %v1763, %v1762
        %1768 = vrot.lane.b32.xlu0 %v1757, 16
        %v1769 = vpop.permute.xlu0 %1768
        %1770 = vrot.lane.b32.xlu0 %v1758, 16
        %v1771 = vpop.permute.xlu0 %1770
        %1772 = vrot.lane.b32.xlu0 %v1759, 16
        %v1773 = vpop.permute.xlu0 %1772
        %v1774 = vsel %vm739, %v1769, %v1771
        %v1775 = vsel %vm739, %v1771, %v1773
        %v1777 = vsel %vm742, %v1764, 0
        %v1780 = vsel %vm746, %v1774, 0
        %v1783 = vsel %vm746, %v1775, 0
        %1785 = vmatprep.subr.bf16.mxu0 %v1783
        %1786 = vmatpush1.bf16.msra.mxu0 %v1780
        %1787 = vmatprep.subr.bf16.mxu0 0
        %1788 = vmatpush1.bf16.msra.mxu0 0
        %1789 = vmatprep.subr.bf16.mxu0 0
        %1790 = vmatpush1.bf16.msra.mxu0 0
        %1791 = vmatprep.subr.bf16.mxu0 0
        %1792 = vmatpush1.bf16.msra.mxu0 0
        %1793 = vmatprep.subr.bf16.mxu0 0
        %1794 = vmatpush1.bf16.msra.mxu0 0
        %1795 = vmatprep.subr.bf16.mxu0 0
        %1796 = vmatpush1.bf16.msra.mxu0 0
        %1797 = vmatprep.subr.bf16.mxu0 0
        %1798 = vmatpush1.bf16.msra.mxu0 0
        %1799 = vmatprep.subr.bf16.mxu0 0
        %1800 = vmatpush1.bf16.msra.mxu0 0
        %1801 = vmatprep.subr.bf16.mxu0 0
        %1802 = vmatpush1.bf16.msra.mxu0 0
        %1803 = vmatprep.subr.bf16.mxu0 0
        %1804 = vmatpush1.bf16.msra.mxu0 0
        %1805 = vmatprep.subr.bf16.mxu0 0
        %1806 = vmatpush1.bf16.msra.mxu0 0
        %1807 = vmatprep.subr.bf16.mxu0 0
        %1808 = vmatpush1.bf16.msra.mxu0 0
        %1809 = vmatprep.subr.bf16.mxu0 0
        %1810 = vmatpush1.bf16.msra.mxu0 0
        %1811 = vmatprep.subr.bf16.mxu0 0
        %1812 = vmatpush1.bf16.msra.mxu0 0
        %1813 = vmatprep.subr.bf16.mxu0 0
        %1814 = vmatpush1.bf16.msra.mxu0 0
        %1815 = vmatprep.subr.bf16.mxu0 0
        %1816 = vmatpush1.bf16.msra.mxu0 0
        %1817 = vmatprep.mubr.bf16.mxu0 0
        %1818 = vmatmul.mubr.bf16.gmra.mrb[0].mxu0 %v1777
        %v1819 = vpop.f32.mrb[0].mxu0
        %v1820 = vadd.f32 0.0, %v1819
        %v1821 = vpop.f32.mrb[0].mxu0
        %v1822 = vadd.f32 0.0, %v1821
        %v1823 = vpop.f32.mrb[0].mxu0
        %v1824 = vadd.f32 0.0, %v1823
        %v1825 = vpop.f32.mrb[0].mxu0
        %v1826 = vadd.f32 0.0, %v1825
        %1827 = vdwg.mxu0
        %v1828 = vadd.f32 %v1746, %v1820
        %v1829 = vadd.f32 %v1748, %v1822
        %v1830 = vadd.f32 %v1750, %v1824
        %v1831 = vadd.f32 %v1752, %v1826
        %v1832 = vld [vmem:[#allocation3] sm:$0xff]
        %v1833 = vld [vmem:[#allocation3 + $0x8] sm:$0xff]
        %v1834 = vld [vmem:[#allocation3 + $0x10] sm:$0xff]
        %1835 = vrot.lane.b32.xlu0 %v1588, 127
        %v1836 = vpop.permute.xlu0 %1835
        %1837 = vrot.lane.b32.xlu0 %v1592, 127
        %v1838 = vpop.permute.xlu0 %1837
        %v1839 = vsel %vm971, %v1836, %v1838
        %v1843 = vmul.f32 %v1832, %v1836
        %v1844 = vmul.f32 %v1833, %v1839
        %v1845 = vmul.f32 %v1834, %v1838
        %s1846 = scalar_lea.vmem %s7, 24
        %v1847 = vld [vmem:[%s1846] sm:$0xf]
        %v1848 = vld [vmem:[%s1846 + $0x4] sm:$0xf]
        %v1849 = vpack.c.bf16 %v1843, %v1843
        %v1850 = vpack.c.bf16 %v1844, %v1844
        %v1851 = vpack.c.bf16 %v1845, %v1845
        %v1854 = vunpack.c.l.b16 %v1847
        %v1855 = vunpack.c.l.b16 %v1848
        %v1856 = vpack.c.b16 %v1855, %v1854
        %1860 = vrot.lane.b32.xlu0 %v1849, 1
        %v1861 = vpop.permute.xlu0 %1860
        %1862 = vrot.lane.b32.xlu0 %v1850, 1
        %v1863 = vpop.permute.xlu0 %1862
        %1864 = vrot.lane.b32.xlu0 %v1851, 1
        %v1865 = vpop.permute.xlu0 %1864
        %v1866 = vsel %vm999, %v1861, %v1863
        %v1867 = vsel %vm999, %v1863, %v1865
        %v1869 = vsel %vm742, %v1856, 0
        %v1872 = vsel %vm746, %v1866, 0
        %v1875 = vsel %vm746, %v1867, 0
        %1877 = vmatprep.subr.bf16.mxu0 %v1875
        %1878 = vmatpush1.bf16.msra.mxu0 %v1872
        %1879 = vmatprep.subr.bf16.mxu0 0
        %1880 = vmatpush1.bf16.msra.mxu0 0
        %1881 = vmatprep.subr.bf16.mxu0 0
        %1882 = vmatpush1.bf16.msra.mxu0 0
        %1883 = vmatprep.subr.bf16.mxu0 0
        %1884 = vmatpush1.bf16.msra.mxu0 0
        %1885 = vmatprep.subr.bf16.mxu0 0
        %1886 = vmatpush1.bf16.msra.mxu0 0
        %1887 = vmatprep.subr.bf16.mxu0 0
        %1888 = vmatpush1.bf16.msra.mxu0 0
        %1889 = vmatprep.subr.bf16.mxu0 0
        %1890 = vmatpush1.bf16.msra.mxu0 0
        %1891 = vmatprep.subr.bf16.mxu0 0
        %1892 = vmatpush1.bf16.msra.mxu0 0
        %1893 = vmatprep.subr.bf16.mxu0 0
        %1894 = vmatpush1.bf16.msra.mxu0 0
        %1895 = vmatprep.subr.bf16.mxu0 0
        %1896 = vmatpush1.bf16.msra.mxu0 0
        %1897 = vmatprep.subr.bf16.mxu0 0
        %1898 = vmatpush1.bf16.msra.mxu0 0
        %1899 = vmatprep.subr.bf16.mxu0 0
        %1900 = vmatpush1.bf16.msra.mxu0 0
        %1901 = vmatprep.subr.bf16.mxu0 0
        %1902 = vmatpush1.bf16.msra.mxu0 0
        %1903 = vmatprep.subr.bf16.mxu0 0
        %1904 = vmatpush1.bf16.msra.mxu0 0
        %1905 = vmatprep.subr.bf16.mxu0 0
        %1906 = vmatpush1.bf16.msra.mxu0 0
        %1907 = vmatprep.subr.bf16.mxu0 0
        %1908 = vmatpush1.bf16.msra.mxu0 0
        %1909 = vmatprep.mubr.bf16.mxu0 0
        %1910 = vmatmul.mubr.bf16.gmra.mrb[0].mxu0 %v1869
        %v1911 = vpop.f32.mrb[0].mxu0
        %v1912 = vadd.f32 0.0, %v1911
        %v1913 = vpop.f32.mrb[0].mxu0
        %v1914 = vadd.f32 0.0, %v1913
        %v1915 = vpop.f32.mrb[0].mxu0
        %v1916 = vadd.f32 0.0, %v1915
        %v1917 = vpop.f32.mrb[0].mxu0
        %v1918 = vadd.f32 0.0, %v1917
        %1919 = vdwg.mxu0
        %v1920 = vadd.f32 %v1828, %v1912
        %v1921 = vadd.f32 %v1829, %v1914
        %v1922 = vadd.f32 %v1830, %v1916
        %v1923 = vadd.f32 %v1831, %v1918
        %v1924 = vld [vmem:[#allocation2 + $0x8] sm:$0xff]
        %v1925 = vld [vmem:[#allocation2 + $0x10] sm:$0xff]
        %s1926 = scalar_lea.vmem %s7, 32
        %v1927 = vld [vmem:[%s1926] sm:$0xf]
        %v1928 = vld [vmem:[%s1926 + $0x4] sm:$0xf]
        %v1929 = vpack.c.bf16 %v1924, %v1924
        %v1930 = vpack.c.bf16 %v1925, %v1925
        %v1933 = vunpack.c.l.b16 %v1927
        %v1934 = vunpack.c.l.b16 %v1928
        %v1935 = vpack.c.b16 %v1934, %v1933
        %v1937 = vsel %vm742, %v1935, 0
        %v1940 = vsel %vm746, %v1929, 0
        %v1943 = vsel %vm746, %v1930, 0
        %1945 = vmatprep.subr.bf16.mxu0 %v1943
        %1946 = vmatpush1.bf16.msra.mxu0 %v1940
        %1947 = vmatprep.subr.bf16.mxu0 0
        %1948 = vmatpush1.bf16.msra.mxu0 0
        %1949 = vmatprep.subr.bf16.mxu0 0
        %1950 = vmatpush1.bf16.msra.mxu0 0
        %1951 = vmatprep.subr.bf16.mxu0 0
        %1952 = vmatpush1.bf16.msra.mxu0 0
        %1953 = vmatprep.subr.bf16.mxu0 0
        %1954 = vmatpush1.bf16.msra.mxu0 0
        %1955 = vmatprep.subr.bf16.mxu0 0
        %1956 = vmatpush1.bf16.msra.mxu0 0
        %1957 = vmatprep.subr.bf16.mxu0 0
        %1958 = vmatpush1.bf16.msra.mxu0 0
        %1959 = vmatprep.subr.bf16.mxu0 0
        %1960 = vmatpush1.bf16.msra.mxu0 0
        %1961 = vmatprep.subr.bf16.mxu0 0
        %1962 = vmatpush1.bf16.msra.mxu0 0
        %1963 = vmatprep.subr.bf16.mxu0 0
        %1964 = vmatpush1.bf16.msra.mxu0 0
        %1965 = vmatprep.subr.bf16.mxu0 0
        %1966 = vmatpush1.bf16.msra.mxu0 0
        %1967 = vmatprep.subr.bf16.mxu0 0
        %1968 = vmatpush1.bf16.msra.mxu0 0
        %1969 = vmatprep.subr.bf16.mxu0 0
        %1970 = vmatpush1.bf16.msra.mxu0 0
        %1971 = vmatprep.subr.bf16.mxu0 0
        %1972 = vmatpush1.bf16.msra.mxu0 0
        %1973 = vmatprep.subr.bf16.mxu0 0
        %1974 = vmatpush1.bf16.msra.mxu0 0
        %1975 = vmatprep.subr.bf16.mxu0 0
        %1976 = vmatpush1.bf16.msra.mxu0 0
        %1977 = vmatprep.mubr.bf16.mxu0 0
        %1978 = vmatmul.mubr.bf16.gmra.mrb[0].mxu0 %v1937
        %v1979 = vpop.f32.mrb[0].mxu0
        %v1980 = vadd.f32 0.0, %v1979
        %v1981 = vpop.f32.mrb[0].mxu0
        %v1982 = vadd.f32 0.0, %v1981
        %v1983 = vpop.f32.mrb[0].mxu0
        %v1984 = vadd.f32 0.0, %v1983
        %v1985 = vpop.f32.mrb[0].mxu0
        %v1986 = vadd.f32 0.0, %v1985
        %1987 = vdwg.mxu0
        %v1988 = vadd.f32 %v1920, %v1980
        %v1989 = vadd.f32 %v1921, %v1982
        %v1990 = vadd.f32 %v1922, %v1984
        %v1991 = vadd.f32 %v1923, %v1986
        %s1992 = scalar_lea.vmem %s7, 40
        %v1993 = vld [vmem:[%s1992] sm:$0xf]
        %v1994 = vld [vmem:[%s1992 + $0x4] sm:$0xf]
        %v1995 = vpack.c.bf16 %v1833, %v1833
        %v1996 = vpack.c.bf16 %v1834, %v1834
        %v1999 = vunpack.c.l.b16 %v1993
        %v2000 = vunpack.c.l.b16 %v1994
        %v2001 = vpack.c.b16 %v2000, %v1999
        %v2003 = vsel %vm742, %v2001, 0
        %v2006 = vsel %vm746, %v1995, 0
        %v2009 = vsel %vm746, %v1996, 0
        %2011 = vmatprep.subr.bf16.mxu0 %v2009
        %2012 = vmatpush1.bf16.msra.mxu0 %v2006
        %2013 = vmatprep.subr.bf16.mxu0 0
        %2014 = vmatpush1.bf16.msra.mxu0 0
        %2015 = vmatprep.subr.bf16.mxu0 0
        %2016 = vmatpush1.bf16.msra.mxu0 0
        %2017 = vmatprep.subr.bf16.mxu0 0
        %2018 = vmatpush1.bf16.msra.mxu0 0
        %2019 = vmatprep.subr.bf16.mxu0 0
        %2020 = vmatpush1.bf16.msra.mxu0 0
        %2021 = vmatprep.subr.bf16.mxu0 0
        %2022 = vmatpush1.bf16.msra.mxu0 0
        %2023 = vmatprep.subr.bf16.mxu0 0
        %2024 = vmatpush1.bf16.msra.mxu0 0
        %2025 = vmatprep.subr.bf16.mxu0 0
        %2026 = vmatpush1.bf16.msra.mxu0 0
        %2027 = vmatprep.subr.bf16.mxu0 0
        %2028 = vmatpush1.bf16.msra.mxu0 0
        %2029 = vmatprep.subr.bf16.mxu0 0
        %2030 = vmatpush1.bf16.msra.mxu0 0
        %2031 = vmatprep.subr.bf16.mxu0 0
        %2032 = vmatpush1.bf16.msra.mxu0 0
        %2033 = vmatprep.subr.bf16.mxu0 0
        %2034 = vmatpush1.bf16.msra.mxu0 0
        %2035 = vmatprep.subr.bf16.mxu0 0
        %2036 = vmatpush1.bf16.msra.mxu0 0
        %2037 = vmatprep.subr.bf16.mxu0 0
        %2038 = vmatpush1.bf16.msra.mxu0 0
        %2039 = vmatprep.subr.bf16.mxu0 0
        %2040 = vmatpush1.bf16.msra.mxu0 0
        %2041 = vmatprep.subr.bf16.mxu0 0
        %2042 = vmatpush1.bf16.msra.mxu0 0
        %2043 = vmatprep.mubr.bf16.mxu0 0
        %2044 = vmatmul.mubr.bf16.gmra.mrb[0].mxu0 %v2003
        %v2045 = vpop.f32.mrb[0].mxu0
        %v2046 = vadd.f32 0.0, %v2045
        %v2047 = vpop.f32.mrb[0].mxu0
        %v2048 = vadd.f32 0.0, %v2047
        %v2049 = vpop.f32.mrb[0].mxu0
        %v2050 = vadd.f32 0.0, %v2049
        %v2051 = vpop.f32.mrb[0].mxu0
        %v2052 = vadd.f32 0.0, %v2051
        %2053 = vdwg.mxu0
        %v2054 = vadd.f32 %v1988, %v2046
        %v2055 = vadd.f32 %v1989, %v2048
        %v2056 = vadd.f32 %v1990, %v2050
        %v2057 = vadd.f32 %v1991, %v2052
        %v2058 = vmul.f32 %v1580, %v1836
        %v2059 = vmul.f32 %v1581, %v1839
        %v2060 = vmul.f32 %v1582, %v1838
        %s2061 = scalar_lea.vmem %s7, 48
        %v2062 = vld [vmem:[%s2061] sm:$0xf]
        %v2063 = vld [vmem:[%s2061 + $0x4] sm:$0xf]
        %v2064 = vpack.c.bf16 %v2058, %v2058
        %v2065 = vpack.c.bf16 %v2059, %v2059
        %v2066 = vpack.c.bf16 %v2060, %v2060
        %v2069 = vunpack.c.l.b16 %v2062
        %v2070 = vunpack.c.l.b16 %v2063
        %v2071 = vpack.c.b16 %v2070, %v2069
        %2075 = vrot.lane.b32.xlu0 %v2064, 1
        %v2076 = vpop.permute.xlu0 %2075
        %2077 = vrot.lane.b32.xlu0 %v2065, 1
        %v2078 = vpop.permute.xlu0 %2077
        %2079 = vrot.lane.b32.xlu0 %v2066, 1
        %v2080 = vpop.permute.xlu0 %2079
        %v2081 = vsel %vm999, %v2076, %v2078
        %v2082 = vsel %vm999, %v2078, %v2080
        %v2084 = vsel %vm742, %v2071, 0
        %v2087 = vsel %vm746, %v2081, 0
        %v2090 = vsel %vm746, %v2082, 0
        %2092 = vmatprep.subr.bf16.mxu0 %v2090
        %2093 = vmatpush1.bf16.msra.mxu0 %v2087
        %2094 = vmatprep.subr.bf16.mxu0 0
        %2095 = vmatpush1.bf16.msra.mxu0 0
        %2096 = vmatprep.subr.bf16.mxu0 0
        %2097 = vmatpush1.bf16.msra.mxu0 0
        %2098 = vmatprep.subr.bf16.mxu0 0
        %2099 = vmatpush1.bf16.msra.mxu0 0
        %2100 = vmatprep.subr.bf16.mxu0 0
        %2101 = vmatpush1.bf16.msra.mxu0 0
        %2102 = vmatprep.subr.bf16.mxu0 0
        %2103 = vmatpush1.bf16.msra.mxu0 0
        %2104 = vmatprep.subr.bf16.mxu0 0
        %2105 = vmatpush1.bf16.msra.mxu0 0
        %2106 = vmatprep.subr.bf16.mxu0 0
        %2107 = vmatpush1.bf16.msra.mxu0 0
        %2108 = vmatprep.subr.bf16.mxu0 0
        %2109 = vmatpush1.bf16.msra.mxu0 0
        %2110 = vmatprep.subr.bf16.mxu0 0
        %2111 = vmatpush1.bf16.msra.mxu0 0
        %2112 = vmatprep.subr.bf16.mxu0 0
        %2113 = vmatpush1.bf16.msra.mxu0 0
        %2114 = vmatprep.subr.bf16.mxu0 0
        %2115 = vmatpush1.bf16.msra.mxu0 0
        %2116 = vmatprep.subr.bf16.mxu0 0
        %2117 = vmatpush1.bf16.msra.mxu0 0
        %2118 = vmatprep.subr.bf16.mxu0 0
        %2119 = vmatpush1.bf16.msra.mxu0 0
        %2120 = vmatprep.subr.bf16.mxu0 0
        %2121 = vmatpush1.bf16.msra.mxu0 0
        %2122 = vmatprep.subr.bf16.mxu0 0
        %2123 = vmatpush1.bf16.msra.mxu0 0
        %2124 = vmatprep.mubr.bf16.mxu0 0
        %2125 = vmatmul.mubr.bf16.gmra.mrb[0].mxu0 %v2084
        %v2126 = vpop.f32.mrb[0].mxu0
        %v2127 = vadd.f32 0.0, %v2126
        %v2128 = vpop.f32.mrb[0].mxu0
        %v2129 = vadd.f32 0.0, %v2128
        %v2130 = vpop.f32.mrb[0].mxu0
        %v2131 = vadd.f32 0.0, %v2130
        %v2132 = vpop.f32.mrb[0].mxu0
        %v2133 = vadd.f32 0.0, %v2132
        %2134 = vdwg.mxu0
        %v2135 = vadd.f32 %v2054, %v2127
        %v2136 = vadd.f32 %v2055, %v2129
        %v2137 = vadd.f32 %v2056, %v2131
        %v2138 = vadd.f32 %v2057, %v2133
        %s2139 = scalar_lea.vmem %s7, 56
        %v2140 = vld [vmem:[%s2139] sm:$0xf]
        %v2141 = vld [vmem:[%s2139 + $0x4] sm:$0xf]
        %v2144 = vunpack.c.l.b16 %v2140
        %v2145 = vunpack.c.l.b16 %v2141
        %v2146 = vpack.c.b16 %v2145, %v2144
        %v2148 = vsel %vm742, %v2146, 0
        %v2151 = vsel %vm746, %v1616, 0
        %v2154 = vsel %vm746, %v1617, 0
        %2156 = vmatprep.subr.bf16.mxu0 %v2154
        %2157 = vmatpush1.bf16.msra.mxu0 %v2151
        %2158 = vmatprep.subr.bf16.mxu0 0
        %2159 = vmatpush1.bf16.msra.mxu0 0
        %2160 = vmatprep.subr.bf16.mxu0 0
        %2161 = vmatpush1.bf16.msra.mxu0 0
        %2162 = vmatprep.subr.bf16.mxu0 0
        %2163 = vmatpush1.bf16.msra.mxu0 0
        %2164 = vmatprep.subr.bf16.mxu0 0
        %2165 = vmatpush1.bf16.msra.mxu0 0
        %2166 = vmatprep.subr.bf16.mxu0 0
        %2167 = vmatpush1.bf16.msra.mxu0 0
        %2168 = vmatprep.subr.bf16.mxu0 0
        %2169 = vmatpush1.bf16.msra.mxu0 0
        %2170 = vmatprep.subr.bf16.mxu0 0
        %2171 = vmatpush1.bf16.msra.mxu0 0
        %2172 = vmatprep.subr.bf16.mxu0 0
        %2173 = vmatpush1.bf16.msra.mxu0 0
        %2174 = vmatprep.subr.bf16.mxu0 0
        %2175 = vmatpush1.bf16.msra.mxu0 0
        %2176 = vmatprep.subr.bf16.mxu0 0
        %2177 = vmatpush1.bf16.msra.mxu0 0
        %2178 = vmatprep.subr.bf16.mxu0 0
        %2179 = vmatpush1.bf16.msra.mxu0 0
        %2180 = vmatprep.subr.bf16.mxu0 0
        %2181 = vmatpush1.bf16.msra.mxu0 0
        %2182 = vmatprep.subr.bf16.mxu0 0
        %2183 = vmatpush1.bf16.msra.mxu0 0
        %2184 = vmatprep.subr.bf16.mxu0 0
        %2185 = vmatpush1.bf16.msra.mxu0 0
        %2186 = vmatprep.subr.bf16.mxu0 0
        %2187 = vmatpush1.bf16.msra.mxu0 0
        %2188 = vmatprep.mubr.bf16.mxu0 0
        %2189 = vmatmul.mubr.bf16.gmra.mrb[0].mxu0 %v2148
        %v2190 = vpop.f32.mrb[0].mxu0
        %v2191 = vadd.f32 0.0, %v2190
        %v2192 = vpop.f32.mrb[0].mxu0
        %v2193 = vadd.f32 0.0, %v2192
        %v2194 = vpop.f32.mrb[0].mxu0
        %v2195 = vadd.f32 0.0, %v2194
        %v2196 = vpop.f32.mrb[0].mxu0
        %v2197 = vadd.f32 0.0, %v2196
        %2198 = vdwg.mxu0
        %v2199 = vadd.f32 %v2135, %v2191
        %v2200 = vadd.f32 %v2136, %v2193
        %v2201 = vadd.f32 %v2137, %v2195
        %v2202 = vadd.f32 %v2138, %v2197
        %s2203 = scalar_lea.vmem %s7, 64
        %v2204 = vld [vmem:[%s2203] sm:$0xf]
        %v2205 = vld [vmem:[%s2203 + $0x4] sm:$0xf]
        %v2208 = vunpack.c.l.b16 %v2204
        %v2209 = vunpack.c.l.b16 %v2205
        %v2210 = vpack.c.b16 %v2209, %v2208
        %v2212 = vsel %vm742, %v2210, 0
        %v2215 = vsel %vm746, %v1758, 0
        %v2218 = vsel %vm746, %v1759, 0
        %2220 = vmatprep.subr.bf16.mxu0 %v2218
        %2221 = vmatpush1.bf16.msra.mxu0 %v2215
        %2222 = vmatprep.subr.bf16.mxu0 0
        %2223 = vmatpush1.bf16.msra.mxu0 0
        %2224 = vmatprep.subr.bf16.mxu0 0
        %2225 = vmatpush1.bf16.msra.mxu0 0
        %2226 = vmatprep.subr.bf16.mxu0 0
        %2227 = vmatpush1.bf16.msra.mxu0 0
        %2228 = vmatprep.subr.bf16.mxu0 0
        %2229 = vmatpush1.bf16.msra.mxu0 0
        %2230 = vmatprep.subr.bf16.mxu0 0
        %2231 = vmatpush1.bf16.msra.mxu0 0
        %2232 = vmatprep.subr.bf16.mxu0 0
        %2233 = vmatpush1.bf16.msra.mxu0 0
        %2234 = vmatprep.subr.bf16.mxu0 0
        %2235 = vmatpush1.bf16.msra.mxu0 0
        %2236 = vmatprep.subr.bf16.mxu0 0
        %2237 = vmatpush1.bf16.msra.mxu0 0
        %2238 = vmatprep.subr.bf16.mxu0 0
        %2239 = vmatpush1.bf16.msra.mxu0 0
        %2240 = vmatprep.subr.bf16.mxu0 0
        %2241 = vmatpush1.bf16.msra.mxu0 0
        %2242 = vmatprep.subr.bf16.mxu0 0
        %2243 = vmatpush1.bf16.msra.mxu0 0
        %2244 = vmatprep.subr.bf16.mxu0 0
        %2245 = vmatpush1.bf16.msra.mxu0 0
        %2246 = vmatprep.subr.bf16.mxu0 0
        %2247 = vmatpush1.bf16.msra.mxu0 0
        %2248 = vmatprep.subr.bf16.mxu0 0
        %2249 = vmatpush1.bf16.msra.mxu0 0
        %2250 = vmatprep.subr.bf16.mxu0 0
        %2251 = vmatpush1.bf16.msra.mxu0 0
        %2252 = vmatprep.mubr.bf16.mxu0 0
        %2253 = vmatmul.mubr.bf16.gmra.mrb[0].mxu0 %v2212
        %v2254 = vpop.f32.mrb[0].mxu0
        %v2255 = vadd.f32 0.0, %v2254
        %v2256 = vpop.f32.mrb[0].mxu0
        %v2257 = vadd.f32 0.0, %v2256
        %v2258 = vpop.f32.mrb[0].mxu0
        %v2259 = vadd.f32 0.0, %v2258
        %v2260 = vpop.f32.mrb[0].mxu0
        %v2261 = vadd.f32 0.0, %v2260
        %2262 = vdwg.mxu0
        %v2263 = vadd.f32 %v2199, %v2255
        %v2264 = vadd.f32 %v2200, %v2257
        %v2265 = vadd.f32 %v2201, %v2259
        %v2266 = vadd.f32 %v2202, %v2261
        %2267 = vmatprep.subr.bf16.mxu0 %v1783
        %2268 = vmatpush1.bf16.msra.mxu0 %v1780
        %2269 = vmatprep.subr.bf16.mxu0 0
        %2270 = vmatpush1.bf16.msra.mxu0 0
        %2271 = vmatprep.subr.bf16.mxu0 0
        %2272 = vmatpush1.bf16.msra.mxu0 0
        %2273 = vmatprep.subr.bf16.mxu0 0
        %2274 = vmatpush1.bf16.msra.mxu0 0
        %2275 = vmatprep.subr.bf16.mxu0 0
        %2276 = vmatpush1.bf16.msra.mxu0 0
        %2277 = vmatprep.subr.bf16.mxu0 0
        %2278 = vmatpush1.bf16.msra.mxu0 0
        %2279 = vmatprep.subr.bf16.mxu0 0
        %2280 = vmatpush1.bf16.msra.mxu0 0
        %2281 = vmatprep.subr.bf16.mxu0 0
        %2282 = vmatpush1.bf16.msra.mxu0 0
        %2283 = vmatprep.subr.bf16.mxu0 0
        %2284 = vmatpush1.bf16.msra.mxu0 0
        %2285 = vmatprep.subr.bf16.mxu0 0
        %2286 = vmatpush1.bf16.msra.mxu0 0
        %2287 = vmatprep.subr.bf16.mxu0 0
        %2288 = vmatpush1.bf16.msra.mxu0 0
        %2289 = vmatprep.subr.bf16.mxu0 0
        %2290 = vmatpush1.bf16.msra.mxu0 0
        %2291 = vmatprep.subr.bf16.mxu0 0
        %2292 = vmatpush1.bf16.msra.mxu0 0
        %2293 = vmatprep.subr.bf16.mxu0 0
        %2294 = vmatpush1.bf16.msra.mxu0 0
        %2295 = vmatprep.subr.bf16.mxu0 0
        %2296 = vmatpush1.bf16.msra.mxu0 0
        %2297 = vmatprep.subr.bf16.mxu0 0
        %2298 = vmatpush1.bf16.msra.mxu0 0
        %2299 = vmatprep.mubr.bf16.mxu0 0
        %2300 = vmatmul.mubr.bf16.gmra.mrb[0].mxu0 %v1635
        %v2301 = vpop.f32.mrb[0].mxu0
        %v2302 = vadd.f32 0.0, %v2301
        %v2303 = vpop.f32.mrb[0].mxu0
        %v2304 = vadd.f32 0.0, %v2303
        %v2305 = vpop.f32.mrb[0].mxu0
        %v2306 = vadd.f32 0.0, %v2305
        %v2307 = vpop.f32.mrb[0].mxu0
        %v2308 = vadd.f32 0.0, %v2307
        %2309 = vdwg.mxu0
        %2310 = vmatprep.subr.bf16.mxu0 %v1641
        %2311 = vmatpush1.bf16.msra.mxu0 %v1638
        %2312 = vmatprep.subr.bf16.mxu0 0
        %2313 = vmatpush1.bf16.msra.mxu0 0
        %2314 = vmatprep.subr.bf16.mxu0 0
        %2315 = vmatpush1.bf16.msra.mxu0 0
        %2316 = vmatprep.subr.bf16.mxu0 0
        %2317 = vmatpush1.bf16.msra.mxu0 0
        %2318 = vmatprep.subr.bf16.mxu0 0
        %2319 = vmatpush1.bf16.msra.mxu0 0
        %2320 = vmatprep.subr.bf16.mxu0 0
        %2321 = vmatpush1.bf16.msra.mxu0 0
        %2322 = vmatprep.subr.bf16.mxu0 0
        %2323 = vmatpush1.bf16.msra.mxu0 0
        %2324 = vmatprep.subr.bf16.mxu0 0
        %2325 = vmatpush1.bf16.msra.mxu0 0
        %2326 = vmatprep.subr.bf16.mxu0 0
        %2327 = vmatpush1.bf16.msra.mxu0 0
        %2328 = vmatprep.subr.bf16.mxu0 0
        %2329 = vmatpush1.bf16.msra.mxu0 0
        %2330 = vmatprep.subr.bf16.mxu0 0
        %2331 = vmatpush1.bf16.msra.mxu0 0
        %2332 = vmatprep.subr.bf16.mxu0 0
        %2333 = vmatpush1.bf16.msra.mxu0 0
        %2334 = vmatprep.subr.bf16.mxu0 0
        %2335 = vmatpush1.bf16.msra.mxu0 0
        %2336 = vmatprep.subr.bf16.mxu0 0
        %2337 = vmatpush1.bf16.msra.mxu0 0
        %2338 = vmatprep.subr.bf16.mxu0 0
        %2339 = vmatpush1.bf16.msra.mxu0 0
        %2340 = vmatprep.subr.bf16.mxu0 0
        %2341 = vmatpush1.bf16.msra.mxu0 0
        %2342 = vmatprep.mubr.bf16.mxu0 0
        %2343 = vmatmul.mubr.bf16.gmra.mrb[0].mxu0 %v1703
        %v2344 = vpop.f32.mrb[0].mxu0
        %v2345 = vadd.f32 %v2302, %v2344
        %v2346 = vpop.f32.mrb[0].mxu0
        %v2347 = vadd.f32 %v2304, %v2346
        %v2348 = vpop.f32.mrb[0].mxu0
        %v2349 = vadd.f32 %v2306, %v2348
        %v2350 = vpop.f32.mrb[0].mxu0
        %v2351 = vadd.f32 %v2308, %v2350
        %2352 = vdwg.mxu0
        %v2353 = vld [vmem:[%s865] ss:$4 sm:$0x3]
        %v2355 = vlaneseq
        %v2356 = vshrl.u32 %v2355, 7
        %v2357 = vsub.s32 0, %v2356
        %v2358 = vrot.slane %v2353, %v2357
        %v2359 = vlaneseq
        %v2360 = vshrl.u32 %v2359, 7
        %v2361 = vsub.s32 1, %v2360
        %v2362 = vrot.slane %v2353, %v2361
        %2363 = vrot.lane.b32.xlu0 %v2358, 113
        %v2364 = vpop.permute.xlu0 %2363
        %2365 = vrot.lane.b32.xlu0 %v2362, 113
        %v2366 = vpop.permute.xlu0 %2365
        %v2367 = vsel %vm880, %v2364, %v2366
        %v2371 = vmul.f32 %v1609, %v2364
        %v2372 = vmul.f32 %v1610, %v2367
        %v2373 = vmul.f32 %v1611, %v2366
        %v2374 = vpack.c.bf16 %v2371, %v2371
        %v2375 = vpack.c.bf16 %v2372, %v2372
        %v2376 = vpack.c.bf16 %v2373, %v2373
        %2380 = vrot.lane.b32.xlu0 %v2374, 15
        %v2381 = vpop.permute.xlu0 %2380
        %2382 = vrot.lane.b32.xlu0 %v2375, 15
        %v2383 = vpop.permute.xlu0 %2382
        %2384 = vrot.lane.b32.xlu0 %v2376, 15
        %v2385 = vpop.permute.xlu0 %2384
        %v2386 = vsel %vm908, %v2381, %v2383
        %v2387 = vsel %vm908, %v2383, %v2385
        %v2389 = vsel %vm746, %v2386, 0
        %v2392 = vsel %vm746, %v2387, 0
        %2394 = vmatprep.subr.bf16.mxu0 %v2392
        %2395 = vmatpush1.bf16.msra.mxu0 %v2389
        %2396 = vmatprep.subr.bf16.mxu0 0
        %2397 = vmatpush1.bf16.msra.mxu0 0
        %2398 = vmatprep.subr.bf16.mxu0 0
        %2399 = vmatpush1.bf16.msra.mxu0 0
        %2400 = vmatprep.subr.bf16.mxu0 0
        %2401 = vmatpush1.bf16.msra.mxu0 0
        %2402 = vmatprep.subr.bf16.mxu0 0
        %2403 = vmatpush1.bf16.msra.mxu0 0
        %2404 = vmatprep.subr.bf16.mxu0 0
        %2405 = vmatpush1.bf16.msra.mxu0 0
        %2406 = vmatprep.subr.bf16.mxu0 0
        %2407 = vmatpush1.bf16.msra.mxu0 0
        %2408 = vmatprep.subr.bf16.mxu0 0
        %2409 = vmatpush1.bf16.msra.mxu0 0
        %2410 = vmatprep.subr.bf16.mxu0 0
        %2411 = vmatpush1.bf16.msra.mxu0 0
        %2412 = vmatprep.subr.bf16.mxu0 0
        %2413 = vmatpush1.bf16.msra.mxu0 0
        %2414 = vmatprep.subr.bf16.mxu0 0
        %2415 = vmatpush1.bf16.msra.mxu0 0
        %2416 = vmatprep.subr.bf16.mxu0 0
        %2417 = vmatpush1.bf16.msra.mxu0 0
        %2418 = vmatprep.subr.bf16.mxu0 0
        %2419 = vmatpush1.bf16.msra.mxu0 0
        %2420 = vmatprep.subr.bf16.mxu0 0
        %2421 = vmatpush1.bf16.msra.mxu0 0
        %2422 = vmatprep.subr.bf16.mxu0 0
        %2423 = vmatpush1.bf16.msra.mxu0 0
        %2424 = vmatprep.subr.bf16.mxu0 0
        %2425 = vmatpush1.bf16.msra.mxu0 0
        %2426 = vmatprep.mubr.bf16.mxu0 0
        %2427 = vmatmul.mubr.bf16.gmra.mrb[0].mxu0 %v1777
        %v2428 = vpop.f32.mrb[0].mxu0
        %v2429 = vadd.f32 0.0, %v2428
        %v2430 = vpop.f32.mrb[0].mxu0
        %v2431 = vadd.f32 0.0, %v2430
        %v2432 = vpop.f32.mrb[0].mxu0
        %v2433 = vadd.f32 0.0, %v2432
        %v2434 = vpop.f32.mrb[0].mxu0
        %v2435 = vadd.f32 0.0, %v2434
        %2436 = vdwg.mxu0
        %v2437 = vadd.f32 %v2345, %v2429
        %v2438 = vadd.f32 %v2347, %v2431
        %v2439 = vadd.f32 %v2349, %v2433
        %v2440 = vadd.f32 %v2351, %v2435
        %2441 = vmatprep.subr.bf16.mxu0 %v1943
        %2442 = vmatpush1.bf16.msra.mxu0 %v1940
        %2443 = vmatprep.subr.bf16.mxu0 0
        %2444 = vmatpush1.bf16.msra.mxu0 0
        %2445 = vmatprep.subr.bf16.mxu0 0
        %2446 = vmatpush1.bf16.msra.mxu0 0
        %2447 = vmatprep.subr.bf16.mxu0 0
        %2448 = vmatpush1.bf16.msra.mxu0 0
        %2449 = vmatprep.subr.bf16.mxu0 0
        %2450 = vmatpush1.bf16.msra.mxu0 0
        %2451 = vmatprep.subr.bf16.mxu0 0
        %2452 = vmatpush1.bf16.msra.mxu0 0
        %2453 = vmatprep.subr.bf16.mxu0 0
        %2454 = vmatpush1.bf16.msra.mxu0 0
        %2455 = vmatprep.subr.bf16.mxu0 0
        %2456 = vmatpush1.bf16.msra.mxu0 0
        %2457 = vmatprep.subr.bf16.mxu0 0
        %2458 = vmatpush1.bf16.msra.mxu0 0
        %2459 = vmatprep.subr.bf16.mxu0 0
        %2460 = vmatpush1.bf16.msra.mxu0 0
        %2461 = vmatprep.subr.bf16.mxu0 0
        %2462 = vmatpush1.bf16.msra.mxu0 0
        %2463 = vmatprep.subr.bf16.mxu0 0
        %2464 = vmatpush1.bf16.msra.mxu0 0
        %2465 = vmatprep.subr.bf16.mxu0 0
        %2466 = vmatpush1.bf16.msra.mxu0 0
        %2467 = vmatprep.subr.bf16.mxu0 0
        %2468 = vmatpush1.bf16.msra.mxu0 0
        %2469 = vmatprep.subr.bf16.mxu0 0
        %2470 = vmatpush1.bf16.msra.mxu0 0
        %2471 = vmatprep.subr.bf16.mxu0 0
        %2472 = vmatpush1.bf16.msra.mxu0 0
        %2473 = vmatprep.mubr.bf16.mxu0 0
        %2474 = vmatmul.mubr.bf16.gmra.mrb[0].mxu0 %v1869
        %v2475 = vpop.f32.mrb[0].mxu0
        %v2476 = vadd.f32 0.0, %v2475
        %v2477 = vpop.f32.mrb[0].mxu0
        %v2478 = vadd.f32 0.0, %v2477
        %v2479 = vpop.f32.mrb[0].mxu0
        %v2480 = vadd.f32 0.0, %v2479
        %v2481 = vpop.f32.mrb[0].mxu0
        %v2482 = vadd.f32 0.0, %v2481
        %2483 = vdwg.mxu0
        %v2484 = vadd.f32 %v2437, %v2476
        %v2485 = vadd.f32 %v2438, %v2478
        %v2486 = vadd.f32 %v2439, %v2480
        %v2487 = vadd.f32 %v2440, %v2482
        %2488 = vmatprep.subr.bf16.mxu0 %v2009
        %2489 = vmatpush1.bf16.msra.mxu0 %v2006
        %2490 = vmatprep.subr.bf16.mxu0 0
        %2491 = vmatpush1.bf16.msra.mxu0 0
        %2492 = vmatprep.subr.bf16.mxu0 0
        %2493 = vmatpush1.bf16.msra.mxu0 0
        %2494 = vmatprep.subr.bf16.mxu0 0
        %2495 = vmatpush1.bf16.msra.mxu0 0
        %2496 = vmatprep.subr.bf16.mxu0 0
        %2497 = vmatpush1.bf16.msra.mxu0 0
        %2498 = vmatprep.subr.bf16.mxu0 0
        %2499 = vmatpush1.bf16.msra.mxu0 0
        %2500 = vmatprep.subr.bf16.mxu0 0
        %2501 = vmatpush1.bf16.msra.mxu0 0
        %2502 = vmatprep.subr.bf16.mxu0 0
        %2503 = vmatpush1.bf16.msra.mxu0 0
        %2504 = vmatprep.subr.bf16.mxu0 0
        %2505 = vmatpush1.bf16.msra.mxu0 0
        %2506 = vmatprep.subr.bf16.mxu0 0
        %2507 = vmatpush1.bf16.msra.mxu0 0
        %2508 = vmatprep.subr.bf16.mxu0 0
        %2509 = vmatpush1.bf16.msra.mxu0 0
        %2510 = vmatprep.subr.bf16.mxu0 0
        %2511 = vmatpush1.bf16.msra.mxu0 0
        %2512 = vmatprep.subr.bf16.mxu0 0
        %2513 = vmatpush1.bf16.msra.mxu0 0
        %2514 = vmatprep.subr.bf16.mxu0 0
        %2515 = vmatpush1.bf16.msra.mxu0 0
        %2516 = vmatprep.subr.bf16.mxu0 0
        %2517 = vmatpush1.bf16.msra.mxu0 0
        %2518 = vmatprep.subr.bf16.mxu0 0
        %2519 = vmatpush1.bf16.msra.mxu0 0
        %2520 = vmatprep.mubr.bf16.mxu0 0
        %2521 = vmatmul.mubr.bf16.gmra.mrb[0].mxu0 %v1937
        %v2522 = vpop.f32.mrb[0].mxu0
        %v2523 = vadd.f32 0.0, %v2522
        %v2524 = vpop.f32.mrb[0].mxu0
        %v2525 = vadd.f32 0.0, %v2524
        %v2526 = vpop.f32.mrb[0].mxu0
        %v2527 = vadd.f32 0.0, %v2526
        %v2528 = vpop.f32.mrb[0].mxu0
        %v2529 = vadd.f32 0.0, %v2528
        %2530 = vdwg.mxu0
        %v2531 = vadd.f32 %v2484, %v2523
        %v2532 = vadd.f32 %v2485, %v2525
        %v2533 = vadd.f32 %v2486, %v2527
        %v2534 = vadd.f32 %v2487, %v2529
        %v2535 = vld [vmem:[#allocation2 + $0x8] sm:$0xff]
        %v2536 = vld [vmem:[#allocation2 + $0x10] sm:$0xff]
        %v2537 = vld [vmem:[#allocation2 + $0x18] sm:$0xff]
        %2538 = vrot.lane.b32.xlu0 %v2358, 1
        %v2539 = vpop.permute.xlu0 %2538
        %2540 = vrot.lane.b32.xlu0 %v2362, 1
        %v2541 = vpop.permute.xlu0 %2540
        %v2542 = vsel %vm1129, %v2539, %v2541
        %v2546 = vmul.f32 %v2535, %v2539
        %v2547 = vmul.f32 %v2536, %v2542
        %v2548 = vmul.f32 %v2537, %v2541
        %v2549 = vpack.c.bf16 %v2546, %v2546
        %v2550 = vpack.c.bf16 %v2547, %v2547
        %v2551 = vpack.c.bf16 %v2548, %v2548
        %2555 = vrot.lane.b32.xlu0 %v2549, 127
        %v2556 = vpop.permute.xlu0 %2555
        %2557 = vrot.lane.b32.xlu0 %v2550, 127
        %v2558 = vpop.permute.xlu0 %2557
        %2559 = vrot.lane.b32.xlu0 %v2551, 127
        %v2560 = vpop.permute.xlu0 %2559
        %v2561 = vsel %vm1157, %v2556, %v2558
        %v2562 = vsel %vm1157, %v2558, %v2560
        %v2564 = vsel %vm746, %v2561, 0
        %v2567 = vsel %vm746, %v2562, 0
        %2569 = vmatprep.subr.bf16.mxu0 %v2567
        %2570 = vmatpush1.bf16.msra.mxu0 %v2564
        %2571 = vmatprep.subr.bf16.mxu0 0
        %2572 = vmatpush1.bf16.msra.mxu0 0
        %2573 = vmatprep.subr.bf16.mxu0 0
        %2574 = vmatpush1.bf16.msra.mxu0 0
        %2575 = vmatprep.subr.bf16.mxu0 0
        %2576 = vmatpush1.bf16.msra.mxu0 0
        %2577 = vmatprep.subr.bf16.mxu0 0
        %2578 = vmatpush1.bf16.msra.mxu0 0
        %2579 = vmatprep.subr.bf16.mxu0 0
        %2580 = vmatpush1.bf16.msra.mxu0 0
        %2581 = vmatprep.subr.bf16.mxu0 0
        %2582 = vmatpush1.bf16.msra.mxu0 0
        %2583 = vmatprep.subr.bf16.mxu0 0
        %2584 = vmatpush1.bf16.msra.mxu0 0
        %2585 = vmatprep.subr.bf16.mxu0 0
        %2586 = vmatpush1.bf16.msra.mxu0 0
        %2587 = vmatprep.subr.bf16.mxu0 0
        %2588 = vmatpush1.bf16.msra.mxu0 0
        %2589 = vmatprep.subr.bf16.mxu0 0
        %2590 = vmatpush1.bf16.msra.mxu0 0
        %2591 = vmatprep.subr.bf16.mxu0 0
        %2592 = vmatpush1.bf16.msra.mxu0 0
        %2593 = vmatprep.subr.bf16.mxu0 0
        %2594 = vmatpush1.bf16.msra.mxu0 0
        %2595 = vmatprep.subr.bf16.mxu0 0
        %2596 = vmatpush1.bf16.msra.mxu0 0
        %2597 = vmatprep.subr.bf16.mxu0 0
        %2598 = vmatpush1.bf16.msra.mxu0 0
        %2599 = vmatprep.subr.bf16.mxu0 0
        %2600 = vmatpush1.bf16.msra.mxu0 0
        %2601 = vmatprep.mubr.bf16.mxu0 0
        %2602 = vmatmul.mubr.bf16.gmra.mrb[0].mxu0 %v2003
        %v2603 = vpop.f32.mrb[0].mxu0
        %v2604 = vadd.f32 0.0, %v2603
        %v2605 = vpop.f32.mrb[0].mxu0
        %v2606 = vadd.f32 0.0, %v2605
        %v2607 = vpop.f32.mrb[0].mxu0
        %v2608 = vadd.f32 0.0, %v2607
        %v2609 = vpop.f32.mrb[0].mxu0
        %v2610 = vadd.f32 0.0, %v2609
        %2611 = vdwg.mxu0
        %v2612 = vadd.f32 %v2531, %v2604
        %v2613 = vadd.f32 %v2532, %v2606
        %v2614 = vadd.f32 %v2533, %v2608
        %v2615 = vadd.f32 %v2534, %v2610
        %2616 = vmatprep.subr.bf16.mxu0 %v2154
        %2617 = vmatpush1.bf16.msra.mxu0 %v2151
        %2618 = vmatprep.subr.bf16.mxu0 0
        %2619 = vmatpush1.bf16.msra.mxu0 0
        %2620 = vmatprep.subr.bf16.mxu0 0
        %2621 = vmatpush1.bf16.msra.mxu0 0
        %2622 = vmatprep.subr.bf16.mxu0 0
        %2623 = vmatpush1.bf16.msra.mxu0 0
        %2624 = vmatprep.subr.bf16.mxu0 0
        %2625 = vmatpush1.bf16.msra.mxu0 0
        %2626 = vmatprep.subr.bf16.mxu0 0
        %2627 = vmatpush1.bf16.msra.mxu0 0
        %2628 = vmatprep.subr.bf16.mxu0 0
        %2629 = vmatpush1.bf16.msra.mxu0 0
        %2630 = vmatprep.subr.bf16.mxu0 0
        %2631 = vmatpush1.bf16.msra.mxu0 0
        %2632 = vmatprep.subr.bf16.mxu0 0
        %2633 = vmatpush1.bf16.msra.mxu0 0
        %2634 = vmatprep.subr.bf16.mxu0 0
        %2635 = vmatpush1.bf16.msra.mxu0 0
        %2636 = vmatprep.subr.bf16.mxu0 0
        %2637 = vmatpush1.bf16.msra.mxu0 0
        %2638 = vmatprep.subr.bf16.mxu0 0
        %2639 = vmatpush1.bf16.msra.mxu0 0
        %2640 = vmatprep.subr.bf16.mxu0 0
        %2641 = vmatpush1.bf16.msra.mxu0 0
        %2642 = vmatprep.subr.bf16.mxu0 0
        %2643 = vmatpush1.bf16.msra.mxu0 0
        %2644 = vmatprep.subr.bf16.mxu0 0
        %2645 = vmatpush1.bf16.msra.mxu0 0
        %2646 = vmatprep.subr.bf16.mxu0 0
        %2647 = vmatpush1.bf16.msra.mxu0 0
        %2648 = vmatprep.mubr.bf16.mxu0 0
        %2649 = vmatmul.mubr.bf16.gmra.mrb[0].mxu0 %v2084
        %v2650 = vpop.f32.mrb[0].mxu0
        %v2651 = vadd.f32 0.0, %v2650
        %v2652 = vpop.f32.mrb[0].mxu0
        %v2653 = vadd.f32 0.0, %v2652
        %v2654 = vpop.f32.mrb[0].mxu0
        %v2655 = vadd.f32 0.0, %v2654
        %v2656 = vpop.f32.mrb[0].mxu0
        %v2657 = vadd.f32 0.0, %v2656
        %2658 = vdwg.mxu0
        %v2659 = vadd.f32 %v2612, %v2651
        %v2660 = vadd.f32 %v2613, %v2653
        %v2661 = vadd.f32 %v2614, %v2655
        %v2662 = vadd.f32 %v2615, %v2657
        %2663 = vmatprep.subr.bf16.mxu0 %v2218
        %2664 = vmatpush1.bf16.msra.mxu0 %v2215
        %2665 = vmatprep.subr.bf16.mxu0 0
        %2666 = vmatpush1.bf16.msra.mxu0 0
        %2667 = vmatprep.subr.bf16.mxu0 0
        %2668 = vmatpush1.bf16.msra.mxu0 0
        %2669 = vmatprep.subr.bf16.mxu0 0
        %2670 = vmatpush1.bf16.msra.mxu0 0
        %2671 = vmatprep.subr.bf16.mxu0 0
        %2672 = vmatpush1.bf16.msra.mxu0 0
        %2673 = vmatprep.subr.bf16.mxu0 0
        %2674 = vmatpush1.bf16.msra.mxu0 0
        %2675 = vmatprep.subr.bf16.mxu0 0
        %2676 = vmatpush1.bf16.msra.mxu0 0
        %2677 = vmatprep.subr.bf16.mxu0 0
        %2678 = vmatpush1.bf16.msra.mxu0 0
        %2679 = vmatprep.subr.bf16.mxu0 0
        %2680 = vmatpush1.bf16.msra.mxu0 0
        %2681 = vmatprep.subr.bf16.mxu0 0
        %2682 = vmatpush1.bf16.msra.mxu0 0
        %2683 = vmatprep.subr.bf16.mxu0 0
        %2684 = vmatpush1.bf16.msra.mxu0 0
        %2685 = vmatprep.subr.bf16.mxu0 0
        %2686 = vmatpush1.bf16.msra.mxu0 0
        %2687 = vmatprep.subr.bf16.mxu0 0
        %2688 = vmatpush1.bf16.msra.mxu0 0
        %2689 = vmatprep.subr.bf16.mxu0 0
        %2690 = vmatpush1.bf16.msra.mxu0 0
        %2691 = vmatprep.subr.bf16.mxu0 0
        %2692 = vmatpush1.bf16.msra.mxu0 0
        %2693 = vmatprep.subr.bf16.mxu0 0
        %2694 = vmatpush1.bf16.msra.mxu0 0
        %2695 = vmatprep.mubr.bf16.mxu0 0
        %2696 = vmatmul.mubr.bf16.gmra.mrb[0].mxu0 %v2148
        %v2697 = vpop.f32.mrb[0].mxu0
        %v2698 = vadd.f32 0.0, %v2697
        %v2699 = vpop.f32.mrb[0].mxu0
        %v2700 = vadd.f32 0.0, %v2699
        %v2701 = vpop.f32.mrb[0].mxu0
        %v2702 = vadd.f32 0.0, %v2701
        %v2703 = vpop.f32.mrb[0].mxu0
        %v2704 = vadd.f32 0.0, %v2703
        %2705 = vdwg.mxu0
        %v2706 = vadd.f32 %v2659, %v2698
        %v2707 = vadd.f32 %v2660, %v2700
        %v2708 = vadd.f32 %v2661, %v2702
        %v2709 = vadd.f32 %v2662, %v2704
        %v2710 = vld [vmem:[#allocation4 + $0x8] sm:$0xff]
        %v2711 = vld [vmem:[#allocation4 + $0x10] sm:$0xff]
        %v2712 = vld [vmem:[#allocation4 + $0x18] sm:$0xff]
        %v2713 = vmul.f32 %v2710, %v2539
        %v2714 = vmul.f32 %v2711, %v2542
        %v2715 = vmul.f32 %v2712, %v2541
        %v2716 = vpack.c.bf16 %v2713, %v2713
        %v2717 = vpack.c.bf16 %v2714, %v2714
        %v2718 = vpack.c.bf16 %v2715, %v2715
        %2722 = vrot.lane.b32.xlu0 %v2716, 127
        %v2723 = vpop.permute.xlu0 %2722
        %2724 = vrot.lane.b32.xlu0 %v2717, 127
        %v2725 = vpop.permute.xlu0 %2724
        %2726 = vrot.lane.b32.xlu0 %v2718, 127
        %v2727 = vpop.permute.xlu0 %2726
        %v2728 = vsel %vm1157, %v2723, %v2725
        %v2729 = vsel %vm1157, %v2725, %v2727
        %v2731 = vsel %vm746, %v2728, 0
        %v2734 = vsel %vm746, %v2729, 0
        %2736 = vmatprep.subr.bf16.mxu0 %v2734
        %2737 = vmatpush1.bf16.msra.mxu0 %v2731
        %2738 = vmatprep.subr.bf16.mxu0 0
        %2739 = vmatpush1.bf16.msra.mxu0 0
        %2740 = vmatprep.subr.bf16.mxu0 0
        %2741 = vmatpush1.bf16.msra.mxu0 0
        %2742 = vmatprep.subr.bf16.mxu0 0
        %2743 = vmatpush1.bf16.msra.mxu0 0
        %2744 = vmatprep.subr.bf16.mxu0 0
        %2745 = vmatpush1.bf16.msra.mxu0 0
        %2746 = vmatprep.subr.bf16.mxu0 0
        %2747 = vmatpush1.bf16.msra.mxu0 0
        %2748 = vmatprep.subr.bf16.mxu0 0
        %2749 = vmatpush1.bf16.msra.mxu0 0
        %2750 = vmatprep.subr.bf16.mxu0 0
        %2751 = vmatpush1.bf16.msra.mxu0 0
        %2752 = vmatprep.subr.bf16.mxu0 0
        %2753 = vmatpush1.bf16.msra.mxu0 0
        %2754 = vmatprep.subr.bf16.mxu0 0
        %2755 = vmatpush1.bf16.msra.mxu0 0
        %2756 = vmatprep.subr.bf16.mxu0 0
        %2757 = vmatpush1.bf16.msra.mxu0 0
        %2758 = vmatprep.subr.bf16.mxu0 0
        %2759 = vmatpush1.bf16.msra.mxu0 0
        %2760 = vmatprep.subr.bf16.mxu0 0
        %2761 = vmatpush1.bf16.msra.mxu0 0
        %2762 = vmatprep.subr.bf16.mxu0 0
        %2763 = vmatpush1.bf16.msra.mxu0 0
        %2764 = vmatprep.subr.bf16.mxu0 0
        %2765 = vmatpush1.bf16.msra.mxu0 0
        %2766 = vmatprep.subr.bf16.mxu0 0
        %2767 = vmatpush1.bf16.msra.mxu0 0
        %2768 = vmatprep.mubr.bf16.mxu0 0
        %2769 = vmatmul.mubr.bf16.gmra.mrb[0].mxu0 %v2212
        %v2770 = vpop.f32.mrb[0].mxu0
        %v2771 = vadd.f32 0.0, %v2770
        %v2772 = vpop.f32.mrb[0].mxu0
        %v2773 = vadd.f32 0.0, %v2772
        %v2774 = vpop.f32.mrb[0].mxu0
        %v2775 = vadd.f32 0.0, %v2774
        %v2776 = vpop.f32.mrb[0].mxu0
        %v2777 = vadd.f32 0.0, %v2776
        %2778 = vdwg.mxu0
        %v2779 = vadd.f32 %v2706, %v2771
        %v2780 = vadd.f32 %v2707, %v2773
        %v2781 = vadd.f32 %v2708, %v2775
        %v2782 = vadd.f32 %v2709, %v2777
        %v2783 = vmax.f32 %v2263, %v2779
        %v2784 = vmax.f32 %v2264, %v2780
        %v2785 = vmax.f32 %v2265, %v2781
        %v2786 = vmax.f32 %v2266, %v2782
        %2787 = vmatprep.subr.bf16.mxu0 %v1943
        %2788 = vmatpush1.bf16.msra.mxu0 %v1940
        %2789 = vmatprep.subr.bf16.mxu0 0
        %2790 = vmatpush1.bf16.msra.mxu0 0
        %2791 = vmatprep.subr.bf16.mxu0 0
        %2792 = vmatpush1.bf16.msra.mxu0 0
        %2793 = vmatprep.subr.bf16.mxu0 0
        %2794 = vmatpush1.bf16.msra.mxu0 0
        %2795 = vmatprep.subr.bf16.mxu0 0
        %2796 = vmatpush1.bf16.msra.mxu0 0
        %2797 = vmatprep.subr.bf16.mxu0 0
        %2798 = vmatpush1.bf16.msra.mxu0 0
        %2799 = vmatprep.subr.bf16.mxu0 0
        %2800 = vmatpush1.bf16.msra.mxu0 0
        %2801 = vmatprep.subr.bf16.mxu0 0
        %2802 = vmatpush1.bf16.msra.mxu0 0
        %2803 = vmatprep.subr.bf16.mxu0 0
        %2804 = vmatpush1.bf16.msra.mxu0 0
        %2805 = vmatprep.subr.bf16.mxu0 0
        %2806 = vmatpush1.bf16.msra.mxu0 0
        %2807 = vmatprep.subr.bf16.mxu0 0
        %2808 = vmatpush1.bf16.msra.mxu0 0
        %2809 = vmatprep.subr.bf16.mxu0 0
        %2810 = vmatpush1.bf16.msra.mxu0 0
        %2811 = vmatprep.subr.bf16.mxu0 0
        %2812 = vmatpush1.bf16.msra.mxu0 0
        %2813 = vmatprep.subr.bf16.mxu0 0
        %2814 = vmatpush1.bf16.msra.mxu0 0
        %2815 = vmatprep.subr.bf16.mxu0 0
        %2816 = vmatpush1.bf16.msra.mxu0 0
        %2817 = vmatprep.subr.bf16.mxu0 0
        %2818 = vmatpush1.bf16.msra.mxu0 0
        %2819 = vmatprep.mubr.bf16.mxu0 0
        %2820 = vmatmul.mubr.bf16.gmra.mrb[0].mxu0 %v1635
        %v2821 = vpop.f32.mrb[0].mxu0
        %v2822 = vadd.f32 0.0, %v2821
        %v2823 = vpop.f32.mrb[0].mxu0
        %v2824 = vadd.f32 0.0, %v2823
        %v2825 = vpop.f32.mrb[0].mxu0
        %v2826 = vadd.f32 0.0, %v2825
        %v2827 = vpop.f32.mrb[0].mxu0
        %v2828 = vadd.f32 0.0, %v2827
        %2829 = vdwg.mxu0
        %2830 = vmatprep.subr.bf16.mxu0 %v1875
        %2831 = vmatpush1.bf16.msra.mxu0 %v1872
        %2832 = vmatprep.subr.bf16.mxu0 0
        %2833 = vmatpush1.bf16.msra.mxu0 0
        %2834 = vmatprep.subr.bf16.mxu0 0
        %2835 = vmatpush1.bf16.msra.mxu0 0
        %2836 = vmatprep.subr.bf16.mxu0 0
        %2837 = vmatpush1.bf16.msra.mxu0 0
        %2838 = vmatprep.subr.bf16.mxu0 0
        %2839 = vmatpush1.bf16.msra.mxu0 0
        %2840 = vmatprep.subr.bf16.mxu0 0
        %2841 = vmatpush1.bf16.msra.mxu0 0
        %2842 = vmatprep.subr.bf16.mxu0 0
        %2843 = vmatpush1.bf16.msra.mxu0 0
        %2844 = vmatprep.subr.bf16.mxu0 0
        %2845 = vmatpush1.bf16.msra.mxu0 0
        %2846 = vmatprep.subr.bf16.mxu0 0
        %2847 = vmatpush1.bf16.msra.mxu0 0
        %2848 = vmatprep.subr.bf16.mxu0 0
        %2849 = vmatpush1.bf16.msra.mxu0 0
        %2850 = vmatprep.subr.bf16.mxu0 0
        %2851 = vmatpush1.bf16.msra.mxu0 0
        %2852 = vmatprep.subr.bf16.mxu0 0
        %2853 = vmatpush1.bf16.msra.mxu0 0
        %2854 = vmatprep.subr.bf16.mxu0 0
        %2855 = vmatpush1.bf16.msra.mxu0 0
        %2856 = vmatprep.subr.bf16.mxu0 0
        %2857 = vmatpush1.bf16.msra.mxu0 0
        %2858 = vmatprep.subr.bf16.mxu0 0
        %2859 = vmatpush1.bf16.msra.mxu0 0
        %2860 = vmatprep.subr.bf16.mxu0 0
        %2861 = vmatpush1.bf16.msra.mxu0 0
        %2862 = vmatprep.mubr.bf16.mxu0 0
        %2863 = vmatmul.mubr.bf16.gmra.mrb[0].mxu0 %v1703
        %v2864 = vpop.f32.mrb[0].mxu0
        %v2865 = vadd.f32 %v2822, %v2864
        %v2866 = vpop.f32.mrb[0].mxu0
        %v2867 = vadd.f32 %v2824, %v2866
        %v2868 = vpop.f32.mrb[0].mxu0
        %v2869 = vadd.f32 %v2826, %v2868
        %v2870 = vpop.f32.mrb[0].mxu0
        %v2871 = vadd.f32 %v2828, %v2870
        %2872 = vdwg.mxu0
        %2873 = vmatprep.subr.bf16.mxu0 %v2009
        %2874 = vmatpush1.bf16.msra.mxu0 %v2006
        %2875 = vmatprep.subr.bf16.mxu0 0
        %2876 = vmatpush1.bf16.msra.mxu0 0
        %2877 = vmatprep.subr.bf16.mxu0 0
        %2878 = vmatpush1.bf16.msra.mxu0 0
        %2879 = vmatprep.subr.bf16.mxu0 0
        %2880 = vmatpush1.bf16.msra.mxu0 0
        %2881 = vmatprep.subr.bf16.mxu0 0
        %2882 = vmatpush1.bf16.msra.mxu0 0
        %2883 = vmatprep.subr.bf16.mxu0 0
        %2884 = vmatpush1.bf16.msra.mxu0 0
        %2885 = vmatprep.subr.bf16.mxu0 0
        %2886 = vmatpush1.bf16.msra.mxu0 0
        %2887 = vmatprep.subr.bf16.mxu0 0
        %2888 = vmatpush1.bf16.msra.mxu0 0
        %2889 = vmatprep.subr.bf16.mxu0 0
        %2890 = vmatpush1.bf16.msra.mxu0 0
        %2891 = vmatprep.subr.bf16.mxu0 0
        %2892 = vmatpush1.bf16.msra.mxu0 0
        %2893 = vmatprep.subr.bf16.mxu0 0
        %2894 = vmatpush1.bf16.msra.mxu0 0
        %2895 = vmatprep.subr.bf16.mxu0 0
        %2896 = vmatpush1.bf16.msra.mxu0 0
        %2897 = vmatprep.subr.bf16.mxu0 0
        %2898 = vmatpush1.bf16.msra.mxu0 0
        %2899 = vmatprep.subr.bf16.mxu0 0
        %2900 = vmatpush1.bf16.msra.mxu0 0
        %2901 = vmatprep.subr.bf16.mxu0 0
        %2902 = vmatpush1.bf16.msra.mxu0 0
        %2903 = vmatprep.subr.bf16.mxu0 0
        %2904 = vmatpush1.bf16.msra.mxu0 0
        %2905 = vmatprep.mubr.bf16.mxu0 0
        %2906 = vmatmul.mubr.bf16.gmra.mrb[0].mxu0 %v1777
        %v2907 = vpop.f32.mrb[0].mxu0
        %v2908 = vadd.f32 0.0, %v2907
        %v2909 = vpop.f32.mrb[0].mxu0
        %v2910 = vadd.f32 0.0, %v2909
        %v2911 = vpop.f32.mrb[0].mxu0
        %v2912 = vadd.f32 0.0, %v2911
        %v2913 = vpop.f32.mrb[0].mxu0
        %v2914 = vadd.f32 0.0, %v2913
        %2915 = vdwg.mxu0
        %v2916 = vadd.f32 %v2865, %v2908
        %v2917 = vadd.f32 %v2867, %v2910
        %v2918 = vadd.f32 %v2869, %v2912
        %v2919 = vadd.f32 %v2871, %v2914
        %2920 = vmatprep.subr.bf16.mxu0 %v2090
        %2921 = vmatpush1.bf16.msra.mxu0 %v2087
        %2922 = vmatprep.subr.bf16.mxu0 0
        %2923 = vmatpush1.bf16.msra.mxu0 0
        %2924 = vmatprep.subr.bf16.mxu0 0
        %2925 = vmatpush1.bf16.msra.mxu0 0
        %2926 = vmatprep.subr.bf16.mxu0 0
        %2927 = vmatpush1.bf16.msra.mxu0 0
        %2928 = vmatprep.subr.bf16.mxu0 0
        %2929 = vmatpush1.bf16.msra.mxu0 0
        %2930 = vmatprep.subr.bf16.mxu0 0
        %2931 = vmatpush1.bf16.msra.mxu0 0
        %2932 = vmatprep.subr.bf16.mxu0 0
        %2933 = vmatpush1.bf16.msra.mxu0 0
        %2934 = vmatprep.subr.bf16.mxu0 0
        %2935 = vmatpush1.bf16.msra.mxu0 0
        %2936 = vmatprep.subr.bf16.mxu0 0
        %2937 = vmatpush1.bf16.msra.mxu0 0
        %2938 = vmatprep.subr.bf16.mxu0 0
        %2939 = vmatpush1.bf16.msra.mxu0 0
        %2940 = vmatprep.subr.bf16.mxu0 0
        %2941 = vmatpush1.bf16.msra.mxu0 0
        %2942 = vmatprep.subr.bf16.mxu0 0
        %2943 = vmatpush1.bf16.msra.mxu0 0
        %2944 = vmatprep.subr.bf16.mxu0 0
        %2945 = vmatpush1.bf16.msra.mxu0 0
        %2946 = vmatprep.subr.bf16.mxu0 0
        %2947 = vmatpush1.bf16.msra.mxu0 0
        %2948 = vmatprep.subr.bf16.mxu0 0
        %2949 = vmatpush1.bf16.msra.mxu0 0
        %2950 = vmatprep.subr.bf16.mxu0 0
        %2951 = vmatpush1.bf16.msra.mxu0 0
        %2952 = vmatprep.mubr.bf16.mxu0 0
        %2953 = vmatmul.mubr.bf16.gmra.mrb[0].mxu0 %v1869
        %v2954 = vpop.f32.mrb[0].mxu0
        %v2955 = vadd.f32 0.0, %v2954
        %v2956 = vpop.f32.mrb[0].mxu0
        %v2957 = vadd.f32 0.0, %v2956
        %v2958 = vpop.f32.mrb[0].mxu0
        %v2959 = vadd.f32 0.0, %v2958
        %v2960 = vpop.f32.mrb[0].mxu0
        %v2961 = vadd.f32 0.0, %v2960
        %2962 = vdwg.mxu0
        %v2963 = vadd.f32 %v2916, %v2955
        %v2964 = vadd.f32 %v2917, %v2957
        %v2965 = vadd.f32 %v2918, %v2959
        %v2966 = vadd.f32 %v2919, %v2961
        %2967 = vmatprep.subr.bf16.mxu0 %v2154
        %2968 = vmatpush1.bf16.msra.mxu0 %v2151
        %2969 = vmatprep.subr.bf16.mxu0 0
        %2970 = vmatpush1.bf16.msra.mxu0 0
        %2971 = vmatprep.subr.bf16.mxu0 0
        %2972 = vmatpush1.bf16.msra.mxu0 0
        %2973 = vmatprep.subr.bf16.mxu0 0
        %2974 = vmatpush1.bf16.msra.mxu0 0
        %2975 = vmatprep.subr.bf16.mxu0 0
        %2976 = vmatpush1.bf16.msra.mxu0 0
        %2977 = vmatprep.subr.bf16.mxu0 0
        %2978 = vmatpush1.bf16.msra.mxu0 0
        %2979 = vmatprep.subr.bf16.mxu0 0
        %2980 = vmatpush1.bf16.msra.mxu0 0
        %2981 = vmatprep.subr.bf16.mxu0 0
        %2982 = vmatpush1.bf16.msra.mxu0 0
        %2983 = vmatprep.subr.bf16.mxu0 0
        %2984 = vmatpush1.bf16.msra.mxu0 0
        %2985 = vmatprep.subr.bf16.mxu0 0
        %2986 = vmatpush1.bf16.msra.mxu0 0
        %2987 = vmatprep.subr.bf16.mxu0 0
        %2988 = vmatpush1.bf16.msra.mxu0 0
        %2989 = vmatprep.subr.bf16.mxu0 0
        %2990 = vmatpush1.bf16.msra.mxu0 0
        %2991 = vmatprep.subr.bf16.mxu0 0
        %2992 = vmatpush1.bf16.msra.mxu0 0
        %2993 = vmatprep.subr.bf16.mxu0 0
        %2994 = vmatpush1.bf16.msra.mxu0 0
        %2995 = vmatprep.subr.bf16.mxu0 0
        %2996 = vmatpush1.bf16.msra.mxu0 0
        %2997 = vmatprep.subr.bf16.mxu0 0
        %2998 = vmatpush1.bf16.msra.mxu0 0
        %2999 = vmatprep.mubr.bf16.mxu0 0
        %3000 = vmatmul.mubr.bf16.gmra.mrb[0].mxu0 %v1937
        %v3001 = vpop.f32.mrb[0].mxu0
        %v3002 = vadd.f32 0.0, %v3001
        %v3003 = vpop.f32.mrb[0].mxu0
        %v3004 = vadd.f32 0.0, %v3003
        %v3005 = vpop.f32.mrb[0].mxu0
        %v3006 = vadd.f32 0.0, %v3005
        %v3007 = vpop.f32.mrb[0].mxu0
        %v3008 = vadd.f32 0.0, %v3007
        %3009 = vdwg.mxu0
        %v3010 = vadd.f32 %v2963, %v3002
        %v3011 = vadd.f32 %v2964, %v3004
        %v3012 = vadd.f32 %v2965, %v3006
        %v3013 = vadd.f32 %v2966, %v3008
        %3014 = vmatprep.subr.bf16.mxu0 %v2218
        %3015 = vmatpush1.bf16.msra.mxu0 %v2215
        %3016 = vmatprep.subr.bf16.mxu0 0
        %3017 = vmatpush1.bf16.msra.mxu0 0
        %3018 = vmatprep.subr.bf16.mxu0 0
        %3019 = vmatpush1.bf16.msra.mxu0 0
        %3020 = vmatprep.subr.bf16.mxu0 0
        %3021 = vmatpush1.bf16.msra.mxu0 0
        %3022 = vmatprep.subr.bf16.mxu0 0
        %3023 = vmatpush1.bf16.msra.mxu0 0
        %3024 = vmatprep.subr.bf16.mxu0 0
        %3025 = vmatpush1.bf16.msra.mxu0 0
        %3026 = vmatprep.subr.bf16.mxu0 0
        %3027 = vmatpush1.bf16.msra.mxu0 0
        %3028 = vmatprep.subr.bf16.mxu0 0
        %3029 = vmatpush1.bf16.msra.mxu0 0
        %3030 = vmatprep.subr.bf16.mxu0 0
        %3031 = vmatpush1.bf16.msra.mxu0 0
        %3032 = vmatprep.subr.bf16.mxu0 0
        %3033 = vmatpush1.bf16.msra.mxu0 0
        %3034 = vmatprep.subr.bf16.mxu0 0
        %3035 = vmatpush1.bf16.msra.mxu0 0
        %3036 = vmatprep.subr.bf16.mxu0 0
        %3037 = vmatpush1.bf16.msra.mxu0 0
        %3038 = vmatprep.subr.bf16.mxu0 0
        %3039 = vmatpush1.bf16.msra.mxu0 0
        %3040 = vmatprep.subr.bf16.mxu0 0
        %3041 = vmatpush1.bf16.msra.mxu0 0
        %3042 = vmatprep.subr.bf16.mxu0 0
        %3043 = vmatpush1.bf16.msra.mxu0 0
        %3044 = vmatprep.subr.bf16.mxu0 0
        %3045 = vmatpush1.bf16.msra.mxu0 0
        %3046 = vmatprep.mubr.bf16.mxu0 0
        %3047 = vmatmul.mubr.bf16.gmra.mrb[0].mxu0 %v2003
        %v3048 = vpop.f32.mrb[0].mxu0
        %v3049 = vadd.f32 0.0, %v3048
        %v3050 = vpop.f32.mrb[0].mxu0
        %v3051 = vadd.f32 0.0, %v3050
        %v3052 = vpop.f32.mrb[0].mxu0
        %v3053 = vadd.f32 0.0, %v3052
        %v3054 = vpop.f32.mrb[0].mxu0
        %v3055 = vadd.f32 0.0, %v3054
        %3056 = vdwg.mxu0
        %v3057 = vadd.f32 %v3010, %v3049
        %v3058 = vadd.f32 %v3011, %v3051
        %v3059 = vadd.f32 %v3012, %v3053
        %v3060 = vadd.f32 %v3013, %v3055
        %v3061 = vld [vmem:[#allocation3 + $0x8] sm:$0xff]
        %v3062 = vld [vmem:[#allocation3 + $0x10] sm:$0xff]
        %v3063 = vld [vmem:[#allocation3 + $0x18] sm:$0xff]
        %3064 = vrot.lane.b32.xlu0 %v1588, 15
        %v3065 = vpop.permute.xlu0 %3064
        %3066 = vrot.lane.b32.xlu0 %v1592, 15
        %v3067 = vpop.permute.xlu0 %3066
        %v3068 = vsel %vm1220, %v3065, %v3067
        %v3072 = vmul.f32 %v3061, %v3065
        %v3073 = vmul.f32 %v3062, %v3068
        %v3074 = vmul.f32 %v3063, %v3067
        %v3075 = vpack.c.bf16 %v3072, %v3072
        %v3076 = vpack.c.bf16 %v3073, %v3073
        %v3077 = vpack.c.bf16 %v3074, %v3074
        %3081 = vrot.lane.b32.xlu0 %v3075, 113
        %v3082 = vpop.permute.xlu0 %3081
        %3083 = vrot.lane.b32.xlu0 %v3076, 113
        %v3084 = vpop.permute.xlu0 %3083
        %3085 = vrot.lane.b32.xlu0 %v3077, 113
        %v3086 = vpop.permute.xlu0 %3085
        %v3087 = vsel %vm1248, %v3082, %v3084
        %v3088 = vsel %vm1248, %v3084, %v3086
        %v3090 = vsel %vm746, %v3087, 0
        %v3093 = vsel %vm746, %v3088, 0
        %3095 = vmatprep.subr.bf16.mxu0 %v3093
        %3096 = vmatpush1.bf16.msra.mxu0 %v3090
        %3097 = vmatprep.subr.bf16.mxu0 0
        %3098 = vmatpush1.bf16.msra.mxu0 0
        %3099 = vmatprep.subr.bf16.mxu0 0
        %3100 = vmatpush1.bf16.msra.mxu0 0
        %3101 = vmatprep.subr.bf16.mxu0 0
        %3102 = vmatpush1.bf16.msra.mxu0 0
        %3103 = vmatprep.subr.bf16.mxu0 0
        %3104 = vmatpush1.bf16.msra.mxu0 0
        %3105 = vmatprep.subr.bf16.mxu0 0
        %3106 = vmatpush1.bf16.msra.mxu0 0
        %3107 = vmatprep.subr.bf16.mxu0 0
        %3108 = vmatpush1.bf16.msra.mxu0 0
        %3109 = vmatprep.subr.bf16.mxu0 0
        %3110 = vmatpush1.bf16.msra.mxu0 0
        %3111 = vmatprep.subr.bf16.mxu0 0
        %3112 = vmatpush1.bf16.msra.mxu0 0
        %3113 = vmatprep.subr.bf16.mxu0 0
        %3114 = vmatpush1.bf16.msra.mxu0 0
        %3115 = vmatprep.subr.bf16.mxu0 0
        %3116 = vmatpush1.bf16.msra.mxu0 0
        %3117 = vmatprep.subr.bf16.mxu0 0
        %3118 = vmatpush1.bf16.msra.mxu0 0
        %3119 = vmatprep.subr.bf16.mxu0 0
        %3120 = vmatpush1.bf16.msra.mxu0 0
        %3121 = vmatprep.subr.bf16.mxu0 0
        %3122 = vmatpush1.bf16.msra.mxu0 0
        %3123 = vmatprep.subr.bf16.mxu0 0
        %3124 = vmatpush1.bf16.msra.mxu0 0
        %3125 = vmatprep.subr.bf16.mxu0 0
        %3126 = vmatpush1.bf16.msra.mxu0 0
        %3127 = vmatprep.mubr.bf16.mxu0 0
        %3128 = vmatmul.mubr.bf16.gmra.mrb[0].mxu0 %v2084
        %v3129 = vpop.f32.mrb[0].mxu0
        %v3130 = vadd.f32 0.0, %v3129
        %v3131 = vpop.f32.mrb[0].mxu0
        %v3132 = vadd.f32 0.0, %v3131
        %v3133 = vpop.f32.mrb[0].mxu0
        %v3134 = vadd.f32 0.0, %v3133
        %v3135 = vpop.f32.mrb[0].mxu0
        %v3136 = vadd.f32 0.0, %v3135
        %3137 = vdwg.mxu0
        %v3138 = vadd.f32 %v3057, %v3130
        %v3139 = vadd.f32 %v3058, %v3132
        %v3140 = vadd.f32 %v3059, %v3134
        %v3141 = vadd.f32 %v3060, %v3136
        %v3142 = vpack.c.bf16 %v2535, %v2535
        %v3143 = vpack.c.bf16 %v2536, %v2536
        %v3144 = vpack.c.bf16 %v2537, %v2537
        %3148 = vrot.lane.b32.xlu0 %v3142, 112
        %v3149 = vpop.permute.xlu0 %3148
        %3150 = vrot.lane.b32.xlu0 %v3143, 112
        %v3151 = vpop.permute.xlu0 %3150
        %3152 = vrot.lane.b32.xlu0 %v3144, 112
        %v3153 = vpop.permute.xlu0 %3152
        %v3154 = vsel %vm1327, %v3149, %v3151
        %v3155 = vsel %vm1327, %v3151, %v3153
        %v3157 = vsel %vm746, %v3154, 0
        %v3160 = vsel %vm746, %v3155, 0
        %3162 = vmatprep.subr.bf16.mxu0 %v3160
        %3163 = vmatpush1.bf16.msra.mxu0 %v3157
        %3164 = vmatprep.subr.bf16.mxu0 0
        %3165 = vmatpush1.bf16.msra.mxu0 0
        %3166 = vmatprep.subr.bf16.mxu0 0
        %3167 = vmatpush1.bf16.msra.mxu0 0
        %3168 = vmatprep.subr.bf16.mxu0 0
        %3169 = vmatpush1.bf16.msra.mxu0 0
        %3170 = vmatprep.subr.bf16.mxu0 0
        %3171 = vmatpush1.bf16.msra.mxu0 0
        %3172 = vmatprep.subr.bf16.mxu0 0
        %3173 = vmatpush1.bf16.msra.mxu0 0
        %3174 = vmatprep.subr.bf16.mxu0 0
        %3175 = vmatpush1.bf16.msra.mxu0 0
        %3176 = vmatprep.subr.bf16.mxu0 0
        %3177 = vmatpush1.bf16.msra.mxu0 0
        %3178 = vmatprep.subr.bf16.mxu0 0
        %3179 = vmatpush1.bf16.msra.mxu0 0
        %3180 = vmatprep.subr.bf16.mxu0 0
        %3181 = vmatpush1.bf16.msra.mxu0 0
        %3182 = vmatprep.subr.bf16.mxu0 0
        %3183 = vmatpush1.bf16.msra.mxu0 0
        %3184 = vmatprep.subr.bf16.mxu0 0
        %3185 = vmatpush1.bf16.msra.mxu0 0
        %3186 = vmatprep.subr.bf16.mxu0 0
        %3187 = vmatpush1.bf16.msra.mxu0 0
        %3188 = vmatprep.subr.bf16.mxu0 0
        %3189 = vmatpush1.bf16.msra.mxu0 0
        %3190 = vmatprep.subr.bf16.mxu0 0
        %3191 = vmatpush1.bf16.msra.mxu0 0
        %3192 = vmatprep.subr.bf16.mxu0 0
        %3193 = vmatpush1.bf16.msra.mxu0 0
        %3194 = vmatprep.mubr.bf16.mxu0 0
        %3195 = vmatmul.mubr.bf16.gmra.mrb[0].mxu0 %v2148
        %v3196 = vpop.f32.mrb[0].mxu0
        %v3197 = vadd.f32 0.0, %v3196
        %v3198 = vpop.f32.mrb[0].mxu0
        %v3199 = vadd.f32 0.0, %v3198
        %v3200 = vpop.f32.mrb[0].mxu0
        %v3201 = vadd.f32 0.0, %v3200
        %v3202 = vpop.f32.mrb[0].mxu0
        %v3203 = vadd.f32 0.0, %v3202
        %3204 = vdwg.mxu0
        %v3205 = vadd.f32 %v3138, %v3197
        %v3206 = vadd.f32 %v3139, %v3199
        %v3207 = vadd.f32 %v3140, %v3201
        %v3208 = vadd.f32 %v3141, %v3203
        %v3209 = vpack.c.bf16 %v3061, %v3061
        %v3210 = vpack.c.bf16 %v3062, %v3062
        %v3211 = vpack.c.bf16 %v3063, %v3063
        %3215 = vrot.lane.b32.xlu0 %v3209, 112
        %v3216 = vpop.permute.xlu0 %3215
        %3217 = vrot.lane.b32.xlu0 %v3210, 112
        %v3218 = vpop.permute.xlu0 %3217
        %3219 = vrot.lane.b32.xlu0 %v3211, 112
        %v3220 = vpop.permute.xlu0 %3219
        %v3221 = vsel %vm1327, %v3216, %v3218
        %v3222 = vsel %vm1327, %v3218, %v3220
        %v3224 = vsel %vm746, %v3221, 0
        %v3227 = vsel %vm746, %v3222, 0
        %3229 = vmatprep.subr.bf16.mxu0 %v3227
        %3230 = vmatpush1.bf16.msra.mxu0 %v3224
        %3231 = vmatprep.subr.bf16.mxu0 0
        %3232 = vmatpush1.bf16.msra.mxu0 0
        %3233 = vmatprep.subr.bf16.mxu0 0
        %3234 = vmatpush1.bf16.msra.mxu0 0
        %3235 = vmatprep.subr.bf16.mxu0 0
        %3236 = vmatpush1.bf16.msra.mxu0 0
        %3237 = vmatprep.subr.bf16.mxu0 0
        %3238 = vmatpush1.bf16.msra.mxu0 0
        %3239 = vmatprep.subr.bf16.mxu0 0
        %3240 = vmatpush1.bf16.msra.mxu0 0
        %3241 = vmatprep.subr.bf16.mxu0 0
        %3242 = vmatpush1.bf16.msra.mxu0 0
        %3243 = vmatprep.subr.bf16.mxu0 0
        %3244 = vmatpush1.bf16.msra.mxu0 0
        %3245 = vmatprep.subr.bf16.mxu0 0
        %3246 = vmatpush1.bf16.msra.mxu0 0
        %3247 = vmatprep.subr.bf16.mxu0 0
        %3248 = vmatpush1.bf16.msra.mxu0 0
        %3249 = vmatprep.subr.bf16.mxu0 0
        %3250 = vmatpush1.bf16.msra.mxu0 0
        %3251 = vmatprep.subr.bf16.mxu0 0
        %3252 = vmatpush1.bf16.msra.mxu0 0
        %3253 = vmatprep.subr.bf16.mxu0 0
        %3254 = vmatpush1.bf16.msra.mxu0 0
        %3255 = vmatprep.subr.bf16.mxu0 0
        %3256 = vmatpush1.bf16.msra.mxu0 0
        %3257 = vmatprep.subr.bf16.mxu0 0
        %3258 = vmatpush1.bf16.msra.mxu0 0
        %3259 = vmatprep.subr.bf16.mxu0 0
        %3260 = vmatpush1.bf16.msra.mxu0 0
        %3261 = vmatprep.mubr.bf16.mxu0 0
        %3262 = vmatmul.mubr.bf16.gmra.mrb[0].mxu0 %v2212
        %v3263 = vpop.f32.mrb[0].mxu0
        %v3264 = vadd.f32 0.0, %v3263
        %v3265 = vpop.f32.mrb[0].mxu0
        %v3266 = vadd.f32 0.0, %v3265
        %v3267 = vpop.f32.mrb[0].mxu0
        %v3268 = vadd.f32 0.0, %v3267
        %v3269 = vpop.f32.mrb[0].mxu0
        %v3270 = vadd.f32 0.0, %v3269
        %3271 = vdwg.mxu0
        %v3272 = vadd.f32 %v3205, %v3264
        %v3273 = vadd.f32 %v3206, %v3266
        %v3274 = vadd.f32 %v3207, %v3268
        %v3275 = vadd.f32 %v3208, %v3270
        %v3276 = vmax.f32 %v2783, %v3272
        %v3277 = vmax.f32 %v2784, %v3273
        %v3278 = vmax.f32 %v2785, %v3274
        %v3279 = vmax.f32 %v2786, %v3275
        %3280 = vmatprep.subr.bf16.mxu0 %v2009
        %3281 = vmatpush1.bf16.msra.mxu0 %v2006
        %3282 = vmatprep.subr.bf16.mxu0 0
        %3283 = vmatpush1.bf16.msra.mxu0 0
        %3284 = vmatprep.subr.bf16.mxu0 0
        %3285 = vmatpush1.bf16.msra.mxu0 0
        %3286 = vmatprep.subr.bf16.mxu0 0
        %3287 = vmatpush1.bf16.msra.mxu0 0
        %3288 = vmatprep.subr.bf16.mxu0 0
        %3289 = vmatpush1.bf16.msra.mxu0 0
        %3290 = vmatprep.subr.bf16.mxu0 0
        %3291 = vmatpush1.bf16.msra.mxu0 0
        %3292 = vmatprep.subr.bf16.mxu0 0
        %3293 = vmatpush1.bf16.msra.mxu0 0
        %3294 = vmatprep.subr.bf16.mxu0 0
        %3295 = vmatpush1.bf16.msra.mxu0 0
        %3296 = vmatprep.subr.bf16.mxu0 0
        %3297 = vmatpush1.bf16.msra.mxu0 0
        %3298 = vmatprep.subr.bf16.mxu0 0
        %3299 = vmatpush1.bf16.msra.mxu0 0
        %3300 = vmatprep.subr.bf16.mxu0 0
        %3301 = vmatpush1.bf16.msra.mxu0 0
        %3302 = vmatprep.subr.bf16.mxu0 0
        %3303 = vmatpush1.bf16.msra.mxu0 0
        %3304 = vmatprep.subr.bf16.mxu0 0
        %3305 = vmatpush1.bf16.msra.mxu0 0
        %3306 = vmatprep.subr.bf16.mxu0 0
        %3307 = vmatpush1.bf16.msra.mxu0 0
        %3308 = vmatprep.subr.bf16.mxu0 0
        %3309 = vmatpush1.bf16.msra.mxu0 0
        %3310 = vmatprep.subr.bf16.mxu0 0
        %3311 = vmatpush1.bf16.msra.mxu0 0
        %3312 = vmatprep.mubr.bf16.mxu0 0
        %3313 = vmatmul.mubr.bf16.gmra.mrb[0].mxu0 %v1635
        %v3314 = vpop.f32.mrb[0].mxu0
        %v3315 = vadd.f32 0.0, %v3314
        %v3316 = vpop.f32.mrb[0].mxu0
        %v3317 = vadd.f32 0.0, %v3316
        %v3318 = vpop.f32.mrb[0].mxu0
        %v3319 = vadd.f32 0.0, %v3318
        %v3320 = vpop.f32.mrb[0].mxu0
        %v3321 = vadd.f32 0.0, %v3320
        %3322 = vdwg.mxu0
        %3323 = vmatprep.subr.bf16.mxu0 %v1943
        %3324 = vmatpush1.bf16.msra.mxu0 %v1940
        %3325 = vmatprep.subr.bf16.mxu0 0
        %3326 = vmatpush1.bf16.msra.mxu0 0
        %3327 = vmatprep.subr.bf16.mxu0 0
        %3328 = vmatpush1.bf16.msra.mxu0 0
        %3329 = vmatprep.subr.bf16.mxu0 0
        %3330 = vmatpush1.bf16.msra.mxu0 0
        %3331 = vmatprep.subr.bf16.mxu0 0
        %3332 = vmatpush1.bf16.msra.mxu0 0
        %3333 = vmatprep.subr.bf16.mxu0 0
        %3334 = vmatpush1.bf16.msra.mxu0 0
        %3335 = vmatprep.subr.bf16.mxu0 0
        %3336 = vmatpush1.bf16.msra.mxu0 0
        %3337 = vmatprep.subr.bf16.mxu0 0
        %3338 = vmatpush1.bf16.msra.mxu0 0
        %3339 = vmatprep.subr.bf16.mxu0 0
        %3340 = vmatpush1.bf16.msra.mxu0 0
        %3341 = vmatprep.subr.bf16.mxu0 0
        %3342 = vmatpush1.bf16.msra.mxu0 0
        %3343 = vmatprep.subr.bf16.mxu0 0
        %3344 = vmatpush1.bf16.msra.mxu0 0
        %3345 = vmatprep.subr.bf16.mxu0 0
        %3346 = vmatpush1.bf16.msra.mxu0 0
        %3347 = vmatprep.subr.bf16.mxu0 0
        %3348 = vmatpush1.bf16.msra.mxu0 0
        %3349 = vmatprep.subr.bf16.mxu0 0
        %3350 = vmatpush1.bf16.msra.mxu0 0
        %3351 = vmatprep.subr.bf16.mxu0 0
        %3352 = vmatpush1.bf16.msra.mxu0 0
        %3353 = vmatprep.subr.bf16.mxu0 0
        %3354 = vmatpush1.bf16.msra.mxu0 0
        %3355 = vmatprep.mubr.bf16.mxu0 0
        %3356 = vmatmul.mubr.bf16.gmra.mrb[0].mxu0 %v1703
        %v3357 = vpop.f32.mrb[0].mxu0
        %v3358 = vadd.f32 %v3315, %v3357
        %v3359 = vpop.f32.mrb[0].mxu0
        %v3360 = vadd.f32 %v3317, %v3359
        %v3361 = vpop.f32.mrb[0].mxu0
        %v3362 = vadd.f32 %v3319, %v3361
        %v3363 = vpop.f32.mrb[0].mxu0
        %v3364 = vadd.f32 %v3321, %v3363
        %3365 = vdwg.mxu0
        %3366 = vmatprep.subr.bf16.mxu0 %v2567
        %3367 = vmatpush1.bf16.msra.mxu0 %v2564
        %3368 = vmatprep.subr.bf16.mxu0 0
        %3369 = vmatpush1.bf16.msra.mxu0 0
        %3370 = vmatprep.subr.bf16.mxu0 0
        %3371 = vmatpush1.bf16.msra.mxu0 0
        %3372 = vmatprep.subr.bf16.mxu0 0
        %3373 = vmatpush1.bf16.msra.mxu0 0
        %3374 = vmatprep.subr.bf16.mxu0 0
        %3375 = vmatpush1.bf16.msra.mxu0 0
        %3376 = vmatprep.subr.bf16.mxu0 0
        %3377 = vmatpush1.bf16.msra.mxu0 0
        %3378 = vmatprep.subr.bf16.mxu0 0
        %3379 = vmatpush1.bf16.msra.mxu0 0
        %3380 = vmatprep.subr.bf16.mxu0 0
        %3381 = vmatpush1.bf16.msra.mxu0 0
        %3382 = vmatprep.subr.bf16.mxu0 0
        %3383 = vmatpush1.bf16.msra.mxu0 0
        %3384 = vmatprep.subr.bf16.mxu0 0
        %3385 = vmatpush1.bf16.msra.mxu0 0
        %3386 = vmatprep.subr.bf16.mxu0 0
        %3387 = vmatpush1.bf16.msra.mxu0 0
        %3388 = vmatprep.subr.bf16.mxu0 0
        %3389 = vmatpush1.bf16.msra.mxu0 0
        %3390 = vmatprep.subr.bf16.mxu0 0
        %3391 = vmatpush1.bf16.msra.mxu0 0
        %3392 = vmatprep.subr.bf16.mxu0 0
        %3393 = vmatpush1.bf16.msra.mxu0 0
        %3394 = vmatprep.subr.bf16.mxu0 0
        %3395 = vmatpush1.bf16.msra.mxu0 0
        %3396 = vmatprep.subr.bf16.mxu0 0
        %3397 = vmatpush1.bf16.msra.mxu0 0
        %3398 = vmatprep.mubr.bf16.mxu0 0
        %3399 = vmatmul.mubr.bf16.gmra.mrb[0].mxu0 %v1777
        %v3400 = vpop.f32.mrb[0].mxu0
        %v3401 = vadd.f32 0.0, %v3400
        %v3402 = vpop.f32.mrb[0].mxu0
        %v3403 = vadd.f32 0.0, %v3402
        %v3404 = vpop.f32.mrb[0].mxu0
        %v3405 = vadd.f32 0.0, %v3404
        %v3406 = vpop.f32.mrb[0].mxu0
        %v3407 = vadd.f32 0.0, %v3406
        %3408 = vdwg.mxu0
        %v3409 = vadd.f32 %v3358, %v3401
        %v3410 = vadd.f32 %v3360, %v3403
        %v3411 = vadd.f32 %v3362, %v3405
        %v3412 = vadd.f32 %v3364, %v3407
        %3413 = vmatprep.subr.bf16.mxu0 %v2154
        %3414 = vmatpush1.bf16.msra.mxu0 %v2151
        %3415 = vmatprep.subr.bf16.mxu0 0
        %3416 = vmatpush1.bf16.msra.mxu0 0
        %3417 = vmatprep.subr.bf16.mxu0 0
        %3418 = vmatpush1.bf16.msra.mxu0 0
        %3419 = vmatprep.subr.bf16.mxu0 0
        %3420 = vmatpush1.bf16.msra.mxu0 0
        %3421 = vmatprep.subr.bf16.mxu0 0
        %3422 = vmatpush1.bf16.msra.mxu0 0
        %3423 = vmatprep.subr.bf16.mxu0 0
        %3424 = vmatpush1.bf16.msra.mxu0 0
        %3425 = vmatprep.subr.bf16.mxu0 0
        %3426 = vmatpush1.bf16.msra.mxu0 0
        %3427 = vmatprep.subr.bf16.mxu0 0
        %3428 = vmatpush1.bf16.msra.mxu0 0
        %3429 = vmatprep.subr.bf16.mxu0 0
        %3430 = vmatpush1.bf16.msra.mxu0 0
        %3431 = vmatprep.subr.bf16.mxu0 0
        %3432 = vmatpush1.bf16.msra.mxu0 0
        %3433 = vmatprep.subr.bf16.mxu0 0
        %3434 = vmatpush1.bf16.msra.mxu0 0
        %3435 = vmatprep.subr.bf16.mxu0 0
        %3436 = vmatpush1.bf16.msra.mxu0 0
        %3437 = vmatprep.subr.bf16.mxu0 0
        %3438 = vmatpush1.bf16.msra.mxu0 0
        %3439 = vmatprep.subr.bf16.mxu0 0
        %3440 = vmatpush1.bf16.msra.mxu0 0
        %3441 = vmatprep.subr.bf16.mxu0 0
        %3442 = vmatpush1.bf16.msra.mxu0 0
        %3443 = vmatprep.subr.bf16.mxu0 0
        %3444 = vmatpush1.bf16.msra.mxu0 0
        %3445 = vmatprep.mubr.bf16.mxu0 0
        %3446 = vmatmul.mubr.bf16.gmra.mrb[0].mxu0 %v1869
        %v3447 = vpop.f32.mrb[0].mxu0
        %v3448 = vadd.f32 0.0, %v3447
        %v3449 = vpop.f32.mrb[0].mxu0
        %v3450 = vadd.f32 0.0, %v3449
        %v3451 = vpop.f32.mrb[0].mxu0
        %v3452 = vadd.f32 0.0, %v3451
        %v3453 = vpop.f32.mrb[0].mxu0
        %v3454 = vadd.f32 0.0, %v3453
        %3455 = vdwg.mxu0
        %v3456 = vadd.f32 %v3409, %v3448
        %v3457 = vadd.f32 %v3410, %v3450
        %v3458 = vadd.f32 %v3411, %v3452
        %v3459 = vadd.f32 %v3412, %v3454
        %3460 = vmatprep.subr.bf16.mxu0 %v2218
        %3461 = vmatpush1.bf16.msra.mxu0 %v2215
        %3462 = vmatprep.subr.bf16.mxu0 0
        %3463 = vmatpush1.bf16.msra.mxu0 0
        %3464 = vmatprep.subr.bf16.mxu0 0
        %3465 = vmatpush1.bf16.msra.mxu0 0
        %3466 = vmatprep.subr.bf16.mxu0 0
        %3467 = vmatpush1.bf16.msra.mxu0 0
        %3468 = vmatprep.subr.bf16.mxu0 0
        %3469 = vmatpush1.bf16.msra.mxu0 0
        %3470 = vmatprep.subr.bf16.mxu0 0
        %3471 = vmatpush1.bf16.msra.mxu0 0
        %3472 = vmatprep.subr.bf16.mxu0 0
        %3473 = vmatpush1.bf16.msra.mxu0 0
        %3474 = vmatprep.subr.bf16.mxu0 0
        %3475 = vmatpush1.bf16.msra.mxu0 0
        %3476 = vmatprep.subr.bf16.mxu0 0
        %3477 = vmatpush1.bf16.msra.mxu0 0
        %3478 = vmatprep.subr.bf16.mxu0 0
        %3479 = vmatpush1.bf16.msra.mxu0 0
        %3480 = vmatprep.subr.bf16.mxu0 0
        %3481 = vmatpush1.bf16.msra.mxu0 0
        %3482 = vmatprep.subr.bf16.mxu0 0
        %3483 = vmatpush1.bf16.msra.mxu0 0
        %3484 = vmatprep.subr.bf16.mxu0 0
        %3485 = vmatpush1.bf16.msra.mxu0 0
        %3486 = vmatprep.subr.bf16.mxu0 0
        %3487 = vmatpush1.bf16.msra.mxu0 0
        %3488 = vmatprep.subr.bf16.mxu0 0
        %3489 = vmatpush1.bf16.msra.mxu0 0
        %3490 = vmatprep.subr.bf16.mxu0 0
        %3491 = vmatpush1.bf16.msra.mxu0 0
        %3492 = vmatprep.mubr.bf16.mxu0 0
        %3493 = vmatmul.mubr.bf16.gmra.mrb[0].mxu0 %v1937
        %v3494 = vpop.f32.mrb[0].mxu0
        %v3495 = vadd.f32 0.0, %v3494
        %v3496 = vpop.f32.mrb[0].mxu0
        %v3497 = vadd.f32 0.0, %v3496
        %v3498 = vpop.f32.mrb[0].mxu0
        %v3499 = vadd.f32 0.0, %v3498
        %v3500 = vpop.f32.mrb[0].mxu0
        %v3501 = vadd.f32 0.0, %v3500
        %3502 = vdwg.mxu0
        %v3503 = vadd.f32 %v3456, %v3495
        %v3504 = vadd.f32 %v3457, %v3497
        %v3505 = vadd.f32 %v3458, %v3499
        %v3506 = vadd.f32 %v3459, %v3501
        %3507 = vmatprep.subr.bf16.mxu0 %v2734
        %3508 = vmatpush1.bf16.msra.mxu0 %v2731
        %3509 = vmatprep.subr.bf16.mxu0 0
        %3510 = vmatpush1.bf16.msra.mxu0 0
        %3511 = vmatprep.subr.bf16.mxu0 0
        %3512 = vmatpush1.bf16.msra.mxu0 0
        %3513 = vmatprep.subr.bf16.mxu0 0
        %3514 = vmatpush1.bf16.msra.mxu0 0
        %3515 = vmatprep.subr.bf16.mxu0 0
        %3516 = vmatpush1.bf16.msra.mxu0 0
        %3517 = vmatprep.subr.bf16.mxu0 0
        %3518 = vmatpush1.bf16.msra.mxu0 0
        %3519 = vmatprep.subr.bf16.mxu0 0
        %3520 = vmatpush1.bf16.msra.mxu0 0
        %3521 = vmatprep.subr.bf16.mxu0 0
        %3522 = vmatpush1.bf16.msra.mxu0 0
        %3523 = vmatprep.subr.bf16.mxu0 0
        %3524 = vmatpush1.bf16.msra.mxu0 0
        %3525 = vmatprep.subr.bf16.mxu0 0
        %3526 = vmatpush1.bf16.msra.mxu0 0
        %3527 = vmatprep.subr.bf16.mxu0 0
        %3528 = vmatpush1.bf16.msra.mxu0 0
        %3529 = vmatprep.subr.bf16.mxu0 0
        %3530 = vmatpush1.bf16.msra.mxu0 0
        %3531 = vmatprep.subr.bf16.mxu0 0
        %3532 = vmatpush1.bf16.msra.mxu0 0
        %3533 = vmatprep.subr.bf16.mxu0 0
        %3534 = vmatpush1.bf16.msra.mxu0 0
        %3535 = vmatprep.subr.bf16.mxu0 0
        %3536 = vmatpush1.bf16.msra.mxu0 0
        %3537 = vmatprep.subr.bf16.mxu0 0
        %3538 = vmatpush1.bf16.msra.mxu0 0
        %3539 = vmatprep.mubr.bf16.mxu0 0
        %3540 = vmatmul.mubr.bf16.gmra.mrb[0].mxu0 %v2003
        %v3541 = vpop.f32.mrb[0].mxu0
        %v3542 = vadd.f32 0.0, %v3541
        %v3543 = vpop.f32.mrb[0].mxu0
        %v3544 = vadd.f32 0.0, %v3543
        %v3545 = vpop.f32.mrb[0].mxu0
        %v3546 = vadd.f32 0.0, %v3545
        %v3547 = vpop.f32.mrb[0].mxu0
        %v3548 = vadd.f32 0.0, %v3547
        %3549 = vdwg.mxu0
        %v3550 = vadd.f32 %v3503, %v3542
        %v3551 = vadd.f32 %v3504, %v3544
        %v3552 = vadd.f32 %v3505, %v3546
        %v3553 = vadd.f32 %v3506, %v3548
        %3554 = vmatprep.subr.bf16.mxu0 %v3160
        %3555 = vmatpush1.bf16.msra.mxu0 %v3157
        %3556 = vmatprep.subr.bf16.mxu0 0
        %3557 = vmatpush1.bf16.msra.mxu0 0
        %3558 = vmatprep.subr.bf16.mxu0 0
        %3559 = vmatpush1.bf16.msra.mxu0 0
        %3560 = vmatprep.subr.bf16.mxu0 0
        %3561 = vmatpush1.bf16.msra.mxu0 0
        %3562 = vmatprep.subr.bf16.mxu0 0
        %3563 = vmatpush1.bf16.msra.mxu0 0
        %3564 = vmatprep.subr.bf16.mxu0 0
        %3565 = vmatpush1.bf16.msra.mxu0 0
        %3566 = vmatprep.subr.bf16.mxu0 0
        %3567 = vmatpush1.bf16.msra.mxu0 0
        %3568 = vmatprep.subr.bf16.mxu0 0
        %3569 = vmatpush1.bf16.msra.mxu0 0
        %3570 = vmatprep.subr.bf16.mxu0 0
        %3571 = vmatpush1.bf16.msra.mxu0 0
        %3572 = vmatprep.subr.bf16.mxu0 0
        %3573 = vmatpush1.bf16.msra.mxu0 0
        %3574 = vmatprep.subr.bf16.mxu0 0
        %3575 = vmatpush1.bf16.msra.mxu0 0
        %3576 = vmatprep.subr.bf16.mxu0 0
        %3577 = vmatpush1.bf16.msra.mxu0 0
        %3578 = vmatprep.subr.bf16.mxu0 0
        %3579 = vmatpush1.bf16.msra.mxu0 0
        %3580 = vmatprep.subr.bf16.mxu0 0
        %3581 = vmatpush1.bf16.msra.mxu0 0
        %3582 = vmatprep.subr.bf16.mxu0 0
        %3583 = vmatpush1.bf16.msra.mxu0 0
        %3584 = vmatprep.subr.bf16.mxu0 0
        %3585 = vmatpush1.bf16.msra.mxu0 0
        %3586 = vmatprep.mubr.bf16.mxu0 0
        %3587 = vmatmul.mubr.bf16.gmra.mrb[0].mxu0 %v2084
        %v3588 = vpop.f32.mrb[0].mxu0
        %v3589 = vadd.f32 0.0, %v3588
        %v3590 = vpop.f32.mrb[0].mxu0
        %v3591 = vadd.f32 0.0, %v3590
        %v3592 = vpop.f32.mrb[0].mxu0
        %v3593 = vadd.f32 0.0, %v3592
        %v3594 = vpop.f32.mrb[0].mxu0
        %v3595 = vadd.f32 0.0, %v3594
        %3596 = vdwg.mxu0
        %v3597 = vadd.f32 %v3550, %v3589
        %v3598 = vadd.f32 %v3551, %v3591
        %v3599 = vadd.f32 %v3552, %v3593
        %v3600 = vadd.f32 %v3553, %v3595
        %3601 = vmatprep.subr.bf16.mxu0 %v3227
        %3602 = vmatpush1.bf16.msra.mxu0 %v3224
        %3603 = vmatprep.subr.bf16.mxu0 0
        %3604 = vmatpush1.bf16.msra.mxu0 0
        %3605 = vmatprep.subr.bf16.mxu0 0
        %3606 = vmatpush1.bf16.msra.mxu0 0
        %3607 = vmatprep.subr.bf16.mxu0 0
        %3608 = vmatpush1.bf16.msra.mxu0 0
        %3609 = vmatprep.subr.bf16.mxu0 0
        %3610 = vmatpush1.bf16.msra.mxu0 0
        %3611 = vmatprep.subr.bf16.mxu0 0
        %3612 = vmatpush1.bf16.msra.mxu0 0
        %3613 = vmatprep.subr.bf16.mxu0 0
        %3614 = vmatpush1.bf16.msra.mxu0 0
        %3615 = vmatprep.subr.bf16.mxu0 0
        %3616 = vmatpush1.bf16.msra.mxu0 0
        %3617 = vmatprep.subr.bf16.mxu0 0
        %3618 = vmatpush1.bf16.msra.mxu0 0
        %3619 = vmatprep.subr.bf16.mxu0 0
        %3620 = vmatpush1.bf16.msra.mxu0 0
        %3621 = vmatprep.subr.bf16.mxu0 0
        %3622 = vmatpush1.bf16.msra.mxu0 0
        %3623 = vmatprep.subr.bf16.mxu0 0
        %3624 = vmatpush1.bf16.msra.mxu0 0
        %3625 = vmatprep.subr.bf16.mxu0 0
        %3626 = vmatpush1.bf16.msra.mxu0 0
        %3627 = vmatprep.subr.bf16.mxu0 0
        %3628 = vmatpush1.bf16.msra.mxu0 0
        %3629 = vmatprep.subr.bf16.mxu0 0
        %3630 = vmatpush1.bf16.msra.mxu0 0
        %3631 = vmatprep.subr.bf16.mxu0 0
        %3632 = vmatpush1.bf16.msra.mxu0 0
        %3633 = vmatprep.mubr.bf16.mxu0 0
        %3634 = vmatmul.mubr.bf16.gmra.mrb[0].mxu0 %v2148
        %v3635 = vpop.f32.mrb[0].mxu0
        %v3636 = vadd.f32 0.0, %v3635
        %v3637 = vpop.f32.mrb[0].mxu0
        %v3638 = vadd.f32 0.0, %v3637
        %v3639 = vpop.f32.mrb[0].mxu0
        %v3640 = vadd.f32 0.0, %v3639
        %v3641 = vpop.f32.mrb[0].mxu0
        %v3642 = vadd.f32 0.0, %v3641
        %3643 = vdwg.mxu0
        %v3644 = vadd.f32 %v3597, %v3636
        %v3645 = vadd.f32 %v3598, %v3638
        %v3646 = vadd.f32 %v3599, %v3640
        %v3647 = vadd.f32 %v3600, %v3642
        %3648 = vrot.lane.b32.xlu0 %v2358, 17
        %v3649 = vpop.permute.xlu0 %3648
        %3650 = vrot.lane.b32.xlu0 %v2362, 17
        %v3651 = vpop.permute.xlu0 %3650
        %v3652 = vsel %vm657, %v3649, %v3651
        %v3656 = vmul.f32 %v2535, %v3649
        %v3657 = vmul.f32 %v2536, %v3652
        %v3658 = vmul.f32 %v2537, %v3651
        %v3659 = vpack.c.bf16 %v3656, %v3656
        %v3660 = vpack.c.bf16 %v3657, %v3657
        %v3661 = vpack.c.bf16 %v3658, %v3658
        %3665 = vrot.lane.b32.xlu0 %v3659, 111
        %v3666 = vpop.permute.xlu0 %3665
        %3667 = vrot.lane.b32.xlu0 %v3660, 111
        %v3668 = vpop.permute.xlu0 %3667
        %3669 = vrot.lane.b32.xlu0 %v3661, 111
        %v3670 = vpop.permute.xlu0 %3669
        %v3671 = vsel %vm1417, %v3666, %v3668
        %v3672 = vsel %vm1417, %v3668, %v3670
        %v3674 = vsel %vm746, %v3671, 0
        %v3677 = vsel %vm746, %v3672, 0
        %3679 = vmatprep.subr.bf16.mxu0 %v3677
        %3680 = vmatpush1.bf16.msra.mxu0 %v3674
        %3681 = vmatprep.subr.bf16.mxu0 0
        %3682 = vmatpush1.bf16.msra.mxu0 0
        %3683 = vmatprep.subr.bf16.mxu0 0
        %3684 = vmatpush1.bf16.msra.mxu0 0
        %3685 = vmatprep.subr.bf16.mxu0 0
        %3686 = vmatpush1.bf16.msra.mxu0 0
        %3687 = vmatprep.subr.bf16.mxu0 0
        %3688 = vmatpush1.bf16.msra.mxu0 0
        %3689 = vmatprep.subr.bf16.mxu0 0
        %3690 = vmatpush1.bf16.msra.mxu0 0
        %3691 = vmatprep.subr.bf16.mxu0 0
        %3692 = vmatpush1.bf16.msra.mxu0 0
        %3693 = vmatprep.subr.bf16.mxu0 0
        %3694 = vmatpush1.bf16.msra.mxu0 0
        %3695 = vmatprep.subr.bf16.mxu0 0
        %3696 = vmatpush1.bf16.msra.mxu0 0
        %3697 = vmatprep.subr.bf16.mxu0 0
        %3698 = vmatpush1.bf16.msra.mxu0 0
        %3699 = vmatprep.subr.bf16.mxu0 0
        %3700 = vmatpush1.bf16.msra.mxu0 0
        %3701 = vmatprep.subr.bf16.mxu0 0
        %3702 = vmatpush1.bf16.msra.mxu0 0
        %3703 = vmatprep.subr.bf16.mxu0 0
        %3704 = vmatpush1.bf16.msra.mxu0 0
        %3705 = vmatprep.subr.bf16.mxu0 0
        %3706 = vmatpush1.bf16.msra.mxu0 0
        %3707 = vmatprep.subr.bf16.mxu0 0
        %3708 = vmatpush1.bf16.msra.mxu0 0
        %3709 = vmatprep.subr.bf16.mxu0 0
        %3710 = vmatpush1.bf16.msra.mxu0 0
        %3711 = vmatprep.mubr.bf16.mxu0 0
        %3712 = vmatmul.mubr.bf16.gmra.mrb[0].mxu0 %v2212
        %v3713 = vpop.f32.mrb[0].mxu0
        %v3714 = vadd.f32 0.0, %v3713
        %v3715 = vpop.f32.mrb[0].mxu0
        %v3716 = vadd.f32 0.0, %v3715
        %v3717 = vpop.f32.mrb[0].mxu0
        %v3718 = vadd.f32 0.0, %v3717
        %v3719 = vpop.f32.mrb[0].mxu0
        %v3720 = vadd.f32 0.0, %v3719
        %3721 = vdwg.mxu0
        %v3722 = vadd.f32 %v3644, %v3714
        %v3723 = vadd.f32 %v3645, %v3716
        %v3724 = vadd.f32 %v3646, %v3718
        %v3725 = vadd.f32 %v3647, %v3720
        %v3726 = vmax.f32 %v3276, %v3722
        %v3727 = vmax.f32 %v3277, %v3723
        %v3728 = vmax.f32 %v3278, %v3724
        %v3729 = vmax.f32 %v3279, %v3725
        %v3730 = vadd.f32 %v1488, %v3726
        %v3731 = vadd.f32 %v1489, %v3727
        %v3732 = vadd.f32 %v1490, %v3728
        %v3733 = vadd.f32 %v1491, %v3729
        %v3734 = vld [vmem:[%s8] sm:$0xff]
        %v3735 = vld [vmem:[%s8 + $0x8] sm:$0xff]
        %3737 = vset.pattern.permute.xlu0 0
        %3738 = vperm.xlu0 %3737, %v3734
        %v3739 = vpop.permute.xlu0 %3738
        %3742 = vset.pattern.permute.xlu0 0
        %3743 = vperm.xlu0 %3742, %v3735
        %v3744 = vpop.permute.xlu0 %3743
        %v3746 = vadd.f32 %v3730, %v3739
        %v3747 = vadd.f32 %v3731, %v3739
        %v3748 = vadd.f32 %v3732, %v3744
        %v3749 = vadd.f32 %v3733, %v3744
        %v3750 = vld [vmem:[%s14] sm:$0xff]
        %v3751 = vld [vmem:[%s14 + $0x8] sm:$0xff]
        %3753 = vset.pattern.permute.xlu0 0
        %3754 = vperm.xlu0 %3753, %v3750
        %v3755 = vpop.permute.xlu0 %3754
        %3758 = vset.pattern.permute.xlu0 0
        %3759 = vperm.xlu0 %3758, %v3751
        %v3760 = vpop.permute.xlu0 %3759
        %v3762 = vmul.f32 %v3746, %v3755
        %v3763 = vmul.f32 %v3747, %v3755
        %v3764 = vmul.f32 %v3748, %v3760
        %v3765 = vmul.f32 %v3749, %v3760
        %v3766 = vld [vmem:[%s15] sm:$0xff]
        %v3767 = vld [vmem:[%s15 + $0x8] sm:$0xff]
        %3769 = vset.pattern.permute.xlu0 0
        %3770 = vperm.xlu0 %3769, %v3766
        %v3771 = vpop.permute.xlu0 %3770
        %3774 = vset.pattern.permute.xlu0 0
        %3775 = vperm.xlu0 %3774, %v3767
        %v3776 = vpop.permute.xlu0 %3775
        %v3778 = vadd.f32 %v3762, %v3771
        %v3779 = vadd.f32 %v3763, %v3771
        %v3780 = vadd.f32 %v3764, %v3776
        %v3781 = vadd.f32 %v3765, %v3776
        %v3782 = vmax.f32 %v3778, 0.0
        %v3783 = vmax.f32 %v3779, 0.0
        %v3784 = vmax.f32 %v3780, 0.0
        %v3785 = vmax.f32 %v3781, 0.0
        %v3786 = vadd.f32 %v3782, %v3783
        %3787 = vadd.xlane.f32.xlu0 %v3786
        %v3788 = vpop.xlane.xlu0 %3787
        %v3789 = vadd.f32 %v3784, %v3785
        %3790 = vadd.xlane.f32.xlu0 %v3789
        %v3791 = vpop.xlane.xlu0 %3790
        %v3792 = vmul.f32 %v3788, 0.00390625
        %v3793 = vmul.f32 %v3791, 0.00390625
        %v3794 = vld [vmem:[%s16] sm:$0xff]
        %v3795 = vld [vmem:[%s17] sm:$0xff]
        %vm3796 = vcmask 130048
        %v3798 = vsel %vm3796, %v3794, 0
        %3800 = vmatprep.subr.mxu0 0.0
        %3801 = vmatpush1.msra.mxu0 %v3792
        %3802 = vmatprep.subr.mxu0 0.0
        %3803 = vmatpush1.msra.mxu0 %v3793
        %3804 = vmatprep.subr.mxu0 0.0
        %3805 = vmatpush1.msra.mxu0 0.0
        %3806 = vmatprep.subr.mxu0 0.0
        %3807 = vmatpush1.msra.mxu0 0.0
        %3808 = vmatprep.subr.mxu0 0.0
        %3809 = vmatpush1.msra.mxu0 0.0
        %3810 = vmatprep.subr.mxu0 0.0
        %3811 = vmatpush1.msra.mxu0 0.0
        %3812 = vmatprep.subr.mxu0 0.0
        %3813 = vmatpush1.msra.mxu0 0.0
        %3814 = vmatprep.subr.mxu0 0.0
        %3815 = vmatpush1.msra.mxu0 0.0
        %3816 = vmatprep.subr.mxu0 0.0
        %3817 = vmatpush1.msra.mxu0 0.0
        %3818 = vmatprep.subr.mxu0 0.0
        %3819 = vmatpush1.msra.mxu0 0.0
        %3820 = vmatprep.subr.mxu0 0.0
        %3821 = vmatpush1.msra.mxu0 0.0
        %3822 = vmatprep.subr.mxu0 0.0
        %3823 = vmatpush1.msra.mxu0 0.0
        %3824 = vmatprep.subr.mxu0 0.0
        %3825 = vmatpush1.msra.mxu0 0.0
        %3826 = vmatprep.subr.mxu0 0.0
        %3827 = vmatpush1.msra.mxu0 0.0
        %3828 = vmatprep.subr.mxu0 0.0
        %3829 = vmatpush1.msra.mxu0 0.0
        %3830 = vmatprep.subr.mxu0 0.0
        %3831 = vmatpush1.msra.mxu0 0.0
        %3832 = vmatprep.subr.mxu0 0.0
        %3833 = vmatpush1.msra.mxu0 0.0
        %3834 = vmatprep.subr.mxu0 0.0
        %3835 = vmatpush1.msra.mxu0 0.0
        %3836 = vmatprep.subr.mxu0 0.0
        %3837 = vmatpush1.msra.mxu0 0.0
        %3838 = vmatprep.subr.mxu0 0.0
        %3839 = vmatpush1.msra.mxu0 0.0
        %3840 = vmatprep.subr.mxu0 0.0
        %3841 = vmatpush1.msra.mxu0 0.0
        %3842 = vmatprep.subr.mxu0 0.0
        %3843 = vmatpush1.msra.mxu0 0.0
        %3844 = vmatprep.subr.mxu0 0.0
        %3845 = vmatpush1.msra.mxu0 0.0
        %3846 = vmatprep.subr.mxu0 0.0
        %3847 = vmatpush1.msra.mxu0 0.0
        %3848 = vmatprep.subr.mxu0 0.0
        %3849 = vmatpush1.msra.mxu0 0.0
        %3850 = vmatprep.subr.mxu0 0.0
        %3851 = vmatpush1.msra.mxu0 0.0
        %3852 = vmatprep.subr.mxu0 0.0
        %3853 = vmatpush1.msra.mxu0 0.0
        %3854 = vmatprep.subr.mxu0 0.0
        %3855 = vmatpush1.msra.mxu0 0.0
        %3856 = vmatprep.subr.mxu0 0.0
        %3857 = vmatpush1.msra.mxu0 0.0
        %3858 = vmatprep.subr.mxu0 0.0
        %3859 = vmatpush1.msra.mxu0 0.0
        %3860 = vmatprep.subr.mxu0 0.0
        %3861 = vmatpush1.msra.mxu0 0.0
        %3862 = vmatprep.subr.mxu0 0.0
        %3863 = vmatpush1.msra.mxu0 0.0
        %3864 = vmatprep.mubr.f32.mxu0 0.0
        %3865 = vmatmul.mubr.f32.gmra.mrb[0].mxu0 %v3798
        %v3866 = vpop.f32.mrb[0].mxu0
        %v3867 = vadd.f32 %v3795, %v3866
        %v3868 = vpop.f32.mrb[0].mxu0
        %3869 = vdwg.mxu0
        %3871 = vset.pattern.permute.xlu0 0
        %3872 = vperm.xlu0 %3871, %v3867
        %v3873 = vpop.permute.xlu0 %3872
        %v3875 = vmul.f32 %v667, %v3873
        %v3876 = vmul.f32 %v668, %v3873
        %3877 = vst [vmem:[%s628] sm:$0xff] %v3875
        %3878 = vst [vmem:[%s628 + $0x8] sm:$0xff] %v3876
        %s3879 = sand.u32 %s443, 1
        %s3880 = scalar_lea.sflag [#allocation8], %s3879
        %s3881 = sand.u32 %s443, 1
        %s3882 = smul.addr %s3881, 16
        %s3883 = scalar_lea.vmem [#allocation7], %s3882
        // Predicated region
        $region93: #{tpu_custom_call.1} parent=91 // pred_check
          %p3884 = pneg %p453
        $region94: #{tpu_custom_call.1} parent=91 // pred_check_branch
          %3886 = sbr.rel (%p3884) target = $region96
        $region95: #{tpu_custom_call.1} parent=91 // pred_region
          %s3888 = ssub.s32 256, 256
          %3889 = vsyncadd %s3880, %s3888
          %s3890 = smul.addr %s32, 2
          %s3891 = smul.addr %s3890, 128
          %s3892 = scalar_lea.hbm %s18, %s3891
          %s3894 = sshll.u32 %s3883, 4
          %s3895 = int_to_ptr.vmem [resolvable:$true] %s3894
          %3897 = dma.vmem_to_hbm [thread:$0]  %s3895, 256, %s3892, %s3880
        $region96: #{tpu_custom_call.1} parent=91 // pred_fallthru
          _
      $region92: #{tpu_custom_call.1} parent=5 // pred_fallthru
        _
      %p3898 = scmp.le.s32.totalorder 2, %s27
      // Predicated region
      $region97: #{tpu_custom_call.1} parent=5 // pred_check
        %p3899 = pneg %p3898
      $region98: #{tpu_custom_call.1} parent=5 // pred_check_branch
        %3901 = sbr.rel (%p3899) target = $region100
      $region99: #{tpu_custom_call.1} parent=5 // pred_region
        %s3902 = ssub.s32 %s27, 2
        // Predicated region
        $region101: #{tpu_custom_call.1} parent=99 // pred_check
          %p3903 = pneg %p459
        $region102: #{tpu_custom_call.1} parent=99 // pred_check_branch
          %3905 = sbr.rel (%p3903) target = $region104
        $region103: #{tpu_custom_call.1} parent=99 // pred_region
          %s3906 = sand.u32 %s444, 1
          %s3907 = scalar_lea.sflag [#allocation8], %s3906
          %s3908 = sand.u32 %s444, 1
          %s3909 = smul.addr %s3908, 16
          %s3910 = scalar_lea.vmem [#allocation7], %s3909
          %3911 = dma.done %s3907, 256
        $region104: #{tpu_custom_call.1} parent=99 // pred_fallthru
          _
      $region100: #{tpu_custom_call.1} parent=5 // pred_fallthru
        _
    $region6: #{tpu_custom_call.1} parent=1 // loop_footer
      %s31 = sadd.s32 1, %s27
    $region7: #{tpu_custom_call.1} parent=1 // loop_footer_branch
      %26 = sbr.rel target = $region3
    $region8: #{tpu_custom_call.1} parent=1 // loop_exit
      _
    %3912 = vsyncpa [#allocation8], 1
    %s3913 = scalar_lea.sflag [#allocation8], 1
    %3914 = vsyncpa %s3913, 1

</llo_original>
